<compile_context>
chip_gen: v6e
topology: v6e:2x2x1
jax: 0.10.0
libtpu: 0.0.40
codegen_flags: <defaults>
</compile_context>

<pallas_src>
import jax
import jax.numpy as jnp
from jax.experimental import pallas as pl
from jax.experimental.pallas import tpu as pltpu

IN_FEATURES = 28 * 28        # 784
PAD_FEATURES = 896           # 7 * 128: lane-dense padding of 784
TM_MAX = 256                 # batch tile; fills v6e/v7x MXU (v5e saturates at 128)


# ---------------------------------------------------------------------------
# Kernel: fused 6-layer MLP (encoder + decoder) for one batch tile.
# ---------------------------------------------------------------------------
def autoencoder_kernel(
    x_ref,
    w1_ref, b1_ref, w2_ref, b2_ref, w3_ref, b3_ref,
    w4_ref, b4_ref, w5_ref, b5_ref, w6_ref, b6_ref,
    out_ref,
):
    def dense(h, w_ref, b_ref, relu):
        # bf16 x bf16 -> f32 accumulate on the MXU; bias + ReLU in f32 on the VPU.
        z = jnp.dot(h, w_ref[...], preferred_element_type=jnp.float32)
        z = z + b_ref[...]
        if relu:
            return jnp.maximum(z, 0.0).astype(jnp.bfloat16)
        return z

    h = x_ref[...]                        # (TM, 896) bf16
    # ---- encoder ----
    h = dense(h, w1_ref, b1_ref, True)    # 896(=784+pad) -> 512
    h = dense(h, w2_ref, b2_ref, True)    # 512 -> 256
    h = dense(h, w3_ref, b3_ref, True)    # 256 -> 128
    # ---- decoder ----
    h = dense(h, w4_ref, b4_ref, True)    # 128 -> 256
    h = dense(h, w5_ref, b5_ref, True)    # 256 -> 512
    z = dense(h, w6_ref, b6_ref, False)   # 512 -> 896 (final layer, no ReLU)
    out_ref[...] = z                      # f32


# ---------------------------------------------------------------------------
# Wrapper
# ---------------------------------------------------------------------------
def _round_up(x, m):
    return ((x + m - 1) // m) * m


@jax.jit
def autoencoder_forward(x_nchw, prepped_params):
    """x_nchw: (B, 1, 28, 28) float32 -> (B, 1, 28, 28) float32."""
    B = x_nchw.shape[0]
    tm = TM_MAX if B >= TM_MAX else _round_up(max(B, 1), 8)
    b_pad = _round_up(B, tm)
    num_tiles = b_pad // tm

    # Flatten exactly like torch's x.view(-1, 784); cast activations to bf16;
    # pad batch to a TM multiple and features to 896 lanes.
    x2d = x_nchw.reshape(B, IN_FEATURES).astype(jnp.bfloat16)
    x2d = jnp.pad(x2d, ((0, b_pad - B), (0, PAD_FEATURES - IN_FEATURES)))

    flat = []
    for (w, b) in prepped_params:
        flat += [w, b]

    def resident(a):
        # Whole-array block whose index never changes -> stays in VMEM across
        # the batch grid (no re-DMA of weights/biases per tile).
        return pl.BlockSpec(a.shape, lambda i, _s=a.shape: tuple(0 for _ in _s))

    in_specs = [pl.BlockSpec((tm, PAD_FEATURES), lambda i: (i, 0))]
    in_specs += [resident(a) for a in flat]

    out = pl.pallas_call(
        autoencoder_kernel,
        out_shape=jax.ShapeDtypeStruct((b_pad, PAD_FEATURES), jnp.float32),
        grid_spec=pltpu.PrefetchScalarGridSpec(
            num_scalar_prefetch=0,
            grid=(num_tiles,),
            in_specs=in_specs,
            out_specs=pl.BlockSpec((tm, PAD_FEATURES), lambda i: (i, 0)),
        ),
        compiler_params=pltpu.CompilerParams(
            dimension_semantics=("parallel",),          # pipelining + megacore on v7x
            vmem_limit_bytes=32 * 1024 * 1024,          # fits every generation
        ),
    )(x2d, *flat)

    return out[:B, :IN_FEATURES].reshape(B, 1, 28, 28)


# ---------------------------------------------------------------------------
# Deterministic parameter init (PyTorch nn.Linear default: U(-1/sqrt(fan_in), +)).
# Weights stored (in_features, out_features); biases as (1, out_features).
# ---------------------------------------------------------------------------
def init_params(key):
    dims = [(IN_FEATURES, 512), (512, 256), (256, 128),
            (128, 256), (256, 512), (512, IN_FEATURES)]
    params = []
    for fan_in, fan_out in dims:
        key, kw, kb = jax.random.split(key, 3)
        bound = 1.0 / (fan_in ** 0.5)
        w = jax.random.uniform(kw, (fan_in, fan_out), jnp.float32, -bound, bound)
        b = jax.random.uniform(kb, (1, fan_out), jnp.float32, -bound, bound)
        params.append((w, b))
    return params


def prepare_params(params):
    """Pad W1 (K: 784->896, zero rows), W6/b6 (N: 784->896, cols sliced off later),
    and cast all weights to bf16 (biases stay f32 for f32 bias add)."""
    (w1, b1), (w2, b2), (w3, b3), (w4, b4), (w5, b5), (w6, b6) = params
    pad = PAD_FEATURES - IN_FEATURES
    w1 = jnp.pad(w1, ((0, pad), (0, 0)))
    w6 = jnp.pad(w6, ((0, 0), (0, pad)))
    b6 = jnp.pad(b6, ((0, 0), (0, pad)))
    weights = [w1, w2, w3, w4, w5, w6]
    biases = [b1, b2, b3, b4, b5, b6]
    return tuple(
        (w.astype(jnp.bfloat16), b.astype(jnp.float32))
        for w, b in zip(weights, biases)
    )


if __name__ == "__main__":
    key = jax.random.PRNGKey(0)
    key, kx = jax.random.split(key)

    params = init_params(key)
    prepped = prepare_params(params)

    B = 8
    x = jax.random.normal(kx, (B, 1, 28, 28), jnp.float32)

    y = autoencoder_forward(x, prepped)
    jax.block_until_ready(y)

    assert y.shape == (B, 1, 28, 28), y.shape
    assert y.dtype == jnp.float32, y.dtype

    print("KERNEL_OK")
</pallas_src>

<mosaic_0001>
module attributes {stable_mosaic.version = 11 : i64} {
  func.func @autoencoder_kernel(%arg0: i32, %arg1: memref<8x896xbf16, #tpu.memory_space<vmem>>, %arg2: memref<896x512xbf16, #tpu.memory_space<vmem>>, %arg3: memref<1x512xf32, #tpu.memory_space<vmem>>, %arg4: memref<512x256xbf16, #tpu.memory_space<vmem>>, %arg5: memref<1x256xf32, #tpu.memory_space<vmem>>, %arg6: memref<256x128xbf16, #tpu.memory_space<vmem>>, %arg7: memref<1x128xf32, #tpu.memory_space<vmem>>, %arg8: memref<128x256xbf16, #tpu.memory_space<vmem>>, %arg9: memref<1x256xf32, #tpu.memory_space<vmem>>, %arg10: memref<256x512xbf16, #tpu.memory_space<vmem>>, %arg11: memref<1x512xf32, #tpu.memory_space<vmem>>, %arg12: memref<512x896xbf16, #tpu.memory_space<vmem>>, %arg13: memref<1x896xf32, #tpu.memory_space<vmem>>, %arg14: memref<8x896xf32, #tpu.memory_space<vmem>>) attributes {dimension_semantics = [#tpu.dimension_semantics<parallel>], iteration_bounds = array<i64: 1>, scalar_prefetch = 0 : i64, scratch_operands = 0 : i64, tpu.core_type = #tpu.core_type<tc>, window_params = [{transform_indices = @transform_0, window_bounds = array<i64: 8, 896>}, {pipeline_mode = #tpu.pipeline_mode<synchronous>, transform_indices = @transform_1, window_bounds = array<i64: 896, 512>}, {pipeline_mode = #tpu.pipeline_mode<synchronous>, transform_indices = @transform_2, window_bounds = array<i64: 1, 512>}, {pipeline_mode = #tpu.pipeline_mode<synchronous>, transform_indices = @transform_3, window_bounds = array<i64: 512, 256>}, {pipeline_mode = #tpu.pipeline_mode<synchronous>, transform_indices = @transform_4, window_bounds = array<i64: 1, 256>}, {pipeline_mode = #tpu.pipeline_mode<synchronous>, transform_indices = @transform_5, window_bounds = array<i64: 256, 128>}, {pipeline_mode = #tpu.pipeline_mode<synchronous>, transform_indices = @transform_6, window_bounds = array<i64: 1, 128>}, {pipeline_mode = #tpu.pipeline_mode<synchronous>, transform_indices = @transform_7, window_bounds = array<i64: 128, 256>}, {pipeline_mode = #tpu.pipeline_mode<synchronous>, transform_indices = @transform_8, window_bounds = array<i64: 1, 256>}, {pipeline_mode = #tpu.pipeline_mode<synchronous>, transform_indices = @transform_9, window_bounds = array<i64: 256, 512>}, {pipeline_mode = #tpu.pipeline_mode<synchronous>, transform_indices = @transform_10, window_bounds = array<i64: 1, 512>}, {pipeline_mode = #tpu.pipeline_mode<synchronous>, transform_indices = @transform_11, window_bounds = array<i64: 512, 896>}, {pipeline_mode = #tpu.pipeline_mode<synchronous>, transform_indices = @transform_12, window_bounds = array<i64: 1, 896>}, {transform_indices = @transform_13, window_bounds = array<i64: 8, 896>}]} {
    %c0 = arith.constant 0 : index
    %c0_0 = arith.constant 0 : index
    %0 = vector.load %arg1[%c0, %c0_0] : memref<8x896xbf16, #tpu.memory_space<vmem>>, vector<8x896xbf16>
    %c0_1 = arith.constant 0 : index
    %c0_2 = arith.constant 0 : index
    %1 = vector.load %arg2[%c0_1, %c0_2] : memref<896x512xbf16, #tpu.memory_space<vmem>>, vector<896x512xbf16>
    %cst = arith.constant dense<0.000000e+00> : vector<8x512xf32>
    %2 = tpu.matmul %0, %1, %cst {dimension_numbers = #tpu.dot_dimension_numbers<[1], [0], [0], [1], [0, 0, 1, 1], [], []>} : vector<8x896xbf16>, vector<896x512xbf16>, vector<8x512xf32> -> vector<8x512xf32>
    %c0_3 = arith.constant 0 : index
    %c0_4 = arith.constant 0 : index
    %3 = vector.load %arg3[%c0_3, %c0_4] : memref<1x512xf32, #tpu.memory_space<vmem>>, vector<1x512xf32>
    %4 = vector.broadcast %3 : vector<1x512xf32> to vector<8x512xf32>
    %5 = arith.addf %2, %4 : vector<8x512xf32>
    %cst_5 = arith.constant 0.000000e+00 : f32
    %6 = vector.broadcast %cst_5 : f32 to vector<8x512xf32>
    %7 = arith.maximumf %5, %6 : vector<8x512xf32>
    %8 = arith.truncf %7 : vector<8x512xf32> to vector<8x512xbf16>
    %c0_6 = arith.constant 0 : index
    %c0_7 = arith.constant 0 : index
    %9 = vector.load %arg4[%c0_6, %c0_7] : memref<512x256xbf16, #tpu.memory_space<vmem>>, vector<512x256xbf16>
    %cst_8 = arith.constant dense<0.000000e+00> : vector<8x256xf32>
    %10 = tpu.matmul %8, %9, %cst_8 {dimension_numbers = #tpu.dot_dimension_numbers<[1], [0], [0], [1], [0, 0, 1, 1], [], []>} : vector<8x512xbf16>, vector<512x256xbf16>, vector<8x256xf32> -> vector<8x256xf32>
    %c0_9 = arith.constant 0 : index
    %c0_10 = arith.constant 0 : index
    %11 = vector.load %arg5[%c0_9, %c0_10] : memref<1x256xf32, #tpu.memory_space<vmem>>, vector<1x256xf32>
    %12 = vector.broadcast %11 : vector<1x256xf32> to vector<8x256xf32>
    %13 = arith.addf %10, %12 : vector<8x256xf32>
    %cst_11 = arith.constant 0.000000e+00 : f32
    %14 = vector.broadcast %cst_11 : f32 to vector<8x256xf32>
    %15 = arith.maximumf %13, %14 : vector<8x256xf32>
    %16 = arith.truncf %15 : vector<8x256xf32> to vector<8x256xbf16>
    %c0_12 = arith.constant 0 : index
    %c0_13 = arith.constant 0 : index
    %17 = vector.load %arg6[%c0_12, %c0_13] : memref<256x128xbf16, #tpu.memory_space<vmem>>, vector<256x128xbf16>
    %cst_14 = arith.constant dense<0.000000e+00> : vector<8x128xf32>
    %18 = tpu.matmul %16, %17, %cst_14 {dimension_numbers = #tpu.dot_dimension_numbers<[1], [0], [0], [1], [0, 0, 1, 1], [], []>} : vector<8x256xbf16>, vector<256x128xbf16>, vector<8x128xf32> -> vector<8x128xf32>
    %c0_15 = arith.constant 0 : index
    %c0_16 = arith.constant 0 : index
    %19 = vector.load %arg7[%c0_15, %c0_16] : memref<1x128xf32, #tpu.memory_space<vmem>>, vector<1x128xf32>
    %20 = vector.broadcast %19 : vector<1x128xf32> to vector<8x128xf32>
    %21 = arith.addf %18, %20 : vector<8x128xf32>
    %cst_17 = arith.constant 0.000000e+00 : f32
    %22 = vector.broadcast %cst_17 : f32 to vector<8x128xf32>
    %23 = arith.maximumf %21, %22 : vector<8x128xf32>
    %24 = arith.truncf %23 : vector<8x128xf32> to vector<8x128xbf16>
    %c0_18 = arith.constant 0 : index
    %c0_19 = arith.constant 0 : index
    %25 = vector.load %arg8[%c0_18, %c0_19] : memref<128x256xbf16, #tpu.memory_space<vmem>>, vector<128x256xbf16>
    %cst_20 = arith.constant dense<0.000000e+00> : vector<8x256xf32>
    %26 = tpu.matmul %24, %25, %cst_20 {dimension_numbers = #tpu.dot_dimension_numbers<[1], [0], [0], [1], [0, 0, 1, 1], [], []>} : vector<8x128xbf16>, vector<128x256xbf16>, vector<8x256xf32> -> vector<8x256xf32>
    %c0_21 = arith.constant 0 : index
    %c0_22 = arith.constant 0 : index
    %27 = vector.load %arg9[%c0_21, %c0_22] : memref<1x256xf32, #tpu.memory_space<vmem>>, vector<1x256xf32>
    %28 = vector.broadcast %27 : vector<1x256xf32> to vector<8x256xf32>
    %29 = arith.addf %26, %28 : vector<8x256xf32>
    %cst_23 = arith.constant 0.000000e+00 : f32
    %30 = vector.broadcast %cst_23 : f32 to vector<8x256xf32>
    %31 = arith.maximumf %29, %30 : vector<8x256xf32>
    %32 = arith.truncf %31 : vector<8x256xf32> to vector<8x256xbf16>
    %c0_24 = arith.constant 0 : index
    %c0_25 = arith.constant 0 : index
    %33 = vector.load %arg10[%c0_24, %c0_25] : memref<256x512xbf16, #tpu.memory_space<vmem>>, vector<256x512xbf16>
    %cst_26 = arith.constant dense<0.000000e+00> : vector<8x512xf32>
    %34 = tpu.matmul %32, %33, %cst_26 {dimension_numbers = #tpu.dot_dimension_numbers<[1], [0], [0], [1], [0, 0, 1, 1], [], []>} : vector<8x256xbf16>, vector<256x512xbf16>, vector<8x512xf32> -> vector<8x512xf32>
    %c0_27 = arith.constant 0 : index
    %c0_28 = arith.constant 0 : index
    %35 = vector.load %arg11[%c0_27, %c0_28] : memref<1x512xf32, #tpu.memory_space<vmem>>, vector<1x512xf32>
    %36 = vector.broadcast %35 : vector<1x512xf32> to vector<8x512xf32>
    %37 = arith.addf %34, %36 : vector<8x512xf32>
    %cst_29 = arith.constant 0.000000e+00 : f32
    %38 = vector.broadcast %cst_29 : f32 to vector<8x512xf32>
    %39 = arith.maximumf %37, %38 : vector<8x512xf32>
    %40 = arith.truncf %39 : vector<8x512xf32> to vector<8x512xbf16>
    %c0_30 = arith.constant 0 : index
    %c0_31 = arith.constant 0 : index
    %41 = vector.load %arg12[%c0_30, %c0_31] : memref<512x896xbf16, #tpu.memory_space<vmem>>, vector<512x896xbf16>
    %cst_32 = arith.constant dense<0.000000e+00> : vector<8x896xf32>
    %42 = tpu.matmul %40, %41, %cst_32 {dimension_numbers = #tpu.dot_dimension_numbers<[1], [0], [0], [1], [0, 0, 1, 1], [], []>} : vector<8x512xbf16>, vector<512x896xbf16>, vector<8x896xf32> -> vector<8x896xf32>
    %c0_33 = arith.constant 0 : index
    %c0_34 = arith.constant 0 : index
    %43 = vector.load %arg13[%c0_33, %c0_34] : memref<1x896xf32, #tpu.memory_space<vmem>>, vector<1x896xf32>
    %44 = vector.broadcast %43 : vector<1x896xf32> to vector<8x896xf32>
    %45 = arith.addf %42, %44 : vector<8x896xf32>
    %c0_35 = arith.constant 0 : index
    %c0_36 = arith.constant 0 : index
    %46 = vector.load %arg14[%c0_35, %c0_36] : memref<8x896xf32, #tpu.memory_space<vmem>>, vector<8x896xf32>
    tpu.vector_store %arg14[%c0_35, %c0_36], %45 {strides = array<i32>} : memref<8x896xf32, #tpu.memory_space<vmem>>, vector<8x896xf32>,
    return
  }
  func.func @transform_0(%arg0: i32) -> (i32, i32) {
    %c0_i32 = arith.constant 0 : i32
    %c0_i32_0 = arith.constant 0 : i32
    return %arg0, %c0_i32 : i32, i32
  }
  func.func @transform_1(%arg0: i32) -> (i32, i32) {
    %c0_i32 = arith.constant 0 : i32
    %c0_i32_0 = arith.constant 0 : i32
    %c0_i32_1 = arith.constant 0 : i32
    return %c0_i32, %c0_i32_0 : i32, i32
  }
  func.func @transform_2(%arg0: i32) -> (i32, i32) {
    %c0_i32 = arith.constant 0 : i32
    %c0_i32_0 = arith.constant 0 : i32
    %c0_i32_1 = arith.constant 0 : i32
    return %c0_i32, %c0_i32_0 : i32, i32
  }
  func.func @transform_3(%arg0: i32) -> (i32, i32) {
    %c0_i32 = arith.constant 0 : i32
    %c0_i32_0 = arith.constant 0 : i32
    %c0_i32_1 = arith.constant 0 : i32
    return %c0_i32, %c0_i32_0 : i32, i32
  }
  func.func @transform_4(%arg0: i32) -> (i32, i32) {
    %c0_i32 = arith.constant 0 : i32
    %c0_i32_0 = arith.constant 0 : i32
    %c0_i32_1 = arith.constant 0 : i32
    return %c0_i32, %c0_i32_0 : i32, i32
  }
  func.func @transform_5(%arg0: i32) -> (i32, i32) {
    %c0_i32 = arith.constant 0 : i32
    %c0_i32_0 = arith.constant 0 : i32
    %c0_i32_1 = arith.constant 0 : i32
    return %c0_i32, %c0_i32_0 : i32, i32
  }
  func.func @transform_6(%arg0: i32) -> (i32, i32) {
    %c0_i32 = arith.constant 0 : i32
    %c0_i32_0 = arith.constant 0 : i32
    %c0_i32_1 = arith.constant 0 : i32
    return %c0_i32, %c0_i32_0 : i32, i32
  }
  func.func @transform_7(%arg0: i32) -> (i32, i32) {
    %c0_i32 = arith.constant 0 : i32
    %c0_i32_0 = arith.constant 0 : i32
    %c0_i32_1 = arith.constant 0 : i32
    return %c0_i32, %c0_i32_0 : i32, i32
  }
  func.func @transform_8(%arg0: i32) -> (i32, i32) {
    %c0_i32 = arith.constant 0 : i32
    %c0_i32_0 = arith.constant 0 : i32
    %c0_i32_1 = arith.constant 0 : i32
    return %c0_i32, %c0_i32_0 : i32, i32
  }
  func.func @transform_9(%arg0: i32) -> (i32, i32) {
    %c0_i32 = arith.constant 0 : i32
    %c0_i32_0 = arith.constant 0 : i32
    %c0_i32_1 = arith.constant 0 : i32
    return %c0_i32, %c0_i32_0 : i32, i32
  }
  func.func @transform_10(%arg0: i32) -> (i32, i32) {
    %c0_i32 = arith.constant 0 : i32
    %c0_i32_0 = arith.constant 0 : i32
    %c0_i32_1 = arith.constant 0 : i32
    return %c0_i32, %c0_i32_0 : i32, i32
  }
  func.func @transform_11(%arg0: i32) -> (i32, i32) {
    %c0_i32 = arith.constant 0 : i32
    %c0_i32_0 = arith.constant 0 : i32
    %c0_i32_1 = arith.constant 0 : i32
    return %c0_i32, %c0_i32_0 : i32, i32
  }
  func.func @transform_12(%arg0: i32) -> (i32, i32) {
    %c0_i32 = arith.constant 0 : i32
    %c0_i32_0 = arith.constant 0 : i32
    %c0_i32_1 = arith.constant 0 : i32
    return %c0_i32, %c0_i32_0 : i32, i32
  }
  func.func @transform_13(%arg0: i32) -> (i32, i32) {
    %c0_i32 = arith.constant 0 : i32
    %c0_i32_0 = arith.constant 0 : i32
    return %arg0, %c0_i32 : i32, i32
  }
}

</mosaic_0001>

<llo_original>
// kernel: autoencoder_forward.1
$region0: #{autoencoder_forward.1}
  #allocation0 [shape = 'u32[]', space=smem, size = 0x4, offset = 0x4, fixed_abs, tag = 'smem constant byte address 0x4 - core index']
  #allocation1 [shape = 'u32[144,128]{1,0:T(1,128)}', space=vmem, size = 0x12000, scoped, tag = 'internal scratch']
  %s0 = inlined_call_operand.vmem [shape: bf16[8,896], index: 0, kind: input, shape index: {}]
  %s1 = inlined_call_operand.hbm [shape: bf16[896,512], index: 1, kind: input, shape index: {}]
  %s2 = inlined_call_operand.vmem [shape: f32[1,512], index: 2, kind: input, shape index: {}]
  %s3 = inlined_call_operand.vmem [shape: bf16[512,256], index: 3, kind: input, shape index: {}]
  %s4 = inlined_call_operand.vmem [shape: f32[1,256], index: 4, kind: input, shape index: {}]
  %s5 = inlined_call_operand.hbm [shape: bf16[256,128], index: 5, kind: input, shape index: {}]
  %s6 = inlined_call_operand.vmem [shape: f32[1,128], index: 6, kind: input, shape index: {}]
  %s7 = inlined_call_operand.hbm [shape: bf16[128,256], index: 7, kind: input, shape index: {}]
  %s8 = inlined_call_operand.vmem [shape: f32[1,256], index: 8, kind: input, shape index: {}]
  %s9 = inlined_call_operand.hbm [shape: bf16[256,512], index: 9, kind: input, shape index: {}]
  %s10 = inlined_call_operand.vmem [shape: f32[1,512], index: 10, kind: input, shape index: {}]
  %s11 = inlined_call_operand.hbm [shape: bf16[512,896], index: 11, kind: input, shape index: {}]
  %s12 = inlined_call_operand.vmem [shape: f32[1,896], index: 12, kind: input, shape index: {}]
  %s13 = inlined_call_operand.vmem [shape: f32[8,896], index: 13, kind: output, shape index: {}]
  %s14 = sld [smem:[#allocation0]]
  $region82: #{autoencoder_forward.1} parent=0
    _
  %s16 = ssub.s32 1, %s14
  %s17 = scalar_select 0, %s16, %s14
  $region1: #{autoencoder_forward.1} parent=0
    #allocation2 [shape = 'u8[917504]{0}', space=vmem, size = 0xe0000, scoped, tag = 'input window, operand 1, single buffered']
    #allocation3 [shape = 's32[1]{0}', space=sflag, size = 0x4, scoped, tag = 'scoped memory for autoencoder_forward.1']
    #allocation4 [shape = 'u8[65536]{0}', space=vmem, size = 0x10000, scoped, tag = 'input window, operand 5, single buffered']
    #allocation5 [shape = 's32[1]{0}', space=sflag, size = 0x4, scoped, tag = 'scoped memory for autoencoder_forward.1']
    #allocation6 [shape = 'u8[65536]{0}', space=vmem, size = 0x10000, scoped, tag = 'input window, operand 7, single buffered']
    #allocation7 [shape = 'u8[262144]{0}', space=vmem, size = 0x40000, scoped, tag = 'input window, operand 9, single buffered']
    #allocation8 [shape = 's32[1]{0}', space=sflag, size = 0x4, scoped, tag = 'scoped memory for autoencoder_forward.1']
    #allocation9 [shape = 'u8[917504]{0}', space=vmem, size = 0xe0000, scoped, tag = 'input window, operand 11, single buffered']
    %18 = vsyncpa [#allocation3], 0
    %19 = vsyncpa [#allocation5], 0
    %20 = vsyncpa [#allocation8], 0
    // Predicated region
    $region2: #{autoencoder_forward.1} parent=1 // pred_check
      _
    $region3: #{autoencoder_forward.1} parent=1 // pred_check_branch
      %22 = sbr.rel (0) target = $region5
    $region4: #{autoencoder_forward.1} parent=1 // pred_region
      _
    $region5: #{autoencoder_forward.1} parent=1 // pred_fallthru
      _
    // Predicated region
    $region6: #{autoencoder_forward.1} parent=1 // pred_check
      _
    $region7: #{autoencoder_forward.1} parent=1 // pred_check_branch
      %24 = sbr.rel (0) target = $region9
    $region8: #{autoencoder_forward.1} parent=1 // pred_region
      %s26 = ssub.s32 28672, 28672
      %27 = vsyncadd [#allocation3], %s26
      %s28 = sshll.u32 [#allocation2], 4
      %s29 = int_to_ptr.vmem [resolvable:$true] %s28
      %34 = dma.hbm_to_vmem [thread:$0]  %s1, 28672, %s29, [#allocation3], 256, 256, 16
    $region9: #{autoencoder_forward.1} parent=1 // pred_fallthru
      _
    // Predicated region
    $region10: #{autoencoder_forward.1} parent=1 // pred_check
      _
    $region11: #{autoencoder_forward.1} parent=1 // pred_check_branch
      %36 = sbr.rel (0) target = $region13
    $region12: #{autoencoder_forward.1} parent=1 // pred_region
      _
    $region13: #{autoencoder_forward.1} parent=1 // pred_fallthru
      _
    // Predicated region
    $region14: #{autoencoder_forward.1} parent=1 // pred_check
      _
    $region15: #{autoencoder_forward.1} parent=1 // pred_check_branch
      %38 = sbr.rel (0) target = $region17
    $region16: #{autoencoder_forward.1} parent=1 // pred_region
      _
    $region17: #{autoencoder_forward.1} parent=1 // pred_fallthru
      _
    // Predicated region
    $region18: #{autoencoder_forward.1} parent=1 // pred_check
      _
    $region19: #{autoencoder_forward.1} parent=1 // pred_check_branch
      %40 = sbr.rel (0) target = $region21
    $region20: #{autoencoder_forward.1} parent=1 // pred_region
      _
    $region21: #{autoencoder_forward.1} parent=1 // pred_fallthru
      _
    // Predicated region
    $region22: #{autoencoder_forward.1} parent=1 // pred_check
      _
    $region23: #{autoencoder_forward.1} parent=1 // pred_check_branch
      %42 = sbr.rel (0) target = $region25
    $region24: #{autoencoder_forward.1} parent=1 // pred_region
      %s44 = ssub.s32 2048, 2048
      %45 = vsyncadd [#allocation5], %s44
      %s46 = sshll.u32 [#allocation4], 4
      %s47 = int_to_ptr.vmem [resolvable:$true] %s46
      %52 = dma.hbm_to_vmem [thread:$0]  %s5, 2048, %s47, [#allocation5], 64, 64, 4
    $region25: #{autoencoder_forward.1} parent=1 // pred_fallthru
      _
    // Predicated region
    $region26: #{autoencoder_forward.1} parent=1 // pred_check
      _
    $region27: #{autoencoder_forward.1} parent=1 // pred_check_branch
      %54 = sbr.rel (0) target = $region29
    $region28: #{autoencoder_forward.1} parent=1 // pred_region
      _
    $region29: #{autoencoder_forward.1} parent=1 // pred_fallthru
      _
    // Predicated region
    $region30: #{autoencoder_forward.1} parent=1 // pred_check
      _
    $region31: #{autoencoder_forward.1} parent=1 // pred_check_branch
      %56 = sbr.rel (0) target = $region33
    $region32: #{autoencoder_forward.1} parent=1 // pred_region
      %s58 = ssub.s32 2048, 2048
      %59 = vsyncadd [#allocation5], %s58
      %s60 = sshll.u32 [#allocation6], 4
      %s61 = int_to_ptr.vmem [resolvable:$true] %s60
      %66 = dma.hbm_to_vmem [thread:$0]  %s7, 2048, %s61, [#allocation5], 128, 128, 8
    $region33: #{autoencoder_forward.1} parent=1 // pred_fallthru
      _
    // Predicated region
    $region34: #{autoencoder_forward.1} parent=1 // pred_check
      _
    $region35: #{autoencoder_forward.1} parent=1 // pred_check_branch
      %68 = sbr.rel (0) target = $region37
    $region36: #{autoencoder_forward.1} parent=1 // pred_region
      _
    $region37: #{autoencoder_forward.1} parent=1 // pred_fallthru
      _
    // Predicated region
    $region38: #{autoencoder_forward.1} parent=1 // pred_check
      _
    $region39: #{autoencoder_forward.1} parent=1 // pred_check_branch
      %70 = sbr.rel (0) target = $region41
    $region40: #{autoencoder_forward.1} parent=1 // pred_region
      %s72 = ssub.s32 8192, 8192
      %73 = vsyncadd [#allocation8], %s72
      %s74 = sshll.u32 [#allocation7], 4
      %s75 = int_to_ptr.vmem [resolvable:$true] %s74
      %80 = dma.hbm_to_vmem [thread:$0]  %s9, 8192, %s75, [#allocation8], 256, 256, 16
    $region41: #{autoencoder_forward.1} parent=1 // pred_fallthru
      _
    // Predicated region
    $region42: #{autoencoder_forward.1} parent=1 // pred_check
      _
    $region43: #{autoencoder_forward.1} parent=1 // pred_check_branch
      %82 = sbr.rel (0) target = $region45
    $region44: #{autoencoder_forward.1} parent=1 // pred_region
      _
    $region45: #{autoencoder_forward.1} parent=1 // pred_fallthru
      _
    // Predicated region
    $region46: #{autoencoder_forward.1} parent=1 // pred_check
      _
    $region47: #{autoencoder_forward.1} parent=1 // pred_check_branch
      %84 = sbr.rel (0) target = $region49
    $region48: #{autoencoder_forward.1} parent=1 // pred_region
      %s86 = ssub.s32 28672, 28672
      %87 = vsyncadd [#allocation8], %s86
      %s88 = sshll.u32 [#allocation9], 4
      %s89 = int_to_ptr.vmem [resolvable:$true] %s88
      %94 = dma.hbm_to_vmem [thread:$0]  %s11, 28672, %s89, [#allocation8], 448, 448, 28
    $region49: #{autoencoder_forward.1} parent=1 // pred_fallthru
      _
    // Predicated region
    $region50: #{autoencoder_forward.1} parent=1 // pred_check
      _
    $region51: #{autoencoder_forward.1} parent=1 // pred_check_branch
      %96 = sbr.rel (0) target = $region53
    $region52: #{autoencoder_forward.1} parent=1 // pred_region
      _
    $region53: #{autoencoder_forward.1} parent=1 // pred_fallthru
      _
    // Predicated region
    $region54: #{autoencoder_forward.1} parent=1 // pred_check
      _
    $region55: #{autoencoder_forward.1} parent=1 // pred_check_branch
      %98 = sbr.rel (0) target = $region57
    $region56: #{autoencoder_forward.1} parent=1 // pred_region
      %99 = dma.done [#allocation3], 28672
    $region57: #{autoencoder_forward.1} parent=1 // pred_fallthru
      _
    // Predicated region
    $region58: #{autoencoder_forward.1} parent=1 // pred_check
      _
    $region59: #{autoencoder_forward.1} parent=1 // pred_check_branch
      %101 = sbr.rel (0) target = $region61
    $region60: #{autoencoder_forward.1} parent=1 // pred_region
      %102 = dma.done [#allocation5], 2048
    $region61: #{autoencoder_forward.1} parent=1 // pred_fallthru
      _
    // Predicated region
    $region62: #{autoencoder_forward.1} parent=1 // pred_check
      _
    $region63: #{autoencoder_forward.1} parent=1 // pred_check_branch
      %104 = sbr.rel (0) target = $region65
    $region64: #{autoencoder_forward.1} parent=1 // pred_region
      %105 = dma.done [#allocation5], 2048
    $region65: #{autoencoder_forward.1} parent=1 // pred_fallthru
      _
    // Predicated region
    $region66: #{autoencoder_forward.1} parent=1 // pred_check
      _
    $region67: #{autoencoder_forward.1} parent=1 // pred_check_branch
      %107 = sbr.rel (0) target = $region69
    $region68: #{autoencoder_forward.1} parent=1 // pred_region
      %108 = dma.done [#allocation8], 8192
    $region69: #{autoencoder_forward.1} parent=1 // pred_fallthru
      _
    // Predicated region
    $region70: #{autoencoder_forward.1} parent=1 // pred_check
      _
    $region71: #{autoencoder_forward.1} parent=1 // pred_check_branch
      %110 = sbr.rel (0) target = $region73
    $region72: #{autoencoder_forward.1} parent=1 // pred_region
      %111 = dma.done [#allocation8], 28672
    $region73: #{autoencoder_forward.1} parent=1 // pred_fallthru
      _
    %v113 = vld [vmem:[%s0] sm:$0xff]
    %v114 = vld [vmem:[%s0 + $0x8] sm:$0xff]
    %v115 = vld [vmem:[%s0 + $0x10] sm:$0xff]
    %v116 = vld [vmem:[%s0 + $0x18] sm:$0xf]
    %v117 = vld [vmem:[#allocation2] sm:$0xff]
    %v118 = vld [vmem:[#allocation2 + $0x8] sm:$0xff]
    %v119 = vld [vmem:[#allocation2 + $0x10] sm:$0xff]
    %v120 = vld [vmem:[#allocation2 + $0x18] sm:$0xff]
    %v121 = vld [vmem:[#allocation2 + $0x20] sm:$0xff]
    %v122 = vld [vmem:[#allocation2 + $0x28] sm:$0xff]
    %v123 = vld [vmem:[#allocation2 + $0x30] sm:$0xff]
    %v124 = vld [vmem:[#allocation2 + $0x38] sm:$0xff]
    %v125 = vld [vmem:[#allocation2 + $0x40] sm:$0xff]
    %v126 = vld [vmem:[#allocation2 + $0x48] sm:$0xff]
    %v127 = vld [vmem:[#allocation2 + $0x50] sm:$0xff]
    %v128 = vld [vmem:[#allocation2 + $0x58] sm:$0xff]
    %v129 = vld [vmem:[#allocation2 + $0x60] sm:$0xff]
    %v130 = vld [vmem:[#allocation2 + $0x68] sm:$0xff]
    %v131 = vld [vmem:[#allocation2 + $0x70] sm:$0xff]
    %v132 = vld [vmem:[#allocation2 + $0x78] sm:$0xff]
    %v133 = vld [vmem:[#allocation2 + $0x80] sm:$0xff]
    %v134 = vld [vmem:[#allocation2 + $0x88] sm:$0xff]
    %v135 = vld [vmem:[#allocation2 + $0x90] sm:$0xff]
    %v136 = vld [vmem:[#allocation2 + $0x98] sm:$0xff]
    %v137 = vld [vmem:[#allocation2 + $0xa0] sm:$0xff]
    %v138 = vld [vmem:[#allocation2 + $0xa8] sm:$0xff]
    %v139 = vld [vmem:[#allocation2 + $0xb0] sm:$0xff]
    %v140 = vld [vmem:[#allocation2 + $0xb8] sm:$0xff]
    %v141 = vld [vmem:[#allocation2 + $0xc0] sm:$0xff]
    %v142 = vld [vmem:[#allocation2 + $0xc8] sm:$0xff]
    %v143 = vld [vmem:[#allocation2 + $0xd0] sm:$0xff]
    %v144 = vld [vmem:[#allocation2 + $0xd8] sm:$0xff]
    %v145 = vld [vmem:[#allocation2 + $0xe0] sm:$0xff]
    %v146 = vld [vmem:[#allocation2 + $0xe8] sm:$0xff]
    %v147 = vld [vmem:[#allocation2 + $0xf0] sm:$0xff]
    %v148 = vld [vmem:[#allocation2 + $0xf8] sm:$0xff]
    %v149 = vld [vmem:[#allocation2 + $0x100] sm:$0xff]
    %v150 = vld [vmem:[#allocation2 + $0x108] sm:$0xff]
    %v151 = vld [vmem:[#allocation2 + $0x110] sm:$0xff]
    %v152 = vld [vmem:[#allocation2 + $0x118] sm:$0xff]
    %v153 = vld [vmem:[#allocation2 + $0x120] sm:$0xff]
    %v154 = vld [vmem:[#allocation2 + $0x128] sm:$0xff]
    %v155 = vld [vmem:[#allocation2 + $0x130] sm:$0xff]
    %v156 = vld [vmem:[#allocation2 + $0x138] sm:$0xff]
    %v157 = vld [vmem:[#allocation2 + $0x140] sm:$0xff]
    %v158 = vld [vmem:[#allocation2 + $0x148] sm:$0xff]
    %v159 = vld [vmem:[#allocation2 + $0x150] sm:$0xff]
    %v160 = vld [vmem:[#allocation2 + $0x158] sm:$0xff]
    %v161 = vld [vmem:[#allocation2 + $0x160] sm:$0xff]
    %v162 = vld [vmem:[#allocation2 + $0x168] sm:$0xff]
    %v163 = vld [vmem:[#allocation2 + $0x170] sm:$0xff]
    %v164 = vld [vmem:[#allocation2 + $0x178] sm:$0xff]
    %v165 = vld [vmem:[#allocation2 + $0x180] sm:$0xff]
    %v166 = vld [vmem:[#allocation2 + $0x188] sm:$0xff]
    %v167 = vld [vmem:[#allocation2 + $0x190] sm:$0xff]
    %v168 = vld [vmem:[#allocation2 + $0x198] sm:$0xff]
    %v169 = vld [vmem:[#allocation2 + $0x1a0] sm:$0xff]
    %v170 = vld [vmem:[#allocation2 + $0x1a8] sm:$0xff]
    %v171 = vld [vmem:[#allocation2 + $0x1b0] sm:$0xff]
    %v172 = vld [vmem:[#allocation2 + $0x1b8] sm:$0xff]
    %v173 = vld [vmem:[#allocation2 + $0x1c0] sm:$0xff]
    %v174 = vld [vmem:[#allocation2 + $0x1c8] sm:$0xff]
    %v175 = vld [vmem:[#allocation2 + $0x1d0] sm:$0xff]
    %v176 = vld [vmem:[#allocation2 + $0x1d8] sm:$0xff]
    %v177 = vld [vmem:[#allocation2 + $0x1e0] sm:$0xff]
    %v178 = vld [vmem:[#allocation2 + $0x1e8] sm:$0xff]
    %v179 = vld [vmem:[#allocation2 + $0x1f0] sm:$0xff]
    %v180 = vld [vmem:[#allocation2 + $0x1f8] sm:$0xff]
    %v181 = vld [vmem:[#allocation2 + $0x200] sm:$0xff]
    %v182 = vld [vmem:[#allocation2 + $0x208] sm:$0xff]
    %v183 = vld [vmem:[#allocation2 + $0x210] sm:$0xff]
    %v184 = vld [vmem:[#allocation2 + $0x218] sm:$0xff]
    %v185 = vld [vmem:[#allocation2 + $0x220] sm:$0xff]
    %v186 = vld [vmem:[#allocation2 + $0x228] sm:$0xff]
    %v187 = vld [vmem:[#allocation2 + $0x230] sm:$0xff]
    %v188 = vld [vmem:[#allocation2 + $0x238] sm:$0xff]
    %v189 = vld [vmem:[#allocation2 + $0x240] sm:$0xff]
    %v190 = vld [vmem:[#allocation2 + $0x248] sm:$0xff]
    %v191 = vld [vmem:[#allocation2 + $0x250] sm:$0xff]
    %v192 = vld [vmem:[#allocation2 + $0x258] sm:$0xff]
    %v193 = vld [vmem:[#allocation2 + $0x260] sm:$0xff]
    %v194 = vld [vmem:[#allocation2 + $0x268] sm:$0xff]
    %v195 = vld [vmem:[#allocation2 + $0x270] sm:$0xff]
    %v196 = vld [vmem:[#allocation2 + $0x278] sm:$0xff]
    %v197 = vld [vmem:[#allocation2 + $0x280] sm:$0xff]
    %v198 = vld [vmem:[#allocation2 + $0x288] sm:$0xff]
    %v199 = vld [vmem:[#allocation2 + $0x290] sm:$0xff]
    %v200 = vld [vmem:[#allocation2 + $0x298] sm:$0xff]
    %v201 = vld [vmem:[#allocation2 + $0x2a0] sm:$0xff]
    %v202 = vld [vmem:[#allocation2 + $0x2a8] sm:$0xff]
    %v203 = vld [vmem:[#allocation2 + $0x2b0] sm:$0xff]
    %v204 = vld [vmem:[#allocation2 + $0x2b8] sm:$0xff]
    %v205 = vld [vmem:[#allocation2 + $0x2c0] sm:$0xff]
    %v206 = vld [vmem:[#allocation2 + $0x2c8] sm:$0xff]
    %v207 = vld [vmem:[#allocation2 + $0x2d0] sm:$0xff]
    %v208 = vld [vmem:[#allocation2 + $0x2d8] sm:$0xff]
    %v209 = vld [vmem:[#allocation2 + $0x2e0] sm:$0xff]
    %v210 = vld [vmem:[#allocation2 + $0x2e8] sm:$0xff]
    %v211 = vld [vmem:[#allocation2 + $0x2f0] sm:$0xff]
    %v212 = vld [vmem:[#allocation2 + $0x2f8] sm:$0xff]
    %v213 = vld [vmem:[#allocation2 + $0x300] sm:$0xff]
    %v214 = vld [vmem:[#allocation2 + $0x308] sm:$0xff]
    %v215 = vld [vmem:[#allocation2 + $0x310] sm:$0xff]
    %v216 = vld [vmem:[#allocation2 + $0x318] sm:$0xff]
    %v217 = vld [vmem:[#allocation2 + $0x320] sm:$0xff]
    %v218 = vld [vmem:[#allocation2 + $0x328] sm:$0xff]
    %v219 = vld [vmem:[#allocation2 + $0x330] sm:$0xff]
    %v220 = vld [vmem:[#allocation2 + $0x338] sm:$0xff]
    %v221 = vld [vmem:[#allocation2 + $0x340] sm:$0xff]
    %v222 = vld [vmem:[#allocation2 + $0x348] sm:$0xff]
    %v223 = vld [vmem:[#allocation2 + $0x350] sm:$0xff]
    %v224 = vld [vmem:[#allocation2 + $0x358] sm:$0xff]
    %v225 = vld [vmem:[#allocation2 + $0x360] sm:$0xff]
    %v226 = vld [vmem:[#allocation2 + $0x368] sm:$0xff]
    %v227 = vld [vmem:[#allocation2 + $0x370] sm:$0xff]
    %v228 = vld [vmem:[#allocation2 + $0x378] sm:$0xff]
    %v229 = vld [vmem:[#allocation2 + $0x380] sm:$0xff]
    %v230 = vld [vmem:[#allocation2 + $0x388] sm:$0xff]
    %v231 = vld [vmem:[#allocation2 + $0x390] sm:$0xff]
    %v232 = vld [vmem:[#allocation2 + $0x398] sm:$0xff]
    %v233 = vld [vmem:[#allocation2 + $0x3a0] sm:$0xff]
    %v234 = vld [vmem:[#allocation2 + $0x3a8] sm:$0xff]
    %v235 = vld [vmem:[#allocation2 + $0x3b0] sm:$0xff]
    %v236 = vld [vmem:[#allocation2 + $0x3b8] sm:$0xff]
    %v237 = vld [vmem:[#allocation2 + $0x3c0] sm:$0xff]
    %v238 = vld [vmem:[#allocation2 + $0x3c8] sm:$0xff]
    %v239 = vld [vmem:[#allocation2 + $0x3d0] sm:$0xff]
    %v240 = vld [vmem:[#allocation2 + $0x3d8] sm:$0xff]
    %v241 = vld [vmem:[#allocation2 + $0x3e0] sm:$0xff]
    %v242 = vld [vmem:[#allocation2 + $0x3e8] sm:$0xff]
    %v243 = vld [vmem:[#allocation2 + $0x3f0] sm:$0xff]
    %v244 = vld [vmem:[#allocation2 + $0x3f8] sm:$0xff]
    %v245 = vld [vmem:[#allocation2 + $0x400] sm:$0xff]
    %v246 = vld [vmem:[#allocation2 + $0x408] sm:$0xff]
    %v247 = vld [vmem:[#allocation2 + $0x410] sm:$0xff]
    %v248 = vld [vmem:[#allocation2 + $0x418] sm:$0xff]
    %v249 = vld [vmem:[#allocation2 + $0x420] sm:$0xff]
    %v250 = vld [vmem:[#allocation2 + $0x428] sm:$0xff]
    %v251 = vld [vmem:[#allocation2 + $0x430] sm:$0xff]
    %v252 = vld [vmem:[#allocation2 + $0x438] sm:$0xff]
    %v253 = vld [vmem:[#allocation2 + $0x440] sm:$0xff]
    %v254 = vld [vmem:[#allocation2 + $0x448] sm:$0xff]
    %v255 = vld [vmem:[#allocation2 + $0x450] sm:$0xff]
    %v256 = vld [vmem:[#allocation2 + $0x458] sm:$0xff]
    %v257 = vld [vmem:[#allocation2 + $0x460] sm:$0xff]
    %v258 = vld [vmem:[#allocation2 + $0x468] sm:$0xff]
    %v259 = vld [vmem:[#allocation2 + $0x470] sm:$0xff]
    %v260 = vld [vmem:[#allocation2 + $0x478] sm:$0xff]
    %v261 = vld [vmem:[#allocation2 + $0x480] sm:$0xff]
    %v262 = vld [vmem:[#allocation2 + $0x488] sm:$0xff]
    %v263 = vld [vmem:[#allocation2 + $0x490] sm:$0xff]
    %v264 = vld [vmem:[#allocation2 + $0x498] sm:$0xff]
    %v265 = vld [vmem:[#allocation2 + $0x4a0] sm:$0xff]
    %v266 = vld [vmem:[#allocation2 + $0x4a8] sm:$0xff]
    %v267 = vld [vmem:[#allocation2 + $0x4b0] sm:$0xff]
    %v268 = vld [vmem:[#allocation2 + $0x4b8] sm:$0xff]
    %v269 = vld [vmem:[#allocation2 + $0x4c0] sm:$0xff]
    %v270 = vld [vmem:[#allocation2 + $0x4c8] sm:$0xff]
    %v271 = vld [vmem:[#allocation2 + $0x4d0] sm:$0xff]
    %v272 = vld [vmem:[#allocation2 + $0x4d8] sm:$0xff]
    %v273 = vld [vmem:[#allocation2 + $0x4e0] sm:$0xff]
    %v274 = vld [vmem:[#allocation2 + $0x4e8] sm:$0xff]
    %v275 = vld [vmem:[#allocation2 + $0x4f0] sm:$0xff]
    %v276 = vld [vmem:[#allocation2 + $0x4f8] sm:$0xff]
    %v277 = vld [vmem:[#allocation2 + $0x500] sm:$0xff]
    %v278 = vld [vmem:[#allocation2 + $0x508] sm:$0xff]
    %v279 = vld [vmem:[#allocation2 + $0x510] sm:$0xff]
    %v280 = vld [vmem:[#allocation2 + $0x518] sm:$0xff]
    %v281 = vld [vmem:[#allocation2 + $0x520] sm:$0xff]
    %v282 = vld [vmem:[#allocation2 + $0x528] sm:$0xff]
    %v283 = vld [vmem:[#allocation2 + $0x530] sm:$0xff]
    %v284 = vld [vmem:[#allocation2 + $0x538] sm:$0xff]
    %v285 = vld [vmem:[#allocation2 + $0x540] sm:$0xff]
    %v286 = vld [vmem:[#allocation2 + $0x548] sm:$0xff]
    %v287 = vld [vmem:[#allocation2 + $0x550] sm:$0xff]
    %v288 = vld [vmem:[#allocation2 + $0x558] sm:$0xff]
    %v289 = vld [vmem:[#allocation2 + $0x560] sm:$0xff]
    %v290 = vld [vmem:[#allocation2 + $0x568] sm:$0xff]
    %v291 = vld [vmem:[#allocation2 + $0x570] sm:$0xff]
    %v292 = vld [vmem:[#allocation2 + $0x578] sm:$0xff]
    %v293 = vld [vmem:[#allocation2 + $0x580] sm:$0xff]
    %v294 = vld [vmem:[#allocation2 + $0x588] sm:$0xff]
    %v295 = vld [vmem:[#allocation2 + $0x590] sm:$0xff]
    %v296 = vld [vmem:[#allocation2 + $0x598] sm:$0xff]
    %v297 = vld [vmem:[#allocation2 + $0x5a0] sm:$0xff]
    %v298 = vld [vmem:[#allocation2 + $0x5a8] sm:$0xff]
    %v299 = vld [vmem:[#allocation2 + $0x5b0] sm:$0xff]
    %v300 = vld [vmem:[#allocation2 + $0x5b8] sm:$0xff]
    %v301 = vld [vmem:[#allocation2 + $0x5c0] sm:$0xff]
    %v302 = vld [vmem:[#allocation2 + $0x5c8] sm:$0xff]
    %v303 = vld [vmem:[#allocation2 + $0x5d0] sm:$0xff]
    %v304 = vld [vmem:[#allocation2 + $0x5d8] sm:$0xff]
    %v305 = vld [vmem:[#allocation2 + $0x5e0] sm:$0xff]
    %v306 = vld [vmem:[#allocation2 + $0x5e8] sm:$0xff]
    %v307 = vld [vmem:[#allocation2 + $0x5f0] sm:$0xff]
    %v308 = vld [vmem:[#allocation2 + $0x5f8] sm:$0xff]
    %v309 = vld [vmem:[#allocation2 + $0x600] sm:$0xff]
    %v310 = vld [vmem:[#allocation2 + $0x608] sm:$0xff]
    %v311 = vld [vmem:[#allocation2 + $0x610] sm:$0xff]
    %v312 = vld [vmem:[#allocation2 + $0x618] sm:$0xff]
    %v313 = vld [vmem:[#allocation2 + $0x620] sm:$0xff]
    %v314 = vld [vmem:[#allocation2 + $0x628] sm:$0xff]
    %v315 = vld [vmem:[#allocation2 + $0x630] sm:$0xff]
    %v316 = vld [vmem:[#allocation2 + $0x638] sm:$0xff]
    %v317 = vld [vmem:[#allocation2 + $0x640] sm:$0xff]
    %v318 = vld [vmem:[#allocation2 + $0x648] sm:$0xff]
    %v319 = vld [vmem:[#allocation2 + $0x650] sm:$0xff]
    %v320 = vld [vmem:[#allocation2 + $0x658] sm:$0xff]
    %v321 = vld [vmem:[#allocation2 + $0x660] sm:$0xff]
    %v322 = vld [vmem:[#allocation2 + $0x668] sm:$0xff]
    %v323 = vld [vmem:[#allocation2 + $0x670] sm:$0xff]
    %v324 = vld [vmem:[#allocation2 + $0x678] sm:$0xff]
    %v325 = vld [vmem:[#allocation2 + $0x680] sm:$0xff]
    %v326 = vld [vmem:[#allocation2 + $0x688] sm:$0xff]
    %v327 = vld [vmem:[#allocation2 + $0x690] sm:$0xff]
    %v328 = vld [vmem:[#allocation2 + $0x698] sm:$0xff]
    %v329 = vld [vmem:[#allocation2 + $0x6a0] sm:$0xff]
    %v330 = vld [vmem:[#allocation2 + $0x6a8] sm:$0xff]
    %v331 = vld [vmem:[#allocation2 + $0x6b0] sm:$0xff]
    %v332 = vld [vmem:[#allocation2 + $0x6b8] sm:$0xff]
    %v333 = vld [vmem:[#allocation2 + $0x6c0] sm:$0xff]
    %v334 = vld [vmem:[#allocation2 + $0x6c8] sm:$0xff]
    %v335 = vld [vmem:[#allocation2 + $0x6d0] sm:$0xff]
    %v336 = vld [vmem:[#allocation2 + $0x6d8] sm:$0xff]
    %v337 = vld [vmem:[#allocation2 + $0x6e0] sm:$0xff]
    %v338 = vld [vmem:[#allocation2 + $0x6e8] sm:$0xff]
    %v339 = vld [vmem:[#allocation2 + $0x6f0] sm:$0xff]
    %v340 = vld [vmem:[#allocation2 + $0x6f8] sm:$0xff]
    %v341 = vld [vmem:[%s2] sm:$0xf]
    %v343 = vlaneseq
    %v344 = vshrl.u32 %v343, 7
    %v345 = vsub.s32 0, %v344
    %v346 = vrot.slane %v341, %v345
    %v347 = vlaneseq
    %v348 = vshrl.u32 %v347, 7
    %v349 = vsub.s32 1, %v348
    %v350 = vrot.slane %v341, %v349
    %v351 = vlaneseq
    %v352 = vshrl.u32 %v351, 7
    %v353 = vsub.s32 2, %v352
    %v354 = vrot.slane %v341, %v353
    %v355 = vlaneseq
    %v356 = vshrl.u32 %v355, 7
    %v357 = vsub.s32 3, %v356
    %v358 = vrot.slane %v341, %v357
    %v367 = vunpack.c.l.b16 %v113
    %v368 = vunpack.c.h.b16 %v113
    %v369 = vunpack.c.l.b16 %v114
    %v370 = vunpack.c.h.b16 %v114
    %v371 = vunpack.c.l.b16 %v115
    %v372 = vunpack.c.h.b16 %v115
    %v373 = vunpack.c.l.b16 %v116
    %v374 = vpack.c.b16 %v367, %v367
    %v375 = vpack.c.b16 %v368, %v368
    %v376 = vpack.c.b16 %v369, %v369
    %v377 = vpack.c.b16 %v370, %v370
    %v378 = vpack.c.b16 %v371, %v371
    %v379 = vpack.c.b16 %v372, %v372
    %v380 = vpack.c.b16 %v373, %v373
    %v612 = vunpack.c.l.b16 %v117
    %v613 = vunpack.c.h.b16 %v117
    %v614 = vunpack.c.l.b16 %v118
    %v615 = vunpack.c.h.b16 %v118
    %v616 = vunpack.c.l.b16 %v119
    %v617 = vunpack.c.h.b16 %v119
    %v618 = vunpack.c.l.b16 %v120
    %v619 = vunpack.c.h.b16 %v120
    %v620 = vunpack.c.l.b16 %v121
    %v621 = vunpack.c.h.b16 %v121
    %v622 = vunpack.c.l.b16 %v122
    %v623 = vunpack.c.h.b16 %v122
    %v624 = vunpack.c.l.b16 %v123
    %v625 = vunpack.c.h.b16 %v123
    %v626 = vunpack.c.l.b16 %v124
    %v627 = vunpack.c.h.b16 %v124
    %v628 = vunpack.c.l.b16 %v125
    %v629 = vunpack.c.h.b16 %v125
    %v630 = vunpack.c.l.b16 %v126
    %v631 = vunpack.c.h.b16 %v126
    %v632 = vunpack.c.l.b16 %v127
    %v633 = vunpack.c.h.b16 %v127
    %v634 = vunpack.c.l.b16 %v128
    %v635 = vunpack.c.h.b16 %v128
    %v636 = vunpack.c.l.b16 %v129
    %v637 = vunpack.c.h.b16 %v129
    %v638 = vunpack.c.l.b16 %v130
    %v639 = vunpack.c.h.b16 %v130
    %v640 = vunpack.c.l.b16 %v131
    %v641 = vunpack.c.h.b16 %v131
    %v642 = vunpack.c.l.b16 %v132
    %v643 = vunpack.c.h.b16 %v132
    %v644 = vunpack.c.l.b16 %v133
    %v645 = vunpack.c.h.b16 %v133
    %v646 = vunpack.c.l.b16 %v134
    %v647 = vunpack.c.h.b16 %v134
    %v648 = vunpack.c.l.b16 %v135
    %v649 = vunpack.c.h.b16 %v135
    %v650 = vunpack.c.l.b16 %v136
    %v651 = vunpack.c.h.b16 %v136
    %v652 = vunpack.c.l.b16 %v137
    %v653 = vunpack.c.h.b16 %v137
    %v654 = vunpack.c.l.b16 %v138
    %v655 = vunpack.c.h.b16 %v138
    %v656 = vunpack.c.l.b16 %v139
    %v657 = vunpack.c.h.b16 %v139
    %v658 = vunpack.c.l.b16 %v140
    %v659 = vunpack.c.h.b16 %v140
    %v660 = vunpack.c.l.b16 %v141
    %v661 = vunpack.c.h.b16 %v141
    %v662 = vunpack.c.l.b16 %v142
    %v663 = vunpack.c.h.b16 %v142
    %v664 = vunpack.c.l.b16 %v143
    %v665 = vunpack.c.h.b16 %v143
    %v666 = vunpack.c.l.b16 %v144
    %v667 = vunpack.c.h.b16 %v144
    %v668 = vunpack.c.l.b16 %v145
    %v669 = vunpack.c.h.b16 %v145
    %v670 = vunpack.c.l.b16 %v146
    %v671 = vunpack.c.h.b16 %v146
    %v672 = vunpack.c.l.b16 %v147
    %v673 = vunpack.c.h.b16 %v147
    %v674 = vunpack.c.l.b16 %v148
    %v675 = vunpack.c.h.b16 %v148
    %v676 = vunpack.c.l.b16 %v149
    %v677 = vunpack.c.h.b16 %v149
    %v678 = vunpack.c.l.b16 %v150
    %v679 = vunpack.c.h.b16 %v150
    %v680 = vunpack.c.l.b16 %v151
    %v681 = vunpack.c.h.b16 %v151
    %v682 = vunpack.c.l.b16 %v152
    %v683 = vunpack.c.h.b16 %v152
    %v684 = vunpack.c.l.b16 %v153
    %v685 = vunpack.c.h.b16 %v153
    %v686 = vunpack.c.l.b16 %v154
    %v687 = vunpack.c.h.b16 %v154
    %v688 = vunpack.c.l.b16 %v155
    %v689 = vunpack.c.h.b16 %v155
    %v690 = vunpack.c.l.b16 %v156
    %v691 = vunpack.c.h.b16 %v156
    %v692 = vunpack.c.l.b16 %v157
    %v693 = vunpack.c.h.b16 %v157
    %v694 = vunpack.c.l.b16 %v158
    %v695 = vunpack.c.h.b16 %v158
    %v696 = vunpack.c.l.b16 %v159
    %v697 = vunpack.c.h.b16 %v159
    %v698 = vunpack.c.l.b16 %v160
    %v699 = vunpack.c.h.b16 %v160
    %v700 = vunpack.c.l.b16 %v161
    %v701 = vunpack.c.h.b16 %v161
    %v702 = vunpack.c.l.b16 %v162
    %v703 = vunpack.c.h.b16 %v162
    %v704 = vunpack.c.l.b16 %v163
    %v705 = vunpack.c.h.b16 %v163
    %v706 = vunpack.c.l.b16 %v164
    %v707 = vunpack.c.h.b16 %v164
    %v708 = vunpack.c.l.b16 %v165
    %v709 = vunpack.c.h.b16 %v165
    %v710 = vunpack.c.l.b16 %v166
    %v711 = vunpack.c.h.b16 %v166
    %v712 = vunpack.c.l.b16 %v167
    %v713 = vunpack.c.h.b16 %v167
    %v714 = vunpack.c.l.b16 %v168
    %v715 = vunpack.c.h.b16 %v168
    %v716 = vunpack.c.l.b16 %v169
    %v717 = vunpack.c.h.b16 %v169
    %v718 = vunpack.c.l.b16 %v170
    %v719 = vunpack.c.h.b16 %v170
    %v720 = vunpack.c.l.b16 %v171
    %v721 = vunpack.c.h.b16 %v171
    %v722 = vunpack.c.l.b16 %v172
    %v723 = vunpack.c.h.b16 %v172
    %v724 = vunpack.c.l.b16 %v173
    %v725 = vunpack.c.h.b16 %v173
    %v726 = vunpack.c.l.b16 %v174
    %v727 = vunpack.c.h.b16 %v174
    %v728 = vunpack.c.l.b16 %v175
    %v729 = vunpack.c.h.b16 %v175
    %v730 = vunpack.c.l.b16 %v176
    %v731 = vunpack.c.h.b16 %v176
    %v732 = vunpack.c.l.b16 %v177
    %v733 = vunpack.c.h.b16 %v177
    %v734 = vunpack.c.l.b16 %v178
    %v735 = vunpack.c.h.b16 %v178
    %v736 = vunpack.c.l.b16 %v179
    %v737 = vunpack.c.h.b16 %v179
    %v738 = vunpack.c.l.b16 %v180
    %v739 = vunpack.c.h.b16 %v180
    %v740 = vunpack.c.l.b16 %v181
    %v741 = vunpack.c.h.b16 %v181
    %v742 = vunpack.c.l.b16 %v182
    %v743 = vunpack.c.h.b16 %v182
    %v744 = vunpack.c.l.b16 %v183
    %v745 = vunpack.c.h.b16 %v183
    %v746 = vunpack.c.l.b16 %v184
    %v747 = vunpack.c.h.b16 %v184
    %v748 = vunpack.c.l.b16 %v185
    %v749 = vunpack.c.h.b16 %v185
    %v750 = vunpack.c.l.b16 %v186
    %v751 = vunpack.c.h.b16 %v186
    %v752 = vunpack.c.l.b16 %v187
    %v753 = vunpack.c.h.b16 %v187
    %v754 = vunpack.c.l.b16 %v188
    %v755 = vunpack.c.h.b16 %v188
    %v756 = vunpack.c.l.b16 %v189
    %v757 = vunpack.c.h.b16 %v189
    %v758 = vunpack.c.l.b16 %v190
    %v759 = vunpack.c.h.b16 %v190
    %v760 = vunpack.c.l.b16 %v191
    %v761 = vunpack.c.h.b16 %v191
    %v762 = vunpack.c.l.b16 %v192
    %v763 = vunpack.c.h.b16 %v192
    %v764 = vunpack.c.l.b16 %v193
    %v765 = vunpack.c.h.b16 %v193
    %v766 = vunpack.c.l.b16 %v194
    %v767 = vunpack.c.h.b16 %v194
    %v768 = vunpack.c.l.b16 %v195
    %v769 = vunpack.c.h.b16 %v195
    %v770 = vunpack.c.l.b16 %v196
    %v771 = vunpack.c.h.b16 %v196
    %v772 = vunpack.c.l.b16 %v197
    %v773 = vunpack.c.h.b16 %v197
    %v774 = vunpack.c.l.b16 %v198
    %v775 = vunpack.c.h.b16 %v198
    %v776 = vunpack.c.l.b16 %v199
    %v777 = vunpack.c.h.b16 %v199
    %v778 = vunpack.c.l.b16 %v200
    %v779 = vunpack.c.h.b16 %v200
    %v780 = vunpack.c.l.b16 %v201
    %v781 = vunpack.c.h.b16 %v201
    %v782 = vunpack.c.l.b16 %v202
    %v783 = vunpack.c.h.b16 %v202
    %v784 = vunpack.c.l.b16 %v203
    %v785 = vunpack.c.h.b16 %v203
    %v786 = vunpack.c.l.b16 %v204
    %v787 = vunpack.c.h.b16 %v204
    %v788 = vunpack.c.l.b16 %v205
    %v789 = vunpack.c.h.b16 %v205
    %v790 = vunpack.c.l.b16 %v206
    %v791 = vunpack.c.h.b16 %v206
    %v792 = vunpack.c.l.b16 %v207
    %v793 = vunpack.c.h.b16 %v207
    %v794 = vunpack.c.l.b16 %v208
    %v795 = vunpack.c.h.b16 %v208
    %v796 = vunpack.c.l.b16 %v209
    %v797 = vunpack.c.h.b16 %v209
    %v798 = vunpack.c.l.b16 %v210
    %v799 = vunpack.c.h.b16 %v210
    %v800 = vunpack.c.l.b16 %v211
    %v801 = vunpack.c.h.b16 %v211
    %v802 = vunpack.c.l.b16 %v212
    %v803 = vunpack.c.h.b16 %v212
    %v804 = vunpack.c.l.b16 %v213
    %v805 = vunpack.c.h.b16 %v213
    %v806 = vunpack.c.l.b16 %v214
    %v807 = vunpack.c.h.b16 %v214
    %v808 = vunpack.c.l.b16 %v215
    %v809 = vunpack.c.h.b16 %v215
    %v810 = vunpack.c.l.b16 %v216
    %v811 = vunpack.c.h.b16 %v216
    %v812 = vunpack.c.l.b16 %v217
    %v813 = vunpack.c.h.b16 %v217
    %v814 = vunpack.c.l.b16 %v218
    %v815 = vunpack.c.h.b16 %v218
    %v816 = vunpack.c.l.b16 %v219
    %v817 = vunpack.c.h.b16 %v219
    %v818 = vunpack.c.l.b16 %v220
    %v819 = vunpack.c.h.b16 %v220
    %v820 = vunpack.c.l.b16 %v221
    %v821 = vunpack.c.h.b16 %v221
    %v822 = vunpack.c.l.b16 %v222
    %v823 = vunpack.c.h.b16 %v222
    %v824 = vunpack.c.l.b16 %v223
    %v825 = vunpack.c.h.b16 %v223
    %v826 = vunpack.c.l.b16 %v224
    %v827 = vunpack.c.h.b16 %v224
    %v828 = vunpack.c.l.b16 %v225
    %v829 = vunpack.c.h.b16 %v225
    %v830 = vunpack.c.l.b16 %v226
    %v831 = vunpack.c.h.b16 %v226
    %v832 = vunpack.c.l.b16 %v227
    %v833 = vunpack.c.h.b16 %v227
    %v834 = vunpack.c.l.b16 %v228
    %v835 = vunpack.c.h.b16 %v228
    %v836 = vunpack.c.l.b16 %v229
    %v837 = vunpack.c.h.b16 %v229
    %v838 = vunpack.c.l.b16 %v230
    %v839 = vunpack.c.h.b16 %v230
    %v840 = vunpack.c.l.b16 %v231
    %v841 = vunpack.c.h.b16 %v231
    %v842 = vunpack.c.l.b16 %v232
    %v843 = vunpack.c.h.b16 %v232
    %v844 = vunpack.c.l.b16 %v233
    %v845 = vunpack.c.h.b16 %v233
    %v846 = vunpack.c.l.b16 %v234
    %v847 = vunpack.c.h.b16 %v234
    %v848 = vunpack.c.l.b16 %v235
    %v849 = vunpack.c.h.b16 %v235
    %v850 = vunpack.c.l.b16 %v236
    %v851 = vunpack.c.h.b16 %v236
    %v852 = vunpack.c.l.b16 %v237
    %v853 = vunpack.c.h.b16 %v237
    %v854 = vunpack.c.l.b16 %v238
    %v855 = vunpack.c.h.b16 %v238
    %v856 = vunpack.c.l.b16 %v239
    %v857 = vunpack.c.h.b16 %v239
    %v858 = vunpack.c.l.b16 %v240
    %v859 = vunpack.c.h.b16 %v240
    %v860 = vunpack.c.l.b16 %v241
    %v861 = vunpack.c.h.b16 %v241
    %v862 = vunpack.c.l.b16 %v242
    %v863 = vunpack.c.h.b16 %v242
    %v864 = vunpack.c.l.b16 %v243
    %v865 = vunpack.c.h.b16 %v243
    %v866 = vunpack.c.l.b16 %v244
    %v867 = vunpack.c.h.b16 %v244
    %v868 = vunpack.c.l.b16 %v245
    %v869 = vunpack.c.h.b16 %v245
    %v870 = vunpack.c.l.b16 %v246
    %v871 = vunpack.c.h.b16 %v246
    %v872 = vunpack.c.l.b16 %v247
    %v873 = vunpack.c.h.b16 %v247
    %v874 = vunpack.c.l.b16 %v248
    %v875 = vunpack.c.h.b16 %v248
    %v876 = vunpack.c.l.b16 %v249
    %v877 = vunpack.c.h.b16 %v249
    %v878 = vunpack.c.l.b16 %v250
    %v879 = vunpack.c.h.b16 %v250
    %v880 = vunpack.c.l.b16 %v251
    %v881 = vunpack.c.h.b16 %v251
    %v882 = vunpack.c.l.b16 %v252
    %v883 = vunpack.c.h.b16 %v252
    %v884 = vunpack.c.l.b16 %v253
    %v885 = vunpack.c.h.b16 %v253
    %v886 = vunpack.c.l.b16 %v254
    %v887 = vunpack.c.h.b16 %v254
    %v888 = vunpack.c.l.b16 %v255
    %v889 = vunpack.c.h.b16 %v255
    %v890 = vunpack.c.l.b16 %v256
    %v891 = vunpack.c.h.b16 %v256
    %v892 = vunpack.c.l.b16 %v257
    %v893 = vunpack.c.h.b16 %v257
    %v894 = vunpack.c.l.b16 %v258
    %v895 = vunpack.c.h.b16 %v258
    %v896 = vunpack.c.l.b16 %v259
    %v897 = vunpack.c.h.b16 %v259
    %v898 = vunpack.c.l.b16 %v260
    %v899 = vunpack.c.h.b16 %v260
    %v900 = vunpack.c.l.b16 %v261
    %v901 = vunpack.c.h.b16 %v261
    %v902 = vunpack.c.l.b16 %v262
    %v903 = vunpack.c.h.b16 %v262
    %v904 = vunpack.c.l.b16 %v263
    %v905 = vunpack.c.h.b16 %v263
    %v906 = vunpack.c.l.b16 %v264
    %v907 = vunpack.c.h.b16 %v264
    %v908 = vunpack.c.l.b16 %v265
    %v909 = vunpack.c.h.b16 %v265
    %v910 = vunpack.c.l.b16 %v266
    %v911 = vunpack.c.h.b16 %v266
    %v912 = vunpack.c.l.b16 %v267
    %v913 = vunpack.c.h.b16 %v267
    %v914 = vunpack.c.l.b16 %v268
    %v915 = vunpack.c.h.b16 %v268
    %v916 = vunpack.c.l.b16 %v269
    %v917 = vunpack.c.h.b16 %v269
    %v918 = vunpack.c.l.b16 %v270
    %v919 = vunpack.c.h.b16 %v270
    %v920 = vunpack.c.l.b16 %v271
    %v921 = vunpack.c.h.b16 %v271
    %v922 = vunpack.c.l.b16 %v272
    %v923 = vunpack.c.h.b16 %v272
    %v924 = vunpack.c.l.b16 %v273
    %v925 = vunpack.c.h.b16 %v273
    %v926 = vunpack.c.l.b16 %v274
    %v927 = vunpack.c.h.b16 %v274
    %v928 = vunpack.c.l.b16 %v275
    %v929 = vunpack.c.h.b16 %v275
    %v930 = vunpack.c.l.b16 %v276
    %v931 = vunpack.c.h.b16 %v276
    %v932 = vunpack.c.l.b16 %v277
    %v933 = vunpack.c.h.b16 %v277
    %v934 = vunpack.c.l.b16 %v278
    %v935 = vunpack.c.h.b16 %v278
    %v936 = vunpack.c.l.b16 %v279
    %v937 = vunpack.c.h.b16 %v279
    %v938 = vunpack.c.l.b16 %v280
    %v939 = vunpack.c.h.b16 %v280
    %v940 = vunpack.c.l.b16 %v281
    %v941 = vunpack.c.h.b16 %v281
    %v942 = vunpack.c.l.b16 %v282
    %v943 = vunpack.c.h.b16 %v282
    %v944 = vunpack.c.l.b16 %v283
    %v945 = vunpack.c.h.b16 %v283
    %v946 = vunpack.c.l.b16 %v284
    %v947 = vunpack.c.h.b16 %v284
    %v948 = vunpack.c.l.b16 %v285
    %v949 = vunpack.c.h.b16 %v285
    %v950 = vunpack.c.l.b16 %v286
    %v951 = vunpack.c.h.b16 %v286
    %v952 = vunpack.c.l.b16 %v287
    %v953 = vunpack.c.h.b16 %v287
    %v954 = vunpack.c.l.b16 %v288
    %v955 = vunpack.c.h.b16 %v288
    %v956 = vunpack.c.l.b16 %v289
    %v957 = vunpack.c.h.b16 %v289
    %v958 = vunpack.c.l.b16 %v290
    %v959 = vunpack.c.h.b16 %v290
    %v960 = vunpack.c.l.b16 %v291
    %v961 = vunpack.c.h.b16 %v291
    %v962 = vunpack.c.l.b16 %v292
    %v963 = vunpack.c.h.b16 %v292
    %v964 = vunpack.c.l.b16 %v293
    %v965 = vunpack.c.h.b16 %v293
    %v966 = vunpack.c.l.b16 %v294
    %v967 = vunpack.c.h.b16 %v294
    %v968 = vunpack.c.l.b16 %v295
    %v969 = vunpack.c.h.b16 %v295
    %v970 = vunpack.c.l.b16 %v296
    %v971 = vunpack.c.h.b16 %v296
    %v972 = vunpack.c.l.b16 %v297
    %v973 = vunpack.c.h.b16 %v297
    %v974 = vunpack.c.l.b16 %v298
    %v975 = vunpack.c.h.b16 %v298
    %v976 = vunpack.c.l.b16 %v299
    %v977 = vunpack.c.h.b16 %v299
    %v978 = vunpack.c.l.b16 %v300
    %v979 = vunpack.c.h.b16 %v300
    %v980 = vunpack.c.l.b16 %v301
    %v981 = vunpack.c.h.b16 %v301
    %v982 = vunpack.c.l.b16 %v302
    %v983 = vunpack.c.h.b16 %v302
    %v984 = vunpack.c.l.b16 %v303
    %v985 = vunpack.c.h.b16 %v303
    %v986 = vunpack.c.l.b16 %v304
    %v987 = vunpack.c.h.b16 %v304
    %v988 = vunpack.c.l.b16 %v305
    %v989 = vunpack.c.h.b16 %v305
    %v990 = vunpack.c.l.b16 %v306
    %v991 = vunpack.c.h.b16 %v306
    %v992 = vunpack.c.l.b16 %v307
    %v993 = vunpack.c.h.b16 %v307
    %v994 = vunpack.c.l.b16 %v308
    %v995 = vunpack.c.h.b16 %v308
    %v996 = vunpack.c.l.b16 %v309
    %v997 = vunpack.c.h.b16 %v309
    %v998 = vunpack.c.l.b16 %v310
    %v999 = vunpack.c.h.b16 %v310
    %v1000 = vunpack.c.l.b16 %v311
    %v1001 = vunpack.c.h.b16 %v311
    %v1002 = vunpack.c.l.b16 %v312
    %v1003 = vunpack.c.h.b16 %v312
    %v1004 = vunpack.c.l.b16 %v313
    %v1005 = vunpack.c.h.b16 %v313
    %v1006 = vunpack.c.l.b16 %v314
    %v1007 = vunpack.c.h.b16 %v314
    %v1008 = vunpack.c.l.b16 %v315
    %v1009 = vunpack.c.h.b16 %v315
    %v1010 = vunpack.c.l.b16 %v316
    %v1011 = vunpack.c.h.b16 %v316
    %v1012 = vunpack.c.l.b16 %v317
    %v1013 = vunpack.c.h.b16 %v317
    %v1014 = vunpack.c.l.b16 %v318
    %v1015 = vunpack.c.h.b16 %v318
    %v1016 = vunpack.c.l.b16 %v319
    %v1017 = vunpack.c.h.b16 %v319
    %v1018 = vunpack.c.l.b16 %v320
    %v1019 = vunpack.c.h.b16 %v320
    %v1020 = vunpack.c.l.b16 %v321
    %v1021 = vunpack.c.h.b16 %v321
    %v1022 = vunpack.c.l.b16 %v322
    %v1023 = vunpack.c.h.b16 %v322
    %v1024 = vunpack.c.l.b16 %v323
    %v1025 = vunpack.c.h.b16 %v323
    %v1026 = vunpack.c.l.b16 %v324
    %v1027 = vunpack.c.h.b16 %v324
    %v1028 = vunpack.c.l.b16 %v325
    %v1029 = vunpack.c.h.b16 %v325
    %v1030 = vunpack.c.l.b16 %v326
    %v1031 = vunpack.c.h.b16 %v326
    %v1032 = vunpack.c.l.b16 %v327
    %v1033 = vunpack.c.h.b16 %v327
    %v1034 = vunpack.c.l.b16 %v328
    %v1035 = vunpack.c.h.b16 %v328
    %v1036 = vunpack.c.l.b16 %v329
    %v1037 = vunpack.c.h.b16 %v329
    %v1038 = vunpack.c.l.b16 %v330
    %v1039 = vunpack.c.h.b16 %v330
    %v1040 = vunpack.c.l.b16 %v331
    %v1041 = vunpack.c.h.b16 %v331
    %v1042 = vunpack.c.l.b16 %v332
    %v1043 = vunpack.c.h.b16 %v332
    %v1044 = vunpack.c.l.b16 %v333
    %v1045 = vunpack.c.h.b16 %v333
    %v1046 = vunpack.c.l.b16 %v334
    %v1047 = vunpack.c.h.b16 %v334
    %v1048 = vunpack.c.l.b16 %v335
    %v1049 = vunpack.c.h.b16 %v335
    %v1050 = vunpack.c.l.b16 %v336
    %v1051 = vunpack.c.h.b16 %v336
    %v1052 = vunpack.c.l.b16 %v337
    %v1053 = vunpack.c.h.b16 %v337
    %v1054 = vunpack.c.l.b16 %v338
    %v1055 = vunpack.c.h.b16 %v338
    %v1056 = vunpack.c.l.b16 %v339
    %v1057 = vunpack.c.h.b16 %v339
    %v1058 = vunpack.c.l.b16 %v340
    %v1059 = vunpack.c.h.b16 %v340
    %v1060 = vpack.c.b16 %v616, %v612
    %v1061 = vpack.c.b16 %v617, %v613
    %v1062 = vpack.c.b16 %v618, %v614
    %v1063 = vpack.c.b16 %v619, %v615
    %v1064 = vpack.c.b16 %v624, %v620
    %v1065 = vpack.c.b16 %v625, %v621
    %v1066 = vpack.c.b16 %v626, %v622
    %v1067 = vpack.c.b16 %v627, %v623
    %v1068 = vpack.c.b16 %v632, %v628
    %v1069 = vpack.c.b16 %v633, %v629
    %v1070 = vpack.c.b16 %v634, %v630
    %v1071 = vpack.c.b16 %v635, %v631
    %v1072 = vpack.c.b16 %v640, %v636
    %v1073 = vpack.c.b16 %v641, %v637
    %v1074 = vpack.c.b16 %v642, %v638
    %v1075 = vpack.c.b16 %v643, %v639
    %v1076 = vpack.c.b16 %v648, %v644
    %v1077 = vpack.c.b16 %v649, %v645
    %v1078 = vpack.c.b16 %v650, %v646
    %v1079 = vpack.c.b16 %v651, %v647
    %v1080 = vpack.c.b16 %v656, %v652
    %v1081 = vpack.c.b16 %v657, %v653
    %v1082 = vpack.c.b16 %v658, %v654
    %v1083 = vpack.c.b16 %v659, %v655
    %v1084 = vpack.c.b16 %v664, %v660
    %v1085 = vpack.c.b16 %v665, %v661
    %v1086 = vpack.c.b16 %v666, %v662
    %v1087 = vpack.c.b16 %v667, %v663
    %v1088 = vpack.c.b16 %v672, %v668
    %v1089 = vpack.c.b16 %v673, %v669
    %v1090 = vpack.c.b16 %v674, %v670
    %v1091 = vpack.c.b16 %v675, %v671
    %v1092 = vpack.c.b16 %v680, %v676
    %v1093 = vpack.c.b16 %v681, %v677
    %v1094 = vpack.c.b16 %v682, %v678
    %v1095 = vpack.c.b16 %v683, %v679
    %v1096 = vpack.c.b16 %v688, %v684
    %v1097 = vpack.c.b16 %v689, %v685
    %v1098 = vpack.c.b16 %v690, %v686
    %v1099 = vpack.c.b16 %v691, %v687
    %v1100 = vpack.c.b16 %v696, %v692
    %v1101 = vpack.c.b16 %v697, %v693
    %v1102 = vpack.c.b16 %v698, %v694
    %v1103 = vpack.c.b16 %v699, %v695
    %v1104 = vpack.c.b16 %v704, %v700
    %v1105 = vpack.c.b16 %v705, %v701
    %v1106 = vpack.c.b16 %v706, %v702
    %v1107 = vpack.c.b16 %v707, %v703
    %v1108 = vpack.c.b16 %v712, %v708
    %v1109 = vpack.c.b16 %v713, %v709
    %v1110 = vpack.c.b16 %v714, %v710
    %v1111 = vpack.c.b16 %v715, %v711
    %v1112 = vpack.c.b16 %v720, %v716
    %v1113 = vpack.c.b16 %v721, %v717
    %v1114 = vpack.c.b16 %v722, %v718
    %v1115 = vpack.c.b16 %v723, %v719
    %v1116 = vpack.c.b16 %v728, %v724
    %v1117 = vpack.c.b16 %v729, %v725
    %v1118 = vpack.c.b16 %v730, %v726
    %v1119 = vpack.c.b16 %v731, %v727
    %v1120 = vpack.c.b16 %v736, %v732
    %v1121 = vpack.c.b16 %v737, %v733
    %v1122 = vpack.c.b16 %v738, %v734
    %v1123 = vpack.c.b16 %v739, %v735
    %v1124 = vpack.c.b16 %v744, %v740
    %v1125 = vpack.c.b16 %v745, %v741
    %v1126 = vpack.c.b16 %v746, %v742
    %v1127 = vpack.c.b16 %v747, %v743
    %v1128 = vpack.c.b16 %v752, %v748
    %v1129 = vpack.c.b16 %v753, %v749
    %v1130 = vpack.c.b16 %v754, %v750
    %v1131 = vpack.c.b16 %v755, %v751
    %v1132 = vpack.c.b16 %v760, %v756
    %v1133 = vpack.c.b16 %v761, %v757
    %v1134 = vpack.c.b16 %v762, %v758
    %v1135 = vpack.c.b16 %v763, %v759
    %v1136 = vpack.c.b16 %v768, %v764
    %v1137 = vpack.c.b16 %v769, %v765
    %v1138 = vpack.c.b16 %v770, %v766
    %v1139 = vpack.c.b16 %v771, %v767
    %v1140 = vpack.c.b16 %v776, %v772
    %v1141 = vpack.c.b16 %v777, %v773
    %v1142 = vpack.c.b16 %v778, %v774
    %v1143 = vpack.c.b16 %v779, %v775
    %v1144 = vpack.c.b16 %v784, %v780
    %v1145 = vpack.c.b16 %v785, %v781
    %v1146 = vpack.c.b16 %v786, %v782
    %v1147 = vpack.c.b16 %v787, %v783
    %v1148 = vpack.c.b16 %v792, %v788
    %v1149 = vpack.c.b16 %v793, %v789
    %v1150 = vpack.c.b16 %v794, %v790
    %v1151 = vpack.c.b16 %v795, %v791
    %v1152 = vpack.c.b16 %v800, %v796
    %v1153 = vpack.c.b16 %v801, %v797
    %v1154 = vpack.c.b16 %v802, %v798
    %v1155 = vpack.c.b16 %v803, %v799
    %v1156 = vpack.c.b16 %v808, %v804
    %v1157 = vpack.c.b16 %v809, %v805
    %v1158 = vpack.c.b16 %v810, %v806
    %v1159 = vpack.c.b16 %v811, %v807
    %v1160 = vpack.c.b16 %v816, %v812
    %v1161 = vpack.c.b16 %v817, %v813
    %v1162 = vpack.c.b16 %v818, %v814
    %v1163 = vpack.c.b16 %v819, %v815
    %v1164 = vpack.c.b16 %v824, %v820
    %v1165 = vpack.c.b16 %v825, %v821
    %v1166 = vpack.c.b16 %v826, %v822
    %v1167 = vpack.c.b16 %v827, %v823
    %v1168 = vpack.c.b16 %v832, %v828
    %v1169 = vpack.c.b16 %v833, %v829
    %v1170 = vpack.c.b16 %v834, %v830
    %v1171 = vpack.c.b16 %v835, %v831
    %v1172 = vpack.c.b16 %v840, %v836
    %v1173 = vpack.c.b16 %v841, %v837
    %v1174 = vpack.c.b16 %v842, %v838
    %v1175 = vpack.c.b16 %v843, %v839
    %v1176 = vpack.c.b16 %v848, %v844
    %v1177 = vpack.c.b16 %v849, %v845
    %v1178 = vpack.c.b16 %v850, %v846
    %v1179 = vpack.c.b16 %v851, %v847
    %v1180 = vpack.c.b16 %v856, %v852
    %v1181 = vpack.c.b16 %v857, %v853
    %v1182 = vpack.c.b16 %v858, %v854
    %v1183 = vpack.c.b16 %v859, %v855
    %v1184 = vpack.c.b16 %v864, %v860
    %v1185 = vpack.c.b16 %v865, %v861
    %v1186 = vpack.c.b16 %v866, %v862
    %v1187 = vpack.c.b16 %v867, %v863
    %v1188 = vpack.c.b16 %v872, %v868
    %v1189 = vpack.c.b16 %v873, %v869
    %v1190 = vpack.c.b16 %v874, %v870
    %v1191 = vpack.c.b16 %v875, %v871
    %v1192 = vpack.c.b16 %v880, %v876
    %v1193 = vpack.c.b16 %v881, %v877
    %v1194 = vpack.c.b16 %v882, %v878
    %v1195 = vpack.c.b16 %v883, %v879
    %v1196 = vpack.c.b16 %v888, %v884
    %v1197 = vpack.c.b16 %v889, %v885
    %v1198 = vpack.c.b16 %v890, %v886
    %v1199 = vpack.c.b16 %v891, %v887
    %v1200 = vpack.c.b16 %v896, %v892
    %v1201 = vpack.c.b16 %v897, %v893
    %v1202 = vpack.c.b16 %v898, %v894
    %v1203 = vpack.c.b16 %v899, %v895
    %v1204 = vpack.c.b16 %v904, %v900
    %v1205 = vpack.c.b16 %v905, %v901
    %v1206 = vpack.c.b16 %v906, %v902
    %v1207 = vpack.c.b16 %v907, %v903
    %v1208 = vpack.c.b16 %v912, %v908
    %v1209 = vpack.c.b16 %v913, %v909
    %v1210 = vpack.c.b16 %v914, %v910
    %v1211 = vpack.c.b16 %v915, %v911
    %v1212 = vpack.c.b16 %v920, %v916
    %v1213 = vpack.c.b16 %v921, %v917
    %v1214 = vpack.c.b16 %v922, %v918
    %v1215 = vpack.c.b16 %v923, %v919
    %v1216 = vpack.c.b16 %v928, %v924
    %v1217 = vpack.c.b16 %v929, %v925
    %v1218 = vpack.c.b16 %v930, %v926
    %v1219 = vpack.c.b16 %v931, %v927
    %v1220 = vpack.c.b16 %v936, %v932
    %v1221 = vpack.c.b16 %v937, %v933
    %v1222 = vpack.c.b16 %v938, %v934
    %v1223 = vpack.c.b16 %v939, %v935
    %v1224 = vpack.c.b16 %v944, %v940
    %v1225 = vpack.c.b16 %v945, %v941
    %v1226 = vpack.c.b16 %v946, %v942
    %v1227 = vpack.c.b16 %v947, %v943
    %v1228 = vpack.c.b16 %v952, %v948
    %v1229 = vpack.c.b16 %v953, %v949
    %v1230 = vpack.c.b16 %v954, %v950
    %v1231 = vpack.c.b16 %v955, %v951
    %v1232 = vpack.c.b16 %v960, %v956
    %v1233 = vpack.c.b16 %v961, %v957
    %v1234 = vpack.c.b16 %v962, %v958
    %v1235 = vpack.c.b16 %v963, %v959
    %v1236 = vpack.c.b16 %v968, %v964
    %v1237 = vpack.c.b16 %v969, %v965
    %v1238 = vpack.c.b16 %v970, %v966
    %v1239 = vpack.c.b16 %v971, %v967
    %v1240 = vpack.c.b16 %v976, %v972
    %v1241 = vpack.c.b16 %v977, %v973
    %v1242 = vpack.c.b16 %v978, %v974
    %v1243 = vpack.c.b16 %v979, %v975
    %v1244 = vpack.c.b16 %v984, %v980
    %v1245 = vpack.c.b16 %v985, %v981
    %v1246 = vpack.c.b16 %v986, %v982
    %v1247 = vpack.c.b16 %v987, %v983
    %v1248 = vpack.c.b16 %v992, %v988
    %v1249 = vpack.c.b16 %v993, %v989
    %v1250 = vpack.c.b16 %v994, %v990
    %v1251 = vpack.c.b16 %v995, %v991
    %v1252 = vpack.c.b16 %v1000, %v996
    %v1253 = vpack.c.b16 %v1001, %v997
    %v1254 = vpack.c.b16 %v1002, %v998
    %v1255 = vpack.c.b16 %v1003, %v999
    %v1256 = vpack.c.b16 %v1008, %v1004
    %v1257 = vpack.c.b16 %v1009, %v1005
    %v1258 = vpack.c.b16 %v1010, %v1006
    %v1259 = vpack.c.b16 %v1011, %v1007
    %v1260 = vpack.c.b16 %v1016, %v1012
    %v1261 = vpack.c.b16 %v1017, %v1013
    %v1262 = vpack.c.b16 %v1018, %v1014
    %v1263 = vpack.c.b16 %v1019, %v1015
    %v1264 = vpack.c.b16 %v1024, %v1020
    %v1265 = vpack.c.b16 %v1025, %v1021
    %v1266 = vpack.c.b16 %v1026, %v1022
    %v1267 = vpack.c.b16 %v1027, %v1023
    %v1268 = vpack.c.b16 %v1032, %v1028
    %v1269 = vpack.c.b16 %v1033, %v1029
    %v1270 = vpack.c.b16 %v1034, %v1030
    %v1271 = vpack.c.b16 %v1035, %v1031
    %v1272 = vpack.c.b16 %v1040, %v1036
    %v1273 = vpack.c.b16 %v1041, %v1037
    %v1274 = vpack.c.b16 %v1042, %v1038
    %v1275 = vpack.c.b16 %v1043, %v1039
    %v1276 = vpack.c.b16 %v1048, %v1044
    %v1277 = vpack.c.b16 %v1049, %v1045
    %v1278 = vpack.c.b16 %v1050, %v1046
    %v1279 = vpack.c.b16 %v1051, %v1047
    %v1280 = vpack.c.b16 %v1056, %v1052
    %v1281 = vpack.c.b16 %v1057, %v1053
    %v1282 = vpack.c.b16 %v1058, %v1054
    %v1283 = vpack.c.b16 %v1059, %v1055
    %1508 = vmatprep.subr.bf16.mxu0 %v1089
    %1509 = vmatpush1.bf16.msra.mxu0 %v1088
    %1510 = vmatprep.subr.bf16.mxu0 %v1085
    %1511 = vmatpush1.bf16.msra.mxu0 %v1084
    %1512 = vmatprep.subr.bf16.mxu0 %v1081
    %1513 = vmatpush1.bf16.msra.mxu0 %v1080
    %1514 = vmatprep.subr.bf16.mxu0 %v1077
    %1515 = vmatpush1.bf16.msra.mxu0 %v1076
    %1516 = vmatprep.subr.bf16.mxu0 %v1073
    %1517 = vmatpush1.bf16.msra.mxu0 %v1072
    %1518 = vmatprep.subr.bf16.mxu0 %v1069
    %1519 = vmatpush1.bf16.msra.mxu0 %v1068
    %1520 = vmatprep.subr.bf16.mxu0 %v1065
    %1521 = vmatpush1.bf16.msra.mxu0 %v1064
    %1522 = vmatprep.subr.bf16.mxu0 %v1061
    %1523 = vmatpush1.bf16.msra.mxu0 %v1060
    %1524 = vmatprep.subr.bf16.mxu0 %v1121
    %1525 = vmatpush2.bf16.msra.mxu0 %v1120
    %1526 = vmatprep.subr.bf16.mxu0 %v1117
    %1527 = vmatpush2.bf16.msra.mxu0 %v1116
    %1528 = vmatprep.subr.bf16.mxu0 %v1113
    %1529 = vmatpush2.bf16.msra.mxu0 %v1112
    %1530 = vmatprep.subr.bf16.mxu0 %v1109
    %1531 = vmatpush2.bf16.msra.mxu0 %v1108
    %1532 = vmatprep.subr.bf16.mxu0 %v1105
    %1533 = vmatpush2.bf16.msra.mxu0 %v1104
    %1534 = vmatprep.subr.bf16.mxu0 %v1101
    %1535 = vmatpush2.bf16.msra.mxu0 %v1100
    %1536 = vmatprep.subr.bf16.mxu0 %v1097
    %1537 = vmatpush2.bf16.msra.mxu0 %v1096
    %1538 = vmatprep.subr.bf16.mxu0 %v1093
    %1539 = vmatpush2.bf16.msra.mxu0 %v1092
    %1540 = vmatprep.mubr.bf16.mxu0 %v375
    %1541 = vmatmul.mubr.bf16.gmra.mxu0 %v374
    %v1542 = vpop.f32.mrf.mxu0
    %v1543 = vadd.f32 %v346, %v1542
    %v1544 = vpop.f32.mrf.mxu0
    %v1545 = vadd.f32 %v350, %v1544
    %v1546 = vpop.f32.mrf.mxu0
    %v1547 = vpop.f32.mrf.mxu0
    %1548 = vdwg.mxu0
    %1549 = vmatprep.subr.bf16.mxu0 %v1153
    %1550 = vmatpush1.bf16.msra.mxu0 %v1152
    %1551 = vmatprep.subr.bf16.mxu0 %v1149
    %1552 = vmatpush1.bf16.msra.mxu0 %v1148
    %1553 = vmatprep.subr.bf16.mxu0 %v1145
    %1554 = vmatpush1.bf16.msra.mxu0 %v1144
    %1555 = vmatprep.subr.bf16.mxu0 %v1141
    %1556 = vmatpush1.bf16.msra.mxu0 %v1140
    %1557 = vmatprep.subr.bf16.mxu0 %v1137
    %1558 = vmatpush1.bf16.msra.mxu0 %v1136
    %1559 = vmatprep.subr.bf16.mxu0 %v1133
    %1560 = vmatpush1.bf16.msra.mxu0 %v1132
    %1561 = vmatprep.subr.bf16.mxu0 %v1129
    %1562 = vmatpush1.bf16.msra.mxu0 %v1128
    %1563 = vmatprep.subr.bf16.mxu0 %v1125
    %1564 = vmatpush1.bf16.msra.mxu0 %v1124
    %1565 = vmatprep.subr.bf16.mxu0 %v1185
    %1566 = vmatpush2.bf16.msra.mxu0 %v1184
    %1567 = vmatprep.subr.bf16.mxu0 %v1181
    %1568 = vmatpush2.bf16.msra.mxu0 %v1180
    %1569 = vmatprep.subr.bf16.mxu0 %v1177
    %1570 = vmatpush2.bf16.msra.mxu0 %v1176
    %1571 = vmatprep.subr.bf16.mxu0 %v1173
    %1572 = vmatpush2.bf16.msra.mxu0 %v1172
    %1573 = vmatprep.subr.bf16.mxu0 %v1169
    %1574 = vmatpush2.bf16.msra.mxu0 %v1168
    %1575 = vmatprep.subr.bf16.mxu0 %v1165
    %1576 = vmatpush2.bf16.msra.mxu0 %v1164
    %1577 = vmatprep.subr.bf16.mxu0 %v1161
    %1578 = vmatpush2.bf16.msra.mxu0 %v1160
    %1579 = vmatprep.subr.bf16.mxu0 %v1157
    %1580 = vmatpush2.bf16.msra.mxu0 %v1156
    %1581 = vmatprep.mubr.bf16.mxu0 %v377
    %1582 = vmatmul.mubr.bf16.gmra.mxu0 %v376
    %v1583 = vpop.f32.mrf.mxu0
    %v1584 = vadd.f32 %v1543, %v1583
    %v1585 = vpop.f32.mrf.mxu0
    %v1586 = vadd.f32 %v1545, %v1585
    %v1587 = vpop.f32.mrf.mxu0
    %v1588 = vpop.f32.mrf.mxu0
    %1589 = vdwg.mxu0
    %1590 = vmatprep.subr.bf16.mxu0 %v1217
    %1591 = vmatpush1.bf16.msra.mxu0 %v1216
    %1592 = vmatprep.subr.bf16.mxu0 %v1213
    %1593 = vmatpush1.bf16.msra.mxu0 %v1212
    %1594 = vmatprep.subr.bf16.mxu0 %v1209
    %1595 = vmatpush1.bf16.msra.mxu0 %v1208
    %1596 = vmatprep.subr.bf16.mxu0 %v1205
    %1597 = vmatpush1.bf16.msra.mxu0 %v1204
    %1598 = vmatprep.subr.bf16.mxu0 %v1201
    %1599 = vmatpush1.bf16.msra.mxu0 %v1200
    %1600 = vmatprep.subr.bf16.mxu0 %v1197
    %1601 = vmatpush1.bf16.msra.mxu0 %v1196
    %1602 = vmatprep.subr.bf16.mxu0 %v1193
    %1603 = vmatpush1.bf16.msra.mxu0 %v1192
    %1604 = vmatprep.subr.bf16.mxu0 %v1189
    %1605 = vmatpush1.bf16.msra.mxu0 %v1188
    %1606 = vmatprep.subr.bf16.mxu0 %v1249
    %1607 = vmatpush2.bf16.msra.mxu0 %v1248
    %1608 = vmatprep.subr.bf16.mxu0 %v1245
    %1609 = vmatpush2.bf16.msra.mxu0 %v1244
    %1610 = vmatprep.subr.bf16.mxu0 %v1241
    %1611 = vmatpush2.bf16.msra.mxu0 %v1240
    %1612 = vmatprep.subr.bf16.mxu0 %v1237
    %1613 = vmatpush2.bf16.msra.mxu0 %v1236
    %1614 = vmatprep.subr.bf16.mxu0 %v1233
    %1615 = vmatpush2.bf16.msra.mxu0 %v1232
    %1616 = vmatprep.subr.bf16.mxu0 %v1229
    %1617 = vmatpush2.bf16.msra.mxu0 %v1228
    %1618 = vmatprep.subr.bf16.mxu0 %v1225
    %1619 = vmatpush2.bf16.msra.mxu0 %v1224
    %1620 = vmatprep.subr.bf16.mxu0 %v1221
    %1621 = vmatpush2.bf16.msra.mxu0 %v1220
    %1622 = vmatprep.mubr.bf16.mxu0 %v379
    %1623 = vmatmul.mubr.bf16.gmra.mxu0 %v378
    %v1624 = vpop.f32.mrf.mxu0
    %v1625 = vadd.f32 %v1584, %v1624
    %v1626 = vpop.f32.mrf.mxu0
    %v1627 = vadd.f32 %v1586, %v1626
    %v1628 = vpop.f32.mrf.mxu0
    %v1629 = vpop.f32.mrf.mxu0
    %1630 = vdwg.mxu0
    %1631 = vmatprep.subr.bf16.mxu0 %v1281
    %1632 = vmatpush1.bf16.msra.mxu0 %v1280
    %1633 = vmatprep.subr.bf16.mxu0 %v1277
    %1634 = vmatpush1.bf16.msra.mxu0 %v1276
    %1635 = vmatprep.subr.bf16.mxu0 %v1273
    %1636 = vmatpush1.bf16.msra.mxu0 %v1272
    %1637 = vmatprep.subr.bf16.mxu0 %v1269
    %1638 = vmatpush1.bf16.msra.mxu0 %v1268
    %1639 = vmatprep.subr.bf16.mxu0 %v1265
    %1640 = vmatpush1.bf16.msra.mxu0 %v1264
    %1641 = vmatprep.subr.bf16.mxu0 %v1261
    %1642 = vmatpush1.bf16.msra.mxu0 %v1260
    %1643 = vmatprep.subr.bf16.mxu0 %v1257
    %1644 = vmatpush1.bf16.msra.mxu0 %v1256
    %1645 = vmatprep.subr.bf16.mxu0 %v1253
    %1646 = vmatpush1.bf16.msra.mxu0 %v1252
    %1647 = vmatprep.subr.bf16.mxu0 0
    %1648 = vmatpush2.bf16.msra.mxu0 0
    %1649 = vmatprep.subr.bf16.mxu0 0
    %1650 = vmatpush2.bf16.msra.mxu0 0
    %1651 = vmatprep.subr.bf16.mxu0 0
    %1652 = vmatpush2.bf16.msra.mxu0 0
    %1653 = vmatprep.subr.bf16.mxu0 0
    %1654 = vmatpush2.bf16.msra.mxu0 0
    %1655 = vmatprep.subr.bf16.mxu0 0
    %1656 = vmatpush2.bf16.msra.mxu0 0
    %1657 = vmatprep.subr.bf16.mxu0 0
    %1658 = vmatpush2.bf16.msra.mxu0 0
    %1659 = vmatprep.subr.bf16.mxu0 0
    %1660 = vmatpush2.bf16.msra.mxu0 0
    %1661 = vmatprep.subr.bf16.mxu0 0
    %1662 = vmatpush2.bf16.msra.mxu0 0
    %1663 = vmatprep.mubr.bf16.mxu0 0
    %1664 = vmatmul.mubr.bf16.gmra.mxu0 %v380
    %v1665 = vpop.f32.mrf.mxu0
    %v1666 = vadd.f32 %v1625, %v1665
    %v1667 = vpop.f32.mrf.mxu0
    %v1668 = vadd.f32 %v1627, %v1667
    %v1669 = vpop.f32.mrf.mxu0
    %v1670 = vpop.f32.mrf.mxu0
    %1671 = vdwg.mxu0
    %1672 = vmatprep.subr.bf16.mxu0 %v1091
    %1673 = vmatpush1.bf16.msra.mxu0 %v1090
    %1674 = vmatprep.subr.bf16.mxu0 %v1087
    %1675 = vmatpush1.bf16.msra.mxu0 %v1086
    %1676 = vmatprep.subr.bf16.mxu0 %v1083
    %1677 = vmatpush1.bf16.msra.mxu0 %v1082
    %1678 = vmatprep.subr.bf16.mxu0 %v1079
    %1679 = vmatpush1.bf16.msra.mxu0 %v1078
    %1680 = vmatprep.subr.bf16.mxu0 %v1075
    %1681 = vmatpush1.bf16.msra.mxu0 %v1074
    %1682 = vmatprep.subr.bf16.mxu0 %v1071
    %1683 = vmatpush1.bf16.msra.mxu0 %v1070
    %1684 = vmatprep.subr.bf16.mxu0 %v1067
    %1685 = vmatpush1.bf16.msra.mxu0 %v1066
    %1686 = vmatprep.subr.bf16.mxu0 %v1063
    %1687 = vmatpush1.bf16.msra.mxu0 %v1062
    %1688 = vmatprep.subr.bf16.mxu0 %v1123
    %1689 = vmatpush2.bf16.msra.mxu0 %v1122
    %1690 = vmatprep.subr.bf16.mxu0 %v1119
    %1691 = vmatpush2.bf16.msra.mxu0 %v1118
    %1692 = vmatprep.subr.bf16.mxu0 %v1115
    %1693 = vmatpush2.bf16.msra.mxu0 %v1114
    %1694 = vmatprep.subr.bf16.mxu0 %v1111
    %1695 = vmatpush2.bf16.msra.mxu0 %v1110
    %1696 = vmatprep.subr.bf16.mxu0 %v1107
    %1697 = vmatpush2.bf16.msra.mxu0 %v1106
    %1698 = vmatprep.subr.bf16.mxu0 %v1103
    %1699 = vmatpush2.bf16.msra.mxu0 %v1102
    %1700 = vmatprep.subr.bf16.mxu0 %v1099
    %1701 = vmatpush2.bf16.msra.mxu0 %v1098
    %1702 = vmatprep.subr.bf16.mxu0 %v1095
    %1703 = vmatpush2.bf16.msra.mxu0 %v1094
    %1704 = vmatprep.mubr.bf16.mxu0 %v375
    %1705 = vmatmul.mubr.bf16.gmra.mxu0 %v374
    %v1706 = vpop.f32.mrf.mxu0
    %v1707 = vadd.f32 %v354, %v1706
    %v1708 = vpop.f32.mrf.mxu0
    %v1709 = vadd.f32 %v358, %v1708
    %v1710 = vpop.f32.mrf.mxu0
    %v1711 = vpop.f32.mrf.mxu0
    %1712 = vdwg.mxu0
    %1713 = vmatprep.subr.bf16.mxu0 %v1155
    %1714 = vmatpush1.bf16.msra.mxu0 %v1154
    %1715 = vmatprep.subr.bf16.mxu0 %v1151
    %1716 = vmatpush1.bf16.msra.mxu0 %v1150
    %1717 = vmatprep.subr.bf16.mxu0 %v1147
    %1718 = vmatpush1.bf16.msra.mxu0 %v1146
    %1719 = vmatprep.subr.bf16.mxu0 %v1143
    %1720 = vmatpush1.bf16.msra.mxu0 %v1142
    %1721 = vmatprep.subr.bf16.mxu0 %v1139
    %1722 = vmatpush1.bf16.msra.mxu0 %v1138
    %1723 = vmatprep.subr.bf16.mxu0 %v1135
    %1724 = vmatpush1.bf16.msra.mxu0 %v1134
    %1725 = vmatprep.subr.bf16.mxu0 %v1131
    %1726 = vmatpush1.bf16.msra.mxu0 %v1130
    %1727 = vmatprep.subr.bf16.mxu0 %v1127
    %1728 = vmatpush1.bf16.msra.mxu0 %v1126
    %1729 = vmatprep.subr.bf16.mxu0 %v1187
    %1730 = vmatpush2.bf16.msra.mxu0 %v1186
    %1731 = vmatprep.subr.bf16.mxu0 %v1183
    %1732 = vmatpush2.bf16.msra.mxu0 %v1182
    %1733 = vmatprep.subr.bf16.mxu0 %v1179
    %1734 = vmatpush2.bf16.msra.mxu0 %v1178
    %1735 = vmatprep.subr.bf16.mxu0 %v1175
    %1736 = vmatpush2.bf16.msra.mxu0 %v1174
    %1737 = vmatprep.subr.bf16.mxu0 %v1171
    %1738 = vmatpush2.bf16.msra.mxu0 %v1170
    %1739 = vmatprep.subr.bf16.mxu0 %v1167
    %1740 = vmatpush2.bf16.msra.mxu0 %v1166
    %1741 = vmatprep.subr.bf16.mxu0 %v1163
    %1742 = vmatpush2.bf16.msra.mxu0 %v1162
    %1743 = vmatprep.subr.bf16.mxu0 %v1159
    %1744 = vmatpush2.bf16.msra.mxu0 %v1158
    %1745 = vmatprep.mubr.bf16.mxu0 %v377
    %1746 = vmatmul.mubr.bf16.gmra.mxu0 %v376
    %v1747 = vpop.f32.mrf.mxu0
    %v1748 = vadd.f32 %v1707, %v1747
    %v1749 = vpop.f32.mrf.mxu0
    %v1750 = vadd.f32 %v1709, %v1749
    %v1751 = vpop.f32.mrf.mxu0
    %v1752 = vpop.f32.mrf.mxu0
    %1753 = vdwg.mxu0
    %1754 = vmatprep.subr.bf16.mxu0 %v1219
    %1755 = vmatpush1.bf16.msra.mxu0 %v1218
    %1756 = vmatprep.subr.bf16.mxu0 %v1215
    %1757 = vmatpush1.bf16.msra.mxu0 %v1214
    %1758 = vmatprep.subr.bf16.mxu0 %v1211
    %1759 = vmatpush1.bf16.msra.mxu0 %v1210
    %1760 = vmatprep.subr.bf16.mxu0 %v1207
    %1761 = vmatpush1.bf16.msra.mxu0 %v1206
    %1762 = vmatprep.subr.bf16.mxu0 %v1203
    %1763 = vmatpush1.bf16.msra.mxu0 %v1202
    %1764 = vmatprep.subr.bf16.mxu0 %v1199
    %1765 = vmatpush1.bf16.msra.mxu0 %v1198
    %1766 = vmatprep.subr.bf16.mxu0 %v1195
    %1767 = vmatpush1.bf16.msra.mxu0 %v1194
    %1768 = vmatprep.subr.bf16.mxu0 %v1191
    %1769 = vmatpush1.bf16.msra.mxu0 %v1190
    %1770 = vmatprep.subr.bf16.mxu0 %v1251
    %1771 = vmatpush2.bf16.msra.mxu0 %v1250
    %1772 = vmatprep.subr.bf16.mxu0 %v1247
    %1773 = vmatpush2.bf16.msra.mxu0 %v1246
    %1774 = vmatprep.subr.bf16.mxu0 %v1243
    %1775 = vmatpush2.bf16.msra.mxu0 %v1242
    %1776 = vmatprep.subr.bf16.mxu0 %v1239
    %1777 = vmatpush2.bf16.msra.mxu0 %v1238
    %1778 = vmatprep.subr.bf16.mxu0 %v1235
    %1779 = vmatpush2.bf16.msra.mxu0 %v1234
    %1780 = vmatprep.subr.bf16.mxu0 %v1231
    %1781 = vmatpush2.bf16.msra.mxu0 %v1230
    %1782 = vmatprep.subr.bf16.mxu0 %v1227
    %1783 = vmatpush2.bf16.msra.mxu0 %v1226
    %1784 = vmatprep.subr.bf16.mxu0 %v1223
    %1785 = vmatpush2.bf16.msra.mxu0 %v1222
    %1786 = vmatprep.mubr.bf16.mxu0 %v379
    %1787 = vmatmul.mubr.bf16.gmra.mxu0 %v378
    %v1788 = vpop.f32.mrf.mxu0
    %v1789 = vadd.f32 %v1748, %v1788
    %v1790 = vpop.f32.mrf.mxu0
    %v1791 = vadd.f32 %v1750, %v1790
    %v1792 = vpop.f32.mrf.mxu0
    %v1793 = vpop.f32.mrf.mxu0
    %1794 = vdwg.mxu0
    %1795 = vmatprep.subr.bf16.mxu0 %v1283
    %1796 = vmatpush1.bf16.msra.mxu0 %v1282
    %1797 = vmatprep.subr.bf16.mxu0 %v1279
    %1798 = vmatpush1.bf16.msra.mxu0 %v1278
    %1799 = vmatprep.subr.bf16.mxu0 %v1275
    %1800 = vmatpush1.bf16.msra.mxu0 %v1274
    %1801 = vmatprep.subr.bf16.mxu0 %v1271
    %1802 = vmatpush1.bf16.msra.mxu0 %v1270
    %1803 = vmatprep.subr.bf16.mxu0 %v1267
    %1804 = vmatpush1.bf16.msra.mxu0 %v1266
    %1805 = vmatprep.subr.bf16.mxu0 %v1263
    %1806 = vmatpush1.bf16.msra.mxu0 %v1262
    %1807 = vmatprep.subr.bf16.mxu0 %v1259
    %1808 = vmatpush1.bf16.msra.mxu0 %v1258
    %1809 = vmatprep.subr.bf16.mxu0 %v1255
    %1810 = vmatpush1.bf16.msra.mxu0 %v1254
    %1811 = vmatprep.subr.bf16.mxu0 0
    %1812 = vmatpush2.bf16.msra.mxu0 0
    %1813 = vmatprep.subr.bf16.mxu0 0
    %1814 = vmatpush2.bf16.msra.mxu0 0
    %1815 = vmatprep.subr.bf16.mxu0 0
    %1816 = vmatpush2.bf16.msra.mxu0 0
    %1817 = vmatprep.subr.bf16.mxu0 0
    %1818 = vmatpush2.bf16.msra.mxu0 0
    %1819 = vmatprep.subr.bf16.mxu0 0
    %1820 = vmatpush2.bf16.msra.mxu0 0
    %1821 = vmatprep.subr.bf16.mxu0 0
    %1822 = vmatpush2.bf16.msra.mxu0 0
    %1823 = vmatprep.subr.bf16.mxu0 0
    %1824 = vmatpush2.bf16.msra.mxu0 0
    %1825 = vmatprep.subr.bf16.mxu0 0
    %1826 = vmatpush2.bf16.msra.mxu0 0
    %1827 = vmatprep.mubr.bf16.mxu0 0
    %1828 = vmatmul.mubr.bf16.gmra.mxu0 %v380
    %v1829 = vpop.f32.mrf.mxu0
    %v1830 = vadd.f32 %v1789, %v1829
    %v1831 = vpop.f32.mrf.mxu0
    %v1832 = vadd.f32 %v1791, %v1831
    %v1833 = vpop.f32.mrf.mxu0
    %v1834 = vpop.f32.mrf.mxu0
    %1835 = vdwg.mxu0
    %v1836 = vmax.f32 %v1666, 0.0
    %v1837 = vmax.f32 %v1668, 0.0
    %v1838 = vmax.f32 %v1830, 0.0
    %v1839 = vmax.f32 %v1832, 0.0
    %v1840 = vpack.c.bf16 %v1836, %v1836
    %v1841 = vpack.c.bf16 %v1837, %v1837
    %v1842 = vpack.c.bf16 %v1838, %v1838
    %v1843 = vpack.c.bf16 %v1839, %v1839
    %v1844 = vld [vmem:[%s3] sm:$0xff]
    %v1845 = vld [vmem:[%s3 + $0x8] sm:$0xff]
    %v1846 = vld [vmem:[%s3 + $0x10] sm:$0xff]
    %v1847 = vld [vmem:[%s3 + $0x18] sm:$0xff]
    %v1848 = vld [vmem:[%s3 + $0x20] sm:$0xff]
    %v1849 = vld [vmem:[%s3 + $0x28] sm:$0xff]
    %v1850 = vld [vmem:[%s3 + $0x30] sm:$0xff]
    %v1851 = vld [vmem:[%s3 + $0x38] sm:$0xff]
    %v1852 = vld [vmem:[%s3 + $0x40] sm:$0xff]
    %v1853 = vld [vmem:[%s3 + $0x48] sm:$0xff]
    %v1854 = vld [vmem:[%s3 + $0x50] sm:$0xff]
    %v1855 = vld [vmem:[%s3 + $0x58] sm:$0xff]
    %v1856 = vld [vmem:[%s3 + $0x60] sm:$0xff]
    %v1857 = vld [vmem:[%s3 + $0x68] sm:$0xff]
    %v1858 = vld [vmem:[%s3 + $0x70] sm:$0xff]
    %v1859 = vld [vmem:[%s3 + $0x78] sm:$0xff]
    %v1860 = vld [vmem:[%s3 + $0x80] sm:$0xff]
    %v1861 = vld [vmem:[%s3 + $0x88] sm:$0xff]
    %v1862 = vld [vmem:[%s3 + $0x90] sm:$0xff]
    %v1863 = vld [vmem:[%s3 + $0x98] sm:$0xff]
    %v1864 = vld [vmem:[%s3 + $0xa0] sm:$0xff]
    %v1865 = vld [vmem:[%s3 + $0xa8] sm:$0xff]
    %v1866 = vld [vmem:[%s3 + $0xb0] sm:$0xff]
    %v1867 = vld [vmem:[%s3 + $0xb8] sm:$0xff]
    %v1868 = vld [vmem:[%s3 + $0xc0] sm:$0xff]
    %v1869 = vld [vmem:[%s3 + $0xc8] sm:$0xff]
    %v1870 = vld [vmem:[%s3 + $0xd0] sm:$0xff]
    %v1871 = vld [vmem:[%s3 + $0xd8] sm:$0xff]
    %v1872 = vld [vmem:[%s3 + $0xe0] sm:$0xff]
    %v1873 = vld [vmem:[%s3 + $0xe8] sm:$0xff]
    %v1874 = vld [vmem:[%s3 + $0xf0] sm:$0xff]
    %v1875 = vld [vmem:[%s3 + $0xf8] sm:$0xff]
    %v1876 = vld [vmem:[%s3 + $0x100] sm:$0xff]
    %v1877 = vld [vmem:[%s3 + $0x108] sm:$0xff]
    %v1878 = vld [vmem:[%s3 + $0x110] sm:$0xff]
    %v1879 = vld [vmem:[%s3 + $0x118] sm:$0xff]
    %v1880 = vld [vmem:[%s3 + $0x120] sm:$0xff]
    %v1881 = vld [vmem:[%s3 + $0x128] sm:$0xff]
    %v1882 = vld [vmem:[%s3 + $0x130] sm:$0xff]
    %v1883 = vld [vmem:[%s3 + $0x138] sm:$0xff]
    %v1884 = vld [vmem:[%s3 + $0x140] sm:$0xff]
    %v1885 = vld [vmem:[%s3 + $0x148] sm:$0xff]
    %v1886 = vld [vmem:[%s3 + $0x150] sm:$0xff]
    %v1887 = vld [vmem:[%s3 + $0x158] sm:$0xff]
    %v1888 = vld [vmem:[%s3 + $0x160] sm:$0xff]
    %v1889 = vld [vmem:[%s3 + $0x168] sm:$0xff]
    %v1890 = vld [vmem:[%s3 + $0x170] sm:$0xff]
    %v1891 = vld [vmem:[%s3 + $0x178] sm:$0xff]
    %v1892 = vld [vmem:[%s3 + $0x180] sm:$0xff]
    %v1893 = vld [vmem:[%s3 + $0x188] sm:$0xff]
    %v1894 = vld [vmem:[%s3 + $0x190] sm:$0xff]
    %v1895 = vld [vmem:[%s3 + $0x198] sm:$0xff]
    %v1896 = vld [vmem:[%s3 + $0x1a0] sm:$0xff]
    %v1897 = vld [vmem:[%s3 + $0x1a8] sm:$0xff]
    %v1898 = vld [vmem:[%s3 + $0x1b0] sm:$0xff]
    %v1899 = vld [vmem:[%s3 + $0x1b8] sm:$0xff]
    %v1900 = vld [vmem:[%s3 + $0x1c0] sm:$0xff]
    %v1901 = vld [vmem:[%s3 + $0x1c8] sm:$0xff]
    %v1902 = vld [vmem:[%s3 + $0x1d0] sm:$0xff]
    %v1903 = vld [vmem:[%s3 + $0x1d8] sm:$0xff]
    %v1904 = vld [vmem:[%s3 + $0x1e0] sm:$0xff]
    %v1905 = vld [vmem:[%s3 + $0x1e8] sm:$0xff]
    %v1906 = vld [vmem:[%s3 + $0x1f0] sm:$0xff]
    %v1907 = vld [vmem:[%s3 + $0x1f8] sm:$0xff]
    %v1908 = vld [vmem:[%s4] sm:$0x3]
    %v1910 = vlaneseq
    %v1911 = vshrl.u32 %v1910, 7
    %v1912 = vsub.s32 0, %v1911
    %v1913 = vrot.slane %v1908, %v1912
    %v1914 = vlaneseq
    %v1915 = vshrl.u32 %v1914, 7
    %v1916 = vsub.s32 1, %v1915
    %v1917 = vrot.slane %v1908, %v1916
    %v1984 = vunpack.c.l.b16 %v1844
    %v1985 = vunpack.c.h.b16 %v1844
    %v1986 = vunpack.c.l.b16 %v1845
    %v1987 = vunpack.c.h.b16 %v1845
    %v1988 = vunpack.c.l.b16 %v1846
    %v1989 = vunpack.c.h.b16 %v1846
    %v1990 = vunpack.c.l.b16 %v1847
    %v1991 = vunpack.c.h.b16 %v1847
    %v1992 = vunpack.c.l.b16 %v1848
    %v1993 = vunpack.c.h.b16 %v1848
    %v1994 = vunpack.c.l.b16 %v1849
    %v1995 = vunpack.c.h.b16 %v1849
    %v1996 = vunpack.c.l.b16 %v1850
    %v1997 = vunpack.c.h.b16 %v1850
    %v1998 = vunpack.c.l.b16 %v1851
    %v1999 = vunpack.c.h.b16 %v1851
    %v2000 = vunpack.c.l.b16 %v1852
    %v2001 = vunpack.c.h.b16 %v1852
    %v2002 = vunpack.c.l.b16 %v1853
    %v2003 = vunpack.c.h.b16 %v1853
    %v2004 = vunpack.c.l.b16 %v1854
    %v2005 = vunpack.c.h.b16 %v1854
    %v2006 = vunpack.c.l.b16 %v1855
    %v2007 = vunpack.c.h.b16 %v1855
    %v2008 = vunpack.c.l.b16 %v1856
    %v2009 = vunpack.c.h.b16 %v1856
    %v2010 = vunpack.c.l.b16 %v1857
    %v2011 = vunpack.c.h.b16 %v1857
    %v2012 = vunpack.c.l.b16 %v1858
    %v2013 = vunpack.c.h.b16 %v1858
    %v2014 = vunpack.c.l.b16 %v1859
    %v2015 = vunpack.c.h.b16 %v1859
    %v2016 = vunpack.c.l.b16 %v1860
    %v2017 = vunpack.c.h.b16 %v1860
    %v2018 = vunpack.c.l.b16 %v1861
    %v2019 = vunpack.c.h.b16 %v1861
    %v2020 = vunpack.c.l.b16 %v1862
    %v2021 = vunpack.c.h.b16 %v1862
    %v2022 = vunpack.c.l.b16 %v1863
    %v2023 = vunpack.c.h.b16 %v1863
    %v2024 = vunpack.c.l.b16 %v1864
    %v2025 = vunpack.c.h.b16 %v1864
    %v2026 = vunpack.c.l.b16 %v1865
    %v2027 = vunpack.c.h.b16 %v1865
    %v2028 = vunpack.c.l.b16 %v1866
    %v2029 = vunpack.c.h.b16 %v1866
    %v2030 = vunpack.c.l.b16 %v1867
    %v2031 = vunpack.c.h.b16 %v1867
    %v2032 = vunpack.c.l.b16 %v1868
    %v2033 = vunpack.c.h.b16 %v1868
    %v2034 = vunpack.c.l.b16 %v1869
    %v2035 = vunpack.c.h.b16 %v1869
    %v2036 = vunpack.c.l.b16 %v1870
    %v2037 = vunpack.c.h.b16 %v1870
    %v2038 = vunpack.c.l.b16 %v1871
    %v2039 = vunpack.c.h.b16 %v1871
    %v2040 = vunpack.c.l.b16 %v1872
    %v2041 = vunpack.c.h.b16 %v1872
    %v2042 = vunpack.c.l.b16 %v1873
    %v2043 = vunpack.c.h.b16 %v1873
    %v2044 = vunpack.c.l.b16 %v1874
    %v2045 = vunpack.c.h.b16 %v1874
    %v2046 = vunpack.c.l.b16 %v1875
    %v2047 = vunpack.c.h.b16 %v1875
    %v2048 = vunpack.c.l.b16 %v1876
    %v2049 = vunpack.c.h.b16 %v1876
    %v2050 = vunpack.c.l.b16 %v1877
    %v2051 = vunpack.c.h.b16 %v1877
    %v2052 = vunpack.c.l.b16 %v1878
    %v2053 = vunpack.c.h.b16 %v1878
    %v2054 = vunpack.c.l.b16 %v1879
    %v2055 = vunpack.c.h.b16 %v1879
    %v2056 = vunpack.c.l.b16 %v1880
    %v2057 = vunpack.c.h.b16 %v1880
    %v2058 = vunpack.c.l.b16 %v1881
    %v2059 = vunpack.c.h.b16 %v1881
    %v2060 = vunpack.c.l.b16 %v1882
    %v2061 = vunpack.c.h.b16 %v1882
    %v2062 = vunpack.c.l.b16 %v1883
    %v2063 = vunpack.c.h.b16 %v1883
    %v2064 = vunpack.c.l.b16 %v1884
    %v2065 = vunpack.c.h.b16 %v1884
    %v2066 = vunpack.c.l.b16 %v1885
    %v2067 = vunpack.c.h.b16 %v1885
    %v2068 = vunpack.c.l.b16 %v1886
    %v2069 = vunpack.c.h.b16 %v1886
    %v2070 = vunpack.c.l.b16 %v1887
    %v2071 = vunpack.c.h.b16 %v1887
    %v2072 = vunpack.c.l.b16 %v1888
    %v2073 = vunpack.c.h.b16 %v1888
    %v2074 = vunpack.c.l.b16 %v1889
    %v2075 = vunpack.c.h.b16 %v1889
    %v2076 = vunpack.c.l.b16 %v1890
    %v2077 = vunpack.c.h.b16 %v1890
    %v2078 = vunpack.c.l.b16 %v1891
    %v2079 = vunpack.c.h.b16 %v1891
    %v2080 = vunpack.c.l.b16 %v1892
    %v2081 = vunpack.c.h.b16 %v1892
    %v2082 = vunpack.c.l.b16 %v1893
    %v2083 = vunpack.c.h.b16 %v1893
    %v2084 = vunpack.c.l.b16 %v1894
    %v2085 = vunpack.c.h.b16 %v1894
    %v2086 = vunpack.c.l.b16 %v1895
    %v2087 = vunpack.c.h.b16 %v1895
    %v2088 = vunpack.c.l.b16 %v1896
    %v2089 = vunpack.c.h.b16 %v1896
    %v2090 = vunpack.c.l.b16 %v1897
    %v2091 = vunpack.c.h.b16 %v1897
    %v2092 = vunpack.c.l.b16 %v1898
    %v2093 = vunpack.c.h.b16 %v1898
    %v2094 = vunpack.c.l.b16 %v1899
    %v2095 = vunpack.c.h.b16 %v1899
    %v2096 = vunpack.c.l.b16 %v1900
    %v2097 = vunpack.c.h.b16 %v1900
    %v2098 = vunpack.c.l.b16 %v1901
    %v2099 = vunpack.c.h.b16 %v1901
    %v2100 = vunpack.c.l.b16 %v1902
    %v2101 = vunpack.c.h.b16 %v1902
    %v2102 = vunpack.c.l.b16 %v1903
    %v2103 = vunpack.c.h.b16 %v1903
    %v2104 = vunpack.c.l.b16 %v1904
    %v2105 = vunpack.c.h.b16 %v1904
    %v2106 = vunpack.c.l.b16 %v1905
    %v2107 = vunpack.c.h.b16 %v1905
    %v2108 = vunpack.c.l.b16 %v1906
    %v2109 = vunpack.c.h.b16 %v1906
    %v2110 = vunpack.c.l.b16 %v1907
    %v2111 = vunpack.c.h.b16 %v1907
    %v2112 = vpack.c.b16 %v1986, %v1984
    %v2113 = vpack.c.b16 %v1987, %v1985
    %v2114 = vpack.c.b16 %v1990, %v1988
    %v2115 = vpack.c.b16 %v1991, %v1989
    %v2116 = vpack.c.b16 %v1994, %v1992
    %v2117 = vpack.c.b16 %v1995, %v1993
    %v2118 = vpack.c.b16 %v1998, %v1996
    %v2119 = vpack.c.b16 %v1999, %v1997
    %v2120 = vpack.c.b16 %v2002, %v2000
    %v2121 = vpack.c.b16 %v2003, %v2001
    %v2122 = vpack.c.b16 %v2006, %v2004
    %v2123 = vpack.c.b16 %v2007, %v2005
    %v2124 = vpack.c.b16 %v2010, %v2008
    %v2125 = vpack.c.b16 %v2011, %v2009
    %v2126 = vpack.c.b16 %v2014, %v2012
    %v2127 = vpack.c.b16 %v2015, %v2013
    %v2128 = vpack.c.b16 %v2018, %v2016
    %v2129 = vpack.c.b16 %v2019, %v2017
    %v2130 = vpack.c.b16 %v2022, %v2020
    %v2131 = vpack.c.b16 %v2023, %v2021
    %v2132 = vpack.c.b16 %v2026, %v2024
    %v2133 = vpack.c.b16 %v2027, %v2025
    %v2134 = vpack.c.b16 %v2030, %v2028
    %v2135 = vpack.c.b16 %v2031, %v2029
    %v2136 = vpack.c.b16 %v2034, %v2032
    %v2137 = vpack.c.b16 %v2035, %v2033
    %v2138 = vpack.c.b16 %v2038, %v2036
    %v2139 = vpack.c.b16 %v2039, %v2037
    %v2140 = vpack.c.b16 %v2042, %v2040
    %v2141 = vpack.c.b16 %v2043, %v2041
    %v2142 = vpack.c.b16 %v2046, %v2044
    %v2143 = vpack.c.b16 %v2047, %v2045
    %v2144 = vpack.c.b16 %v2050, %v2048
    %v2145 = vpack.c.b16 %v2051, %v2049
    %v2146 = vpack.c.b16 %v2054, %v2052
    %v2147 = vpack.c.b16 %v2055, %v2053
    %v2148 = vpack.c.b16 %v2058, %v2056
    %v2149 = vpack.c.b16 %v2059, %v2057
    %v2150 = vpack.c.b16 %v2062, %v2060
    %v2151 = vpack.c.b16 %v2063, %v2061
    %v2152 = vpack.c.b16 %v2066, %v2064
    %v2153 = vpack.c.b16 %v2067, %v2065
    %v2154 = vpack.c.b16 %v2070, %v2068
    %v2155 = vpack.c.b16 %v2071, %v2069
    %v2156 = vpack.c.b16 %v2074, %v2072
    %v2157 = vpack.c.b16 %v2075, %v2073
    %v2158 = vpack.c.b16 %v2078, %v2076
    %v2159 = vpack.c.b16 %v2079, %v2077
    %v2160 = vpack.c.b16 %v2082, %v2080
    %v2161 = vpack.c.b16 %v2083, %v2081
    %v2162 = vpack.c.b16 %v2086, %v2084
    %v2163 = vpack.c.b16 %v2087, %v2085
    %v2164 = vpack.c.b16 %v2090, %v2088
    %v2165 = vpack.c.b16 %v2091, %v2089
    %v2166 = vpack.c.b16 %v2094, %v2092
    %v2167 = vpack.c.b16 %v2095, %v2093
    %v2168 = vpack.c.b16 %v2098, %v2096
    %v2169 = vpack.c.b16 %v2099, %v2097
    %v2170 = vpack.c.b16 %v2102, %v2100
    %v2171 = vpack.c.b16 %v2103, %v2101
    %v2172 = vpack.c.b16 %v2106, %v2104
    %v2173 = vpack.c.b16 %v2107, %v2105
    %v2174 = vpack.c.b16 %v2110, %v2108
    %v2175 = vpack.c.b16 %v2111, %v2109
    %2240 = vmatprep.subr.bf16.mxu0 %v2127
    %2241 = vmatpush1.bf16.msra.mxu0 %v2126
    %2242 = vmatprep.subr.bf16.mxu0 %v2125
    %2243 = vmatpush1.bf16.msra.mxu0 %v2124
    %2244 = vmatprep.subr.bf16.mxu0 %v2123
    %2245 = vmatpush1.bf16.msra.mxu0 %v2122
    %2246 = vmatprep.subr.bf16.mxu0 %v2121
    %2247 = vmatpush1.bf16.msra.mxu0 %v2120
    %2248 = vmatprep.subr.bf16.mxu0 %v2119
    %2249 = vmatpush1.bf16.msra.mxu0 %v2118
    %2250 = vmatprep.subr.bf16.mxu0 %v2117
    %2251 = vmatpush1.bf16.msra.mxu0 %v2116
    %2252 = vmatprep.subr.bf16.mxu0 %v2115
    %2253 = vmatpush1.bf16.msra.mxu0 %v2114
    %2254 = vmatprep.subr.bf16.mxu0 %v2113
    %2255 = vmatpush1.bf16.msra.mxu0 %v2112
    %2256 = vmatprep.subr.bf16.mxu0 %v2143
    %2257 = vmatpush2.bf16.msra.mxu0 %v2142
    %2258 = vmatprep.subr.bf16.mxu0 %v2141
    %2259 = vmatpush2.bf16.msra.mxu0 %v2140
    %2260 = vmatprep.subr.bf16.mxu0 %v2139
    %2261 = vmatpush2.bf16.msra.mxu0 %v2138
    %2262 = vmatprep.subr.bf16.mxu0 %v2137
    %2263 = vmatpush2.bf16.msra.mxu0 %v2136
    %2264 = vmatprep.subr.bf16.mxu0 %v2135
    %2265 = vmatpush2.bf16.msra.mxu0 %v2134
    %2266 = vmatprep.subr.bf16.mxu0 %v2133
    %2267 = vmatpush2.bf16.msra.mxu0 %v2132
    %2268 = vmatprep.subr.bf16.mxu0 %v2131
    %2269 = vmatpush2.bf16.msra.mxu0 %v2130
    %2270 = vmatprep.subr.bf16.mxu0 %v2129
    %2271 = vmatpush2.bf16.msra.mxu0 %v2128
    %2272 = vmatprep.mubr.bf16.mxu0 %v1841
    %2273 = vmatmul.mubr.bf16.gmra.mxu0 %v1840
    %v2274 = vpop.f32.mrf.mxu0
    %v2275 = vadd.f32 %v1913, %v2274
    %v2276 = vpop.f32.mrf.mxu0
    %v2277 = vadd.f32 %v1917, %v2276
    %v2278 = vpop.f32.mrf.mxu0
    %v2279 = vpop.f32.mrf.mxu0
    %2280 = vdwg.mxu0
    %2281 = vmatprep.subr.bf16.mxu0 %v2159
    %2282 = vmatpush1.bf16.msra.mxu0 %v2158
    %2283 = vmatprep.subr.bf16.mxu0 %v2157
    %2284 = vmatpush1.bf16.msra.mxu0 %v2156
    %2285 = vmatprep.subr.bf16.mxu0 %v2155
    %2286 = vmatpush1.bf16.msra.mxu0 %v2154
    %2287 = vmatprep.subr.bf16.mxu0 %v2153
    %2288 = vmatpush1.bf16.msra.mxu0 %v2152
    %2289 = vmatprep.subr.bf16.mxu0 %v2151
    %2290 = vmatpush1.bf16.msra.mxu0 %v2150
    %2291 = vmatprep.subr.bf16.mxu0 %v2149
    %2292 = vmatpush1.bf16.msra.mxu0 %v2148
    %2293 = vmatprep.subr.bf16.mxu0 %v2147
    %2294 = vmatpush1.bf16.msra.mxu0 %v2146
    %2295 = vmatprep.subr.bf16.mxu0 %v2145
    %2296 = vmatpush1.bf16.msra.mxu0 %v2144
    %2297 = vmatprep.subr.bf16.mxu0 %v2175
    %2298 = vmatpush2.bf16.msra.mxu0 %v2174
    %2299 = vmatprep.subr.bf16.mxu0 %v2173
    %2300 = vmatpush2.bf16.msra.mxu0 %v2172
    %2301 = vmatprep.subr.bf16.mxu0 %v2171
    %2302 = vmatpush2.bf16.msra.mxu0 %v2170
    %2303 = vmatprep.subr.bf16.mxu0 %v2169
    %2304 = vmatpush2.bf16.msra.mxu0 %v2168
    %2305 = vmatprep.subr.bf16.mxu0 %v2167
    %2306 = vmatpush2.bf16.msra.mxu0 %v2166
    %2307 = vmatprep.subr.bf16.mxu0 %v2165
    %2308 = vmatpush2.bf16.msra.mxu0 %v2164
    %2309 = vmatprep.subr.bf16.mxu0 %v2163
    %2310 = vmatpush2.bf16.msra.mxu0 %v2162
    %2311 = vmatprep.subr.bf16.mxu0 %v2161
    %2312 = vmatpush2.bf16.msra.mxu0 %v2160
    %2313 = vmatprep.mubr.bf16.mxu0 %v1843
    %2314 = vmatmul.mubr.bf16.gmra.mxu0 %v1842
    %v2315 = vpop.f32.mrf.mxu0
    %v2316 = vadd.f32 %v2275, %v2315
    %v2317 = vpop.f32.mrf.mxu0
    %v2318 = vadd.f32 %v2277, %v2317
    %v2319 = vpop.f32.mrf.mxu0
    %v2320 = vpop.f32.mrf.mxu0
    %2321 = vdwg.mxu0
    %v2322 = vmax.f32 %v2316, 0.0
    %v2323 = vmax.f32 %v2318, 0.0
    %v2324 = vpack.c.bf16 %v2322, %v2322
    %v2325 = vpack.c.bf16 %v2323, %v2323
    %v2326 = vld [vmem:[#allocation4] sm:$0xf]
    %v2327 = vld [vmem:[#allocation4 + $0x4] sm:$0xf]
    %v2328 = vld [vmem:[#allocation4 + $0x8] sm:$0xf]
    %v2329 = vld [vmem:[#allocation4 + $0xc] sm:$0xf]
    %v2330 = vld [vmem:[#allocation4 + $0x10] sm:$0xf]
    %v2331 = vld [vmem:[#allocation4 + $0x14] sm:$0xf]
    %v2332 = vld [vmem:[#allocation4 + $0x18] sm:$0xf]
    %v2333 = vld [vmem:[#allocation4 + $0x1c] sm:$0xf]
    %v2334 = vld [vmem:[#allocation4 + $0x20] sm:$0xf]
    %v2335 = vld [vmem:[#allocation4 + $0x24] sm:$0xf]
    %v2336 = vld [vmem:[#allocation4 + $0x28] sm:$0xf]
    %v2337 = vld [vmem:[#allocation4 + $0x2c] sm:$0xf]
    %v2338 = vld [vmem:[#allocation4 + $0x30] sm:$0xf]
    %v2339 = vld [vmem:[#allocation4 + $0x34] sm:$0xf]
    %v2340 = vld [vmem:[#allocation4 + $0x38] sm:$0xf]
    %v2341 = vld [vmem:[#allocation4 + $0x3c] sm:$0xf]
    %v2342 = vld [vmem:[#allocation4 + $0x40] sm:$0xf]
    %v2343 = vld [vmem:[#allocation4 + $0x44] sm:$0xf]
    %v2344 = vld [vmem:[#allocation4 + $0x48] sm:$0xf]
    %v2345 = vld [vmem:[#allocation4 + $0x4c] sm:$0xf]
    %v2346 = vld [vmem:[#allocation4 + $0x50] sm:$0xf]
    %v2347 = vld [vmem:[#allocation4 + $0x54] sm:$0xf]
    %v2348 = vld [vmem:[#allocation4 + $0x58] sm:$0xf]
    %v2349 = vld [vmem:[#allocation4 + $0x5c] sm:$0xf]
    %v2350 = vld [vmem:[#allocation4 + $0x60] sm:$0xf]
    %v2351 = vld [vmem:[#allocation4 + $0x64] sm:$0xf]
    %v2352 = vld [vmem:[#allocation4 + $0x68] sm:$0xf]
    %v2353 = vld [vmem:[#allocation4 + $0x6c] sm:$0xf]
    %v2354 = vld [vmem:[#allocation4 + $0x70] sm:$0xf]
    %v2355 = vld [vmem:[#allocation4 + $0x74] sm:$0xf]
    %v2356 = vld [vmem:[#allocation4 + $0x78] sm:$0xf]
    %v2357 = vld [vmem:[#allocation4 + $0x7c] sm:$0xf]
    %v2358 = vld [vmem:[%s6] sm:$0x1]
    %v2360 = vlaneseq
    %v2361 = vshrl.u32 %v2360, 7
    %v2362 = vsub.s32 0, %v2361
    %v2363 = vrot.slane %v2358, %v2362
    %v2397 = vunpack.c.l.b16 %v2326
    %v2398 = vunpack.c.l.b16 %v2327
    %v2399 = vunpack.c.l.b16 %v2328
    %v2400 = vunpack.c.l.b16 %v2329
    %v2401 = vunpack.c.l.b16 %v2330
    %v2402 = vunpack.c.l.b16 %v2331
    %v2403 = vunpack.c.l.b16 %v2332
    %v2404 = vunpack.c.l.b16 %v2333
    %v2405 = vunpack.c.l.b16 %v2334
    %v2406 = vunpack.c.l.b16 %v2335
    %v2407 = vunpack.c.l.b16 %v2336
    %v2408 = vunpack.c.l.b16 %v2337
    %v2409 = vunpack.c.l.b16 %v2338
    %v2410 = vunpack.c.l.b16 %v2339
    %v2411 = vunpack.c.l.b16 %v2340
    %v2412 = vunpack.c.l.b16 %v2341
    %v2413 = vunpack.c.l.b16 %v2342
    %v2414 = vunpack.c.l.b16 %v2343
    %v2415 = vunpack.c.l.b16 %v2344
    %v2416 = vunpack.c.l.b16 %v2345
    %v2417 = vunpack.c.l.b16 %v2346
    %v2418 = vunpack.c.l.b16 %v2347
    %v2419 = vunpack.c.l.b16 %v2348
    %v2420 = vunpack.c.l.b16 %v2349
    %v2421 = vunpack.c.l.b16 %v2350
    %v2422 = vunpack.c.l.b16 %v2351
    %v2423 = vunpack.c.l.b16 %v2352
    %v2424 = vunpack.c.l.b16 %v2353
    %v2425 = vunpack.c.l.b16 %v2354
    %v2426 = vunpack.c.l.b16 %v2355
    %v2427 = vunpack.c.l.b16 %v2356
    %v2428 = vunpack.c.l.b16 %v2357
    %v2429 = vpack.c.b16 %v2398, %v2397
    %v2430 = vpack.c.b16 %v2400, %v2399
    %v2431 = vpack.c.b16 %v2402, %v2401
    %v2432 = vpack.c.b16 %v2404, %v2403
    %v2433 = vpack.c.b16 %v2406, %v2405
    %v2434 = vpack.c.b16 %v2408, %v2407
    %v2435 = vpack.c.b16 %v2410, %v2409
    %v2436 = vpack.c.b16 %v2412, %v2411
    %v2437 = vpack.c.b16 %v2414, %v2413
    %v2438 = vpack.c.b16 %v2416, %v2415
    %v2439 = vpack.c.b16 %v2418, %v2417
    %v2440 = vpack.c.b16 %v2420, %v2419
    %v2441 = vpack.c.b16 %v2422, %v2421
    %v2442 = vpack.c.b16 %v2424, %v2423
    %v2443 = vpack.c.b16 %v2426, %v2425
    %v2444 = vpack.c.b16 %v2428, %v2427
    %2461 = vmatprep.subr.bf16.mxu0 0
    %2462 = vmatpush1.bf16.msra.mxu0 %v2436
    %2463 = vmatprep.subr.bf16.mxu0 0
    %2464 = vmatpush1.bf16.msra.mxu0 %v2435
    %2465 = vmatprep.subr.bf16.mxu0 0
    %2466 = vmatpush1.bf16.msra.mxu0 %v2434
    %2467 = vmatprep.subr.bf16.mxu0 0
    %2468 = vmatpush1.bf16.msra.mxu0 %v2433
    %2469 = vmatprep.subr.bf16.mxu0 0
    %2470 = vmatpush1.bf16.msra.mxu0 %v2432
    %2471 = vmatprep.subr.bf16.mxu0 0
    %2472 = vmatpush1.bf16.msra.mxu0 %v2431
    %2473 = vmatprep.subr.bf16.mxu0 0
    %2474 = vmatpush1.bf16.msra.mxu0 %v2430
    %2475 = vmatprep.subr.bf16.mxu0 0
    %2476 = vmatpush1.bf16.msra.mxu0 %v2429
    %2477 = vmatprep.subr.bf16.mxu0 0
    %2478 = vmatpush2.bf16.msra.mxu0 %v2444
    %2479 = vmatprep.subr.bf16.mxu0 0
    %2480 = vmatpush2.bf16.msra.mxu0 %v2443
    %2481 = vmatprep.subr.bf16.mxu0 0
    %2482 = vmatpush2.bf16.msra.mxu0 %v2442
    %2483 = vmatprep.subr.bf16.mxu0 0
    %2484 = vmatpush2.bf16.msra.mxu0 %v2441
    %2485 = vmatprep.subr.bf16.mxu0 0
    %2486 = vmatpush2.bf16.msra.mxu0 %v2440
    %2487 = vmatprep.subr.bf16.mxu0 0
    %2488 = vmatpush2.bf16.msra.mxu0 %v2439
    %2489 = vmatprep.subr.bf16.mxu0 0
    %2490 = vmatpush2.bf16.msra.mxu0 %v2438
    %2491 = vmatprep.subr.bf16.mxu0 0
    %2492 = vmatpush2.bf16.msra.mxu0 %v2437
    %2493 = vmatprep.mubr.bf16.mxu0 %v2325
    %2494 = vmatmul.mubr.bf16.gmra.mxu0 %v2324
    %v2495 = vpop.f32.mrf.mxu0
    %v2496 = vadd.f32 %v2363, %v2495
    %v2497 = vpop.f32.mrf.mxu0
    %v2498 = vpop.f32.mrf.mxu0
    %v2499 = vpop.f32.mrf.mxu0
    %2500 = vdwg.mxu0
    %v2501 = vmax.f32 %v2496, 0.0
    %v2502 = vpack.c.bf16 %v2501, %v2501
    %v2503 = vld [vmem:[#allocation6] sm:$0xff]
    %v2504 = vld [vmem:[#allocation6 + $0x8] sm:$0xff]
    %v2505 = vld [vmem:[#allocation6 + $0x10] sm:$0xff]
    %v2506 = vld [vmem:[#allocation6 + $0x18] sm:$0xff]
    %v2507 = vld [vmem:[#allocation6 + $0x20] sm:$0xff]
    %v2508 = vld [vmem:[#allocation6 + $0x28] sm:$0xff]
    %v2509 = vld [vmem:[#allocation6 + $0x30] sm:$0xff]
    %v2510 = vld [vmem:[#allocation6 + $0x38] sm:$0xff]
    %v2511 = vld [vmem:[#allocation6 + $0x40] sm:$0xff]
    %v2512 = vld [vmem:[#allocation6 + $0x48] sm:$0xff]
    %v2513 = vld [vmem:[#allocation6 + $0x50] sm:$0xff]
    %v2514 = vld [vmem:[#allocation6 + $0x58] sm:$0xff]
    %v2515 = vld [vmem:[#allocation6 + $0x60] sm:$0xff]
    %v2516 = vld [vmem:[#allocation6 + $0x68] sm:$0xff]
    %v2517 = vld [vmem:[#allocation6 + $0x70] sm:$0xff]
    %v2518 = vld [vmem:[#allocation6 + $0x78] sm:$0xff]
    %v2519 = vld [vmem:[%s8] sm:$0x3]
    %v2521 = vlaneseq
    %v2522 = vshrl.u32 %v2521, 7
    %v2523 = vsub.s32 0, %v2522
    %v2524 = vrot.slane %v2519, %v2523
    %v2525 = vlaneseq
    %v2526 = vshrl.u32 %v2525, 7
    %v2527 = vsub.s32 1, %v2526
    %v2528 = vrot.slane %v2519, %v2527
    %v2547 = vunpack.c.l.b16 %v2503
    %v2548 = vunpack.c.h.b16 %v2503
    %v2549 = vunpack.c.l.b16 %v2504
    %v2550 = vunpack.c.h.b16 %v2504
    %v2551 = vunpack.c.l.b16 %v2505
    %v2552 = vunpack.c.h.b16 %v2505
    %v2553 = vunpack.c.l.b16 %v2506
    %v2554 = vunpack.c.h.b16 %v2506
    %v2555 = vunpack.c.l.b16 %v2507
    %v2556 = vunpack.c.h.b16 %v2507
    %v2557 = vunpack.c.l.b16 %v2508
    %v2558 = vunpack.c.h.b16 %v2508
    %v2559 = vunpack.c.l.b16 %v2509
    %v2560 = vunpack.c.h.b16 %v2509
    %v2561 = vunpack.c.l.b16 %v2510
    %v2562 = vunpack.c.h.b16 %v2510
    %v2563 = vunpack.c.l.b16 %v2511
    %v2564 = vunpack.c.h.b16 %v2511
    %v2565 = vunpack.c.l.b16 %v2512
    %v2566 = vunpack.c.h.b16 %v2512
    %v2567 = vunpack.c.l.b16 %v2513
    %v2568 = vunpack.c.h.b16 %v2513
    %v2569 = vunpack.c.l.b16 %v2514
    %v2570 = vunpack.c.h.b16 %v2514
    %v2571 = vunpack.c.l.b16 %v2515
    %v2572 = vunpack.c.h.b16 %v2515
    %v2573 = vunpack.c.l.b16 %v2516
    %v2574 = vunpack.c.h.b16 %v2516
    %v2575 = vunpack.c.l.b16 %v2517
    %v2576 = vunpack.c.h.b16 %v2517
    %v2577 = vunpack.c.l.b16 %v2518
    %v2578 = vunpack.c.h.b16 %v2518
    %v2579 = vpack.c.b16 %v2549, %v2547
    %v2580 = vpack.c.b16 %v2550, %v2548
    %v2581 = vpack.c.b16 %v2553, %v2551
    %v2582 = vpack.c.b16 %v2554, %v2552
    %v2583 = vpack.c.b16 %v2557, %v2555
    %v2584 = vpack.c.b16 %v2558, %v2556
    %v2585 = vpack.c.b16 %v2561, %v2559
    %v2586 = vpack.c.b16 %v2562, %v2560
    %v2587 = vpack.c.b16 %v2565, %v2563
    %v2588 = vpack.c.b16 %v2566, %v2564
    %v2589 = vpack.c.b16 %v2569, %v2567
    %v2590 = vpack.c.b16 %v2570, %v2568
    %v2591 = vpack.c.b16 %v2573, %v2571
    %v2592 = vpack.c.b16 %v2574, %v2572
    %v2593 = vpack.c.b16 %v2577, %v2575
    %v2594 = vpack.c.b16 %v2578, %v2576
    %2611 = vmatprep.subr.bf16.mxu0 %v2594
    %2612 = vmatpush1.bf16.msra.mxu0 %v2593
    %2613 = vmatprep.subr.bf16.mxu0 %v2592
    %2614 = vmatpush1.bf16.msra.mxu0 %v2591
    %2615 = vmatprep.subr.bf16.mxu0 %v2590
    %2616 = vmatpush1.bf16.msra.mxu0 %v2589
    %2617 = vmatprep.subr.bf16.mxu0 %v2588
    %2618 = vmatpush1.bf16.msra.mxu0 %v2587
    %2619 = vmatprep.subr.bf16.mxu0 %v2586
    %2620 = vmatpush1.bf16.msra.mxu0 %v2585
    %2621 = vmatprep.subr.bf16.mxu0 %v2584
    %2622 = vmatpush1.bf16.msra.mxu0 %v2583
    %2623 = vmatprep.subr.bf16.mxu0 %v2582
    %2624 = vmatpush1.bf16.msra.mxu0 %v2581
    %2625 = vmatprep.subr.bf16.mxu0 %v2580
    %2626 = vmatpush1.bf16.msra.mxu0 %v2579
    %2627 = vmatprep.subr.bf16.mxu0 0
    %2628 = vmatpush2.bf16.msra.mxu0 0
    %2629 = vmatprep.subr.bf16.mxu0 0
    %2630 = vmatpush2.bf16.msra.mxu0 0
    %2631 = vmatprep.subr.bf16.mxu0 0
    %2632 = vmatpush2.bf16.msra.mxu0 0
    %2633 = vmatprep.subr.bf16.mxu0 0
    %2634 = vmatpush2.bf16.msra.mxu0 0
    %2635 = vmatprep.subr.bf16.mxu0 0
    %2636 = vmatpush2.bf16.msra.mxu0 0
    %2637 = vmatprep.subr.bf16.mxu0 0
    %2638 = vmatpush2.bf16.msra.mxu0 0
    %2639 = vmatprep.subr.bf16.mxu0 0
    %2640 = vmatpush2.bf16.msra.mxu0 0
    %2641 = vmatprep.subr.bf16.mxu0 0
    %2642 = vmatpush2.bf16.msra.mxu0 0
    %2643 = vmatprep.mubr.bf16.mxu0 0
    %2644 = vmatmul.mubr.bf16.gmra.mxu0 %v2502
    %v2645 = vpop.f32.mrf.mxu0
    %v2646 = vadd.f32 %v2524, %v2645
    %v2647 = vpop.f32.mrf.mxu0
    %v2648 = vadd.f32 %v2528, %v2647
    %v2649 = vpop.f32.mrf.mxu0
    %v2650 = vpop.f32.mrf.mxu0
    %2651 = vdwg.mxu0
    %v2652 = vmax.f32 %v2646, 0.0
    %v2653 = vmax.f32 %v2648, 0.0
    %v2654 = vpack.c.bf16 %v2652, %v2652
    %v2655 = vpack.c.bf16 %v2653, %v2653
    %v2656 = vld [vmem:[#allocation7] sm:$0xff]
    %v2657 = vld [vmem:[#allocation7 + $0x8] sm:$0xff]
    %v2658 = vld [vmem:[#allocation7 + $0x10] sm:$0xff]
    %v2659 = vld [vmem:[#allocation7 + $0x18] sm:$0xff]
    %v2660 = vld [vmem:[#allocation7 + $0x20] sm:$0xff]
    %v2661 = vld [vmem:[#allocation7 + $0x28] sm:$0xff]
    %v2662 = vld [vmem:[#allocation7 + $0x30] sm:$0xff]
    %v2663 = vld [vmem:[#allocation7 + $0x38] sm:$0xff]
    %v2664 = vld [vmem:[#allocation7 + $0x40] sm:$0xff]
    %v2665 = vld [vmem:[#allocation7 + $0x48] sm:$0xff]
    %v2666 = vld [vmem:[#allocation7 + $0x50] sm:$0xff]
    %v2667 = vld [vmem:[#allocation7 + $0x58] sm:$0xff]
    %v2668 = vld [vmem:[#allocation7 + $0x60] sm:$0xff]
    %v2669 = vld [vmem:[#allocation7 + $0x68] sm:$0xff]
    %v2670 = vld [vmem:[#allocation7 + $0x70] sm:$0xff]
    %v2671 = vld [vmem:[#allocation7 + $0x78] sm:$0xff]
    %v2672 = vld [vmem:[#allocation7 + $0x80] sm:$0xff]
    %v2673 = vld [vmem:[#allocation7 + $0x88] sm:$0xff]
    %v2674 = vld [vmem:[#allocation7 + $0x90] sm:$0xff]
    %v2675 = vld [vmem:[#allocation7 + $0x98] sm:$0xff]
    %v2676 = vld [vmem:[#allocation7 + $0xa0] sm:$0xff]
    %v2677 = vld [vmem:[#allocation7 + $0xa8] sm:$0xff]
    %v2678 = vld [vmem:[#allocation7 + $0xb0] sm:$0xff]
    %v2679 = vld [vmem:[#allocation7 + $0xb8] sm:$0xff]
    %v2680 = vld [vmem:[#allocation7 + $0xc0] sm:$0xff]
    %v2681 = vld [vmem:[#allocation7 + $0xc8] sm:$0xff]
    %v2682 = vld [vmem:[#allocation7 + $0xd0] sm:$0xff]
    %v2683 = vld [vmem:[#allocation7 + $0xd8] sm:$0xff]
    %v2684 = vld [vmem:[#allocation7 + $0xe0] sm:$0xff]
    %v2685 = vld [vmem:[#allocation7 + $0xe8] sm:$0xff]
    %v2686 = vld [vmem:[#allocation7 + $0xf0] sm:$0xff]
    %v2687 = vld [vmem:[#allocation7 + $0xf8] sm:$0xff]
    %v2688 = vld [vmem:[#allocation7 + $0x100] sm:$0xff]
    %v2689 = vld [vmem:[#allocation7 + $0x108] sm:$0xff]
    %v2690 = vld [vmem:[#allocation7 + $0x110] sm:$0xff]
    %v2691 = vld [vmem:[#allocation7 + $0x118] sm:$0xff]
    %v2692 = vld [vmem:[#allocation7 + $0x120] sm:$0xff]
    %v2693 = vld [vmem:[#allocation7 + $0x128] sm:$0xff]
    %v2694 = vld [vmem:[#allocation7 + $0x130] sm:$0xff]
    %v2695 = vld [vmem:[#allocation7 + $0x138] sm:$0xff]
    %v2696 = vld [vmem:[#allocation7 + $0x140] sm:$0xff]
    %v2697 = vld [vmem:[#allocation7 + $0x148] sm:$0xff]
    %v2698 = vld [vmem:[#allocation7 + $0x150] sm:$0xff]
    %v2699 = vld [vmem:[#allocation7 + $0x158] sm:$0xff]
    %v2700 = vld [vmem:[#allocation7 + $0x160] sm:$0xff]
    %v2701 = vld [vmem:[#allocation7 + $0x168] sm:$0xff]
    %v2702 = vld [vmem:[#allocation7 + $0x170] sm:$0xff]
    %v2703 = vld [vmem:[#allocation7 + $0x178] sm:$0xff]
    %v2704 = vld [vmem:[#allocation7 + $0x180] sm:$0xff]
    %v2705 = vld [vmem:[#allocation7 + $0x188] sm:$0xff]
    %v2706 = vld [vmem:[#allocation7 + $0x190] sm:$0xff]
    %v2707 = vld [vmem:[#allocation7 + $0x198] sm:$0xff]
    %v2708 = vld [vmem:[#allocation7 + $0x1a0] sm:$0xff]
    %v2709 = vld [vmem:[#allocation7 + $0x1a8] sm:$0xff]
    %v2710 = vld [vmem:[#allocation7 + $0x1b0] sm:$0xff]
    %v2711 = vld [vmem:[#allocation7 + $0x1b8] sm:$0xff]
    %v2712 = vld [vmem:[#allocation7 + $0x1c0] sm:$0xff]
    %v2713 = vld [vmem:[#allocation7 + $0x1c8] sm:$0xff]
    %v2714 = vld [vmem:[#allocation7 + $0x1d0] sm:$0xff]
    %v2715 = vld [vmem:[#allocation7 + $0x1d8] sm:$0xff]
    %v2716 = vld [vmem:[#allocation7 + $0x1e0] sm:$0xff]
    %v2717 = vld [vmem:[#allocation7 + $0x1e8] sm:$0xff]
    %v2718 = vld [vmem:[#allocation7 + $0x1f0] sm:$0xff]
    %v2719 = vld [vmem:[#allocation7 + $0x1f8] sm:$0xff]
    %v2720 = vld [vmem:[%s10] sm:$0xf]
    %v2722 = vlaneseq
    %v2723 = vshrl.u32 %v2722, 7
    %v2724 = vsub.s32 0, %v2723
    %v2725 = vrot.slane %v2720, %v2724
    %v2726 = vlaneseq
    %v2727 = vshrl.u32 %v2726, 7
    %v2728 = vsub.s32 1, %v2727
    %v2729 = vrot.slane %v2720, %v2728
    %v2730 = vlaneseq
    %v2731 = vshrl.u32 %v2730, 7
    %v2732 = vsub.s32 2, %v2731
    %v2733 = vrot.slane %v2720, %v2732
    %v2734 = vlaneseq
    %v2735 = vshrl.u32 %v2734, 7
    %v2736 = vsub.s32 3, %v2735
    %v2737 = vrot.slane %v2720, %v2736
    %v2806 = vunpack.c.l.b16 %v2656
    %v2807 = vunpack.c.h.b16 %v2656
    %v2808 = vunpack.c.l.b16 %v2657
    %v2809 = vunpack.c.h.b16 %v2657
    %v2810 = vunpack.c.l.b16 %v2658
    %v2811 = vunpack.c.h.b16 %v2658
    %v2812 = vunpack.c.l.b16 %v2659
    %v2813 = vunpack.c.h.b16 %v2659
    %v2814 = vunpack.c.l.b16 %v2660
    %v2815 = vunpack.c.h.b16 %v2660
    %v2816 = vunpack.c.l.b16 %v2661
    %v2817 = vunpack.c.h.b16 %v2661
    %v2818 = vunpack.c.l.b16 %v2662
    %v2819 = vunpack.c.h.b16 %v2662
    %v2820 = vunpack.c.l.b16 %v2663
    %v2821 = vunpack.c.h.b16 %v2663
    %v2822 = vunpack.c.l.b16 %v2664
    %v2823 = vunpack.c.h.b16 %v2664
    %v2824 = vunpack.c.l.b16 %v2665
    %v2825 = vunpack.c.h.b16 %v2665
    %v2826 = vunpack.c.l.b16 %v2666
    %v2827 = vunpack.c.h.b16 %v2666
    %v2828 = vunpack.c.l.b16 %v2667
    %v2829 = vunpack.c.h.b16 %v2667
    %v2830 = vunpack.c.l.b16 %v2668
    %v2831 = vunpack.c.h.b16 %v2668
    %v2832 = vunpack.c.l.b16 %v2669
    %v2833 = vunpack.c.h.b16 %v2669
    %v2834 = vunpack.c.l.b16 %v2670
    %v2835 = vunpack.c.h.b16 %v2670
    %v2836 = vunpack.c.l.b16 %v2671
    %v2837 = vunpack.c.h.b16 %v2671
    %v2838 = vunpack.c.l.b16 %v2672
    %v2839 = vunpack.c.h.b16 %v2672
    %v2840 = vunpack.c.l.b16 %v2673
    %v2841 = vunpack.c.h.b16 %v2673
    %v2842 = vunpack.c.l.b16 %v2674
    %v2843 = vunpack.c.h.b16 %v2674
    %v2844 = vunpack.c.l.b16 %v2675
    %v2845 = vunpack.c.h.b16 %v2675
    %v2846 = vunpack.c.l.b16 %v2676
    %v2847 = vunpack.c.h.b16 %v2676
    %v2848 = vunpack.c.l.b16 %v2677
    %v2849 = vunpack.c.h.b16 %v2677
    %v2850 = vunpack.c.l.b16 %v2678
    %v2851 = vunpack.c.h.b16 %v2678
    %v2852 = vunpack.c.l.b16 %v2679
    %v2853 = vunpack.c.h.b16 %v2679
    %v2854 = vunpack.c.l.b16 %v2680
    %v2855 = vunpack.c.h.b16 %v2680
    %v2856 = vunpack.c.l.b16 %v2681
    %v2857 = vunpack.c.h.b16 %v2681
    %v2858 = vunpack.c.l.b16 %v2682
    %v2859 = vunpack.c.h.b16 %v2682
    %v2860 = vunpack.c.l.b16 %v2683
    %v2861 = vunpack.c.h.b16 %v2683
    %v2862 = vunpack.c.l.b16 %v2684
    %v2863 = vunpack.c.h.b16 %v2684
    %v2864 = vunpack.c.l.b16 %v2685
    %v2865 = vunpack.c.h.b16 %v2685
    %v2866 = vunpack.c.l.b16 %v2686
    %v2867 = vunpack.c.h.b16 %v2686
    %v2868 = vunpack.c.l.b16 %v2687
    %v2869 = vunpack.c.h.b16 %v2687
    %v2870 = vunpack.c.l.b16 %v2688
    %v2871 = vunpack.c.h.b16 %v2688
    %v2872 = vunpack.c.l.b16 %v2689
    %v2873 = vunpack.c.h.b16 %v2689
    %v2874 = vunpack.c.l.b16 %v2690
    %v2875 = vunpack.c.h.b16 %v2690
    %v2876 = vunpack.c.l.b16 %v2691
    %v2877 = vunpack.c.h.b16 %v2691
    %v2878 = vunpack.c.l.b16 %v2692
    %v2879 = vunpack.c.h.b16 %v2692
    %v2880 = vunpack.c.l.b16 %v2693
    %v2881 = vunpack.c.h.b16 %v2693
    %v2882 = vunpack.c.l.b16 %v2694
    %v2883 = vunpack.c.h.b16 %v2694
    %v2884 = vunpack.c.l.b16 %v2695
    %v2885 = vunpack.c.h.b16 %v2695
    %v2886 = vunpack.c.l.b16 %v2696
    %v2887 = vunpack.c.h.b16 %v2696
    %v2888 = vunpack.c.l.b16 %v2697
    %v2889 = vunpack.c.h.b16 %v2697
    %v2890 = vunpack.c.l.b16 %v2698
    %v2891 = vunpack.c.h.b16 %v2698
    %v2892 = vunpack.c.l.b16 %v2699
    %v2893 = vunpack.c.h.b16 %v2699
    %v2894 = vunpack.c.l.b16 %v2700
    %v2895 = vunpack.c.h.b16 %v2700
    %v2896 = vunpack.c.l.b16 %v2701
    %v2897 = vunpack.c.h.b16 %v2701
    %v2898 = vunpack.c.l.b16 %v2702
    %v2899 = vunpack.c.h.b16 %v2702
    %v2900 = vunpack.c.l.b16 %v2703
    %v2901 = vunpack.c.h.b16 %v2703
    %v2902 = vunpack.c.l.b16 %v2704
    %v2903 = vunpack.c.h.b16 %v2704
    %v2904 = vunpack.c.l.b16 %v2705
    %v2905 = vunpack.c.h.b16 %v2705
    %v2906 = vunpack.c.l.b16 %v2706
    %v2907 = vunpack.c.h.b16 %v2706
    %v2908 = vunpack.c.l.b16 %v2707
    %v2909 = vunpack.c.h.b16 %v2707
    %v2910 = vunpack.c.l.b16 %v2708
    %v2911 = vunpack.c.h.b16 %v2708
    %v2912 = vunpack.c.l.b16 %v2709
    %v2913 = vunpack.c.h.b16 %v2709
    %v2914 = vunpack.c.l.b16 %v2710
    %v2915 = vunpack.c.h.b16 %v2710
    %v2916 = vunpack.c.l.b16 %v2711
    %v2917 = vunpack.c.h.b16 %v2711
    %v2918 = vunpack.c.l.b16 %v2712
    %v2919 = vunpack.c.h.b16 %v2712
    %v2920 = vunpack.c.l.b16 %v2713
    %v2921 = vunpack.c.h.b16 %v2713
    %v2922 = vunpack.c.l.b16 %v2714
    %v2923 = vunpack.c.h.b16 %v2714
    %v2924 = vunpack.c.l.b16 %v2715
    %v2925 = vunpack.c.h.b16 %v2715
    %v2926 = vunpack.c.l.b16 %v2716
    %v2927 = vunpack.c.h.b16 %v2716
    %v2928 = vunpack.c.l.b16 %v2717
    %v2929 = vunpack.c.h.b16 %v2717
    %v2930 = vunpack.c.l.b16 %v2718
    %v2931 = vunpack.c.h.b16 %v2718
    %v2932 = vunpack.c.l.b16 %v2719
    %v2933 = vunpack.c.h.b16 %v2719
    %v2934 = vpack.c.b16 %v2810, %v2806
    %v2935 = vpack.c.b16 %v2811, %v2807
    %v2936 = vpack.c.b16 %v2812, %v2808
    %v2937 = vpack.c.b16 %v2813, %v2809
    %v2938 = vpack.c.b16 %v2818, %v2814
    %v2939 = vpack.c.b16 %v2819, %v2815
    %v2940 = vpack.c.b16 %v2820, %v2816
    %v2941 = vpack.c.b16 %v2821, %v2817
    %v2942 = vpack.c.b16 %v2826, %v2822
    %v2943 = vpack.c.b16 %v2827, %v2823
    %v2944 = vpack.c.b16 %v2828, %v2824
    %v2945 = vpack.c.b16 %v2829, %v2825
    %v2946 = vpack.c.b16 %v2834, %v2830
    %v2947 = vpack.c.b16 %v2835, %v2831
    %v2948 = vpack.c.b16 %v2836, %v2832
    %v2949 = vpack.c.b16 %v2837, %v2833
    %v2950 = vpack.c.b16 %v2842, %v2838
    %v2951 = vpack.c.b16 %v2843, %v2839
    %v2952 = vpack.c.b16 %v2844, %v2840
    %v2953 = vpack.c.b16 %v2845, %v2841
    %v2954 = vpack.c.b16 %v2850, %v2846
    %v2955 = vpack.c.b16 %v2851, %v2847
    %v2956 = vpack.c.b16 %v2852, %v2848
    %v2957 = vpack.c.b16 %v2853, %v2849
    %v2958 = vpack.c.b16 %v2858, %v2854
    %v2959 = vpack.c.b16 %v2859, %v2855
    %v2960 = vpack.c.b16 %v2860, %v2856
    %v2961 = vpack.c.b16 %v2861, %v2857
    %v2962 = vpack.c.b16 %v2866, %v2862
    %v2963 = vpack.c.b16 %v2867, %v2863
    %v2964 = vpack.c.b16 %v2868, %v2864
    %v2965 = vpack.c.b16 %v2869, %v2865
    %v2966 = vpack.c.b16 %v2874, %v2870
    %v2967 = vpack.c.b16 %v2875, %v2871
    %v2968 = vpack.c.b16 %v2876, %v2872
    %v2969 = vpack.c.b16 %v2877, %v2873
    %v2970 = vpack.c.b16 %v2882, %v2878
    %v2971 = vpack.c.b16 %v2883, %v2879
    %v2972 = vpack.c.b16 %v2884, %v2880
    %v2973 = vpack.c.b16 %v2885, %v2881
    %v2974 = vpack.c.b16 %v2890, %v2886
    %v2975 = vpack.c.b16 %v2891, %v2887
    %v2976 = vpack.c.b16 %v2892, %v2888
    %v2977 = vpack.c.b16 %v2893, %v2889
    %v2978 = vpack.c.b16 %v2898, %v2894
    %v2979 = vpack.c.b16 %v2899, %v2895
    %v2980 = vpack.c.b16 %v2900, %v2896
    %v2981 = vpack.c.b16 %v2901, %v2897
    %v2982 = vpack.c.b16 %v2906, %v2902
    %v2983 = vpack.c.b16 %v2907, %v2903
    %v2984 = vpack.c.b16 %v2908, %v2904
    %v2985 = vpack.c.b16 %v2909, %v2905
    %v2986 = vpack.c.b16 %v2914, %v2910
    %v2987 = vpack.c.b16 %v2915, %v2911
    %v2988 = vpack.c.b16 %v2916, %v2912
    %v2989 = vpack.c.b16 %v2917, %v2913
    %v2990 = vpack.c.b16 %v2922, %v2918
    %v2991 = vpack.c.b16 %v2923, %v2919
    %v2992 = vpack.c.b16 %v2924, %v2920
    %v2993 = vpack.c.b16 %v2925, %v2921
    %v2994 = vpack.c.b16 %v2930, %v2926
    %v2995 = vpack.c.b16 %v2931, %v2927
    %v2996 = vpack.c.b16 %v2932, %v2928
    %v2997 = vpack.c.b16 %v2933, %v2929
    %3062 = vmatprep.subr.bf16.mxu0 %v2963
    %3063 = vmatpush1.bf16.msra.mxu0 %v2962
    %3064 = vmatprep.subr.bf16.mxu0 %v2959
    %3065 = vmatpush1.bf16.msra.mxu0 %v2958
    %3066 = vmatprep.subr.bf16.mxu0 %v2955
    %3067 = vmatpush1.bf16.msra.mxu0 %v2954
    %3068 = vmatprep.subr.bf16.mxu0 %v2951
    %3069 = vmatpush1.bf16.msra.mxu0 %v2950
    %3070 = vmatprep.subr.bf16.mxu0 %v2947
    %3071 = vmatpush1.bf16.msra.mxu0 %v2946
    %3072 = vmatprep.subr.bf16.mxu0 %v2943
    %3073 = vmatpush1.bf16.msra.mxu0 %v2942
    %3074 = vmatprep.subr.bf16.mxu0 %v2939
    %3075 = vmatpush1.bf16.msra.mxu0 %v2938
    %3076 = vmatprep.subr.bf16.mxu0 %v2935
    %3077 = vmatpush1.bf16.msra.mxu0 %v2934
    %3078 = vmatprep.subr.bf16.mxu0 %v2995
    %3079 = vmatpush2.bf16.msra.mxu0 %v2994
    %3080 = vmatprep.subr.bf16.mxu0 %v2991
    %3081 = vmatpush2.bf16.msra.mxu0 %v2990
    %3082 = vmatprep.subr.bf16.mxu0 %v2987
    %3083 = vmatpush2.bf16.msra.mxu0 %v2986
    %3084 = vmatprep.subr.bf16.mxu0 %v2983
    %3085 = vmatpush2.bf16.msra.mxu0 %v2982
    %3086 = vmatprep.subr.bf16.mxu0 %v2979
    %3087 = vmatpush2.bf16.msra.mxu0 %v2978
    %3088 = vmatprep.subr.bf16.mxu0 %v2975
    %3089 = vmatpush2.bf16.msra.mxu0 %v2974
    %3090 = vmatprep.subr.bf16.mxu0 %v2971
    %3091 = vmatpush2.bf16.msra.mxu0 %v2970
    %3092 = vmatprep.subr.bf16.mxu0 %v2967
    %3093 = vmatpush2.bf16.msra.mxu0 %v2966
    %3094 = vmatprep.mubr.bf16.mxu0 %v2655
    %3095 = vmatmul.mubr.bf16.gmra.mxu0 %v2654
    %v3096 = vpop.f32.mrf.mxu0
    %v3097 = vadd.f32 %v2725, %v3096
    %v3098 = vpop.f32.mrf.mxu0
    %v3099 = vadd.f32 %v2729, %v3098
    %v3100 = vpop.f32.mrf.mxu0
    %v3101 = vpop.f32.mrf.mxu0
    %3102 = vdwg.mxu0
    %3103 = vmatprep.subr.bf16.mxu0 %v2965
    %3104 = vmatpush1.bf16.msra.mxu0 %v2964
    %3105 = vmatprep.subr.bf16.mxu0 %v2961
    %3106 = vmatpush1.bf16.msra.mxu0 %v2960
    %3107 = vmatprep.subr.bf16.mxu0 %v2957
    %3108 = vmatpush1.bf16.msra.mxu0 %v2956
    %3109 = vmatprep.subr.bf16.mxu0 %v2953
    %3110 = vmatpush1.bf16.msra.mxu0 %v2952
    %3111 = vmatprep.subr.bf16.mxu0 %v2949
    %3112 = vmatpush1.bf16.msra.mxu0 %v2948
    %3113 = vmatprep.subr.bf16.mxu0 %v2945
    %3114 = vmatpush1.bf16.msra.mxu0 %v2944
    %3115 = vmatprep.subr.bf16.mxu0 %v2941
    %3116 = vmatpush1.bf16.msra.mxu0 %v2940
    %3117 = vmatprep.subr.bf16.mxu0 %v2937
    %3118 = vmatpush1.bf16.msra.mxu0 %v2936
    %3119 = vmatprep.subr.bf16.mxu0 %v2997
    %3120 = vmatpush2.bf16.msra.mxu0 %v2996
    %3121 = vmatprep.subr.bf16.mxu0 %v2993
    %3122 = vmatpush2.bf16.msra.mxu0 %v2992
    %3123 = vmatprep.subr.bf16.mxu0 %v2989
    %3124 = vmatpush2.bf16.msra.mxu0 %v2988
    %3125 = vmatprep.subr.bf16.mxu0 %v2985
    %3126 = vmatpush2.bf16.msra.mxu0 %v2984
    %3127 = vmatprep.subr.bf16.mxu0 %v2981
    %3128 = vmatpush2.bf16.msra.mxu0 %v2980
    %3129 = vmatprep.subr.bf16.mxu0 %v2977
    %3130 = vmatpush2.bf16.msra.mxu0 %v2976
    %3131 = vmatprep.subr.bf16.mxu0 %v2973
    %3132 = vmatpush2.bf16.msra.mxu0 %v2972
    %3133 = vmatprep.subr.bf16.mxu0 %v2969
    %3134 = vmatpush2.bf16.msra.mxu0 %v2968
    %3135 = vmatprep.mubr.bf16.mxu0 %v2655
    %3136 = vmatmul.mubr.bf16.gmra.mxu0 %v2654
    %v3137 = vpop.f32.mrf.mxu0
    %v3138 = vadd.f32 %v2733, %v3137
    %v3139 = vpop.f32.mrf.mxu0
    %v3140 = vadd.f32 %v2737, %v3139
    %v3141 = vpop.f32.mrf.mxu0
    %v3142 = vpop.f32.mrf.mxu0
    %3143 = vdwg.mxu0
    %v3144 = vmax.f32 %v3097, 0.0
    %v3145 = vmax.f32 %v3099, 0.0
    %v3146 = vmax.f32 %v3138, 0.0
    %v3147 = vmax.f32 %v3140, 0.0
    %v3148 = vpack.c.bf16 %v3144, %v3144
    %v3149 = vpack.c.bf16 %v3145, %v3145
    %v3150 = vpack.c.bf16 %v3146, %v3146
    %v3151 = vpack.c.bf16 %v3147, %v3147
    %v3152 = vld [vmem:[#allocation9] sm:$0xff]
    %v3153 = vld [vmem:[#allocation9 + $0x8] sm:$0xff]
    %v3154 = vld [vmem:[#allocation9 + $0x10] sm:$0xff]
    %v3155 = vld [vmem:[#allocation9 + $0x18] sm:$0xf]
    %v3156 = vld [vmem:[#allocation9 + $0x1c] sm:$0xff]
    %v3157 = vld [vmem:[#allocation9 + $0x24] sm:$0xff]
    %v3158 = vld [vmem:[#allocation9 + $0x2c] sm:$0xff]
    %v3159 = vld [vmem:[#allocation9 + $0x34] sm:$0xf]
    %v3160 = vld [vmem:[#allocation9 + $0x38] sm:$0xff]
    %v3161 = vld [vmem:[#allocation9 + $0x40] sm:$0xff]
    %v3162 = vld [vmem:[#allocation9 + $0x48] sm:$0xff]
    %v3163 = vld [vmem:[#allocation9 + $0x50] sm:$0xf]
    %v3164 = vld [vmem:[#allocation9 + $0x54] sm:$0xff]
    %v3165 = vld [vmem:[#allocation9 + $0x5c] sm:$0xff]
    %v3166 = vld [vmem:[#allocation9 + $0x64] sm:$0xff]
    %v3167 = vld [vmem:[#allocation9 + $0x6c] sm:$0xf]
    %v3168 = vld [vmem:[#allocation9 + $0x70] sm:$0xff]
    %v3169 = vld [vmem:[#allocation9 + $0x78] sm:$0xff]
    %v3170 = vld [vmem:[#allocation9 + $0x80] sm:$0xff]
    %v3171 = vld [vmem:[#allocation9 + $0x88] sm:$0xf]
    %v3172 = vld [vmem:[#allocation9 + $0x8c] sm:$0xff]
    %v3173 = vld [vmem:[#allocation9 + $0x94] sm:$0xff]
    %v3174 = vld [vmem:[#allocation9 + $0x9c] sm:$0xff]
    %v3175 = vld [vmem:[#allocation9 + $0xa4] sm:$0xf]
    %v3176 = vld [vmem:[#allocation9 + $0xa8] sm:$0xff]
    %v3177 = vld [vmem:[#allocation9 + $0xb0] sm:$0xff]
    %v3178 = vld [vmem:[#allocation9 + $0xb8] sm:$0xff]
    %v3179 = vld [vmem:[#allocation9 + $0xc0] sm:$0xf]
    %v3180 = vld [vmem:[#allocation9 + $0xc4] sm:$0xff]
    %v3181 = vld [vmem:[#allocation9 + $0xcc] sm:$0xff]
    %v3182 = vld [vmem:[#allocation9 + $0xd4] sm:$0xff]
    %v3183 = vld [vmem:[#allocation9 + $0xdc] sm:$0xf]
    %v3184 = vld [vmem:[#allocation9 + $0xe0] sm:$0xff]
    %v3185 = vld [vmem:[#allocation9 + $0xe8] sm:$0xff]
    %v3186 = vld [vmem:[#allocation9 + $0xf0] sm:$0xff]
    %v3187 = vld [vmem:[#allocation9 + $0xf8] sm:$0xf]
    %v3188 = vld [vmem:[#allocation9 + $0xfc] sm:$0xff]
    %v3189 = vld [vmem:[#allocation9 + $0x104] sm:$0xff]
    %v3190 = vld [vmem:[#allocation9 + $0x10c] sm:$0xff]
    %v3191 = vld [vmem:[#allocation9 + $0x114] sm:$0xf]
    %v3192 = vld [vmem:[#allocation9 + $0x118] sm:$0xff]
    %v3193 = vld [vmem:[#allocation9 + $0x120] sm:$0xff]
    %v3194 = vld [vmem:[#allocation9 + $0x128] sm:$0xff]
    %v3195 = vld [vmem:[#allocation9 + $0x130] sm:$0xf]
    %v3196 = vld [vmem:[#allocation9 + $0x134] sm:$0xff]
    %v3197 = vld [vmem:[#allocation9 + $0x13c] sm:$0xff]
    %v3198 = vld [vmem:[#allocation9 + $0x144] sm:$0xff]
    %v3199 = vld [vmem:[#allocation9 + $0x14c] sm:$0xf]
    %v3200 = vld [vmem:[#allocation9 + $0x150] sm:$0xff]
    %v3201 = vld [vmem:[#allocation9 + $0x158] sm:$0xff]
    %v3202 = vld [vmem:[#allocation9 + $0x160] sm:$0xff]
    %v3203 = vld [vmem:[#allocation9 + $0x168] sm:$0xf]
    %v3204 = vld [vmem:[#allocation9 + $0x16c] sm:$0xff]
    %v3205 = vld [vmem:[#allocation9 + $0x174] sm:$0xff]
    %v3206 = vld [vmem:[#allocation9 + $0x17c] sm:$0xff]
    %v3207 = vld [vmem:[#allocation9 + $0x184] sm:$0xf]
    %v3208 = vld [vmem:[#allocation9 + $0x188] sm:$0xff]
    %v3209 = vld [vmem:[#allocation9 + $0x190] sm:$0xff]
    %v3210 = vld [vmem:[#allocation9 + $0x198] sm:$0xff]
    %v3211 = vld [vmem:[#allocation9 + $0x1a0] sm:$0xf]
    %v3212 = vld [vmem:[#allocation9 + $0x1a4] sm:$0xff]
    %v3213 = vld [vmem:[#allocation9 + $0x1ac] sm:$0xff]
    %v3214 = vld [vmem:[#allocation9 + $0x1b4] sm:$0xff]
    %v3215 = vld [vmem:[#allocation9 + $0x1bc] sm:$0xf]
    %v3216 = vld [vmem:[#allocation9 + $0x1c0] sm:$0xff]
    %v3217 = vld [vmem:[#allocation9 + $0x1c8] sm:$0xff]
    %v3218 = vld [vmem:[#allocation9 + $0x1d0] sm:$0xff]
    %v3219 = vld [vmem:[#allocation9 + $0x1d8] sm:$0xf]
    %v3220 = vld [vmem:[#allocation9 + $0x1dc] sm:$0xff]
    %v3221 = vld [vmem:[#allocation9 + $0x1e4] sm:$0xff]
    %v3222 = vld [vmem:[#allocation9 + $0x1ec] sm:$0xff]
    %v3223 = vld [vmem:[#allocation9 + $0x1f4] sm:$0xf]
    %v3224 = vld [vmem:[#allocation9 + $0x1f8] sm:$0xff]
    %v3225 = vld [vmem:[#allocation9 + $0x200] sm:$0xff]
    %v3226 = vld [vmem:[#allocation9 + $0x208] sm:$0xff]
    %v3227 = vld [vmem:[#allocation9 + $0x210] sm:$0xf]
    %v3228 = vld [vmem:[#allocation9 + $0x214] sm:$0xff]
    %v3229 = vld [vmem:[#allocation9 + $0x21c] sm:$0xff]
    %v3230 = vld [vmem:[#allocation9 + $0x224] sm:$0xff]
    %v3231 = vld [vmem:[#allocation9 + $0x22c] sm:$0xf]
    %v3232 = vld [vmem:[#allocation9 + $0x230] sm:$0xff]
    %v3233 = vld [vmem:[#allocation9 + $0x238] sm:$0xff]
    %v3234 = vld [vmem:[#allocation9 + $0x240] sm:$0xff]
    %v3235 = vld [vmem:[#allocation9 + $0x248] sm:$0xf]
    %v3236 = vld [vmem:[#allocation9 + $0x24c] sm:$0xff]
    %v3237 = vld [vmem:[#allocation9 + $0x254] sm:$0xff]
    %v3238 = vld [vmem:[#allocation9 + $0x25c] sm:$0xff]
    %v3239 = vld [vmem:[#allocation9 + $0x264] sm:$0xf]
    %v3240 = vld [vmem:[#allocation9 + $0x268] sm:$0xff]
    %v3241 = vld [vmem:[#allocation9 + $0x270] sm:$0xff]
    %v3242 = vld [vmem:[#allocation9 + $0x278] sm:$0xff]
    %v3243 = vld [vmem:[#allocation9 + $0x280] sm:$0xf]
    %v3244 = vld [vmem:[#allocation9 + $0x284] sm:$0xff]
    %v3245 = vld [vmem:[#allocation9 + $0x28c] sm:$0xff]
    %v3246 = vld [vmem:[#allocation9 + $0x294] sm:$0xff]
    %v3247 = vld [vmem:[#allocation9 + $0x29c] sm:$0xf]
    %v3248 = vld [vmem:[#allocation9 + $0x2a0] sm:$0xff]
    %v3249 = vld [vmem:[#allocation9 + $0x2a8] sm:$0xff]
    %v3250 = vld [vmem:[#allocation9 + $0x2b0] sm:$0xff]
    %v3251 = vld [vmem:[#allocation9 + $0x2b8] sm:$0xf]
    %v3252 = vld [vmem:[#allocation9 + $0x2bc] sm:$0xff]
    %v3253 = vld [vmem:[#allocation9 + $0x2c4] sm:$0xff]
    %v3254 = vld [vmem:[#allocation9 + $0x2cc] sm:$0xff]
    %v3255 = vld [vmem:[#allocation9 + $0x2d4] sm:$0xf]
    %v3256 = vld [vmem:[#allocation9 + $0x2d8] sm:$0xff]
    %v3257 = vld [vmem:[#allocation9 + $0x2e0] sm:$0xff]
    %v3258 = vld [vmem:[#allocation9 + $0x2e8] sm:$0xff]
    %v3259 = vld [vmem:[#allocation9 + $0x2f0] sm:$0xf]
    %v3260 = vld [vmem:[#allocation9 + $0x2f4] sm:$0xff]
    %v3261 = vld [vmem:[#allocation9 + $0x2fc] sm:$0xff]
    %v3262 = vld [vmem:[#allocation9 + $0x304] sm:$0xff]
    %v3263 = vld [vmem:[#allocation9 + $0x30c] sm:$0xf]
    %v3264 = vld [vmem:[#allocation9 + $0x310] sm:$0xff]
    %v3265 = vld [vmem:[#allocation9 + $0x318] sm:$0xff]
    %v3266 = vld [vmem:[#allocation9 + $0x320] sm:$0xff]
    %v3267 = vld [vmem:[#allocation9 + $0x328] sm:$0xf]
    %v3268 = vld [vmem:[#allocation9 + $0x32c] sm:$0xff]
    %v3269 = vld [vmem:[#allocation9 + $0x334] sm:$0xff]
    %v3270 = vld [vmem:[#allocation9 + $0x33c] sm:$0xff]
    %v3271 = vld [vmem:[#allocation9 + $0x344] sm:$0xf]
    %v3272 = vld [vmem:[#allocation9 + $0x348] sm:$0xff]
    %v3273 = vld [vmem:[#allocation9 + $0x350] sm:$0xff]
    %v3274 = vld [vmem:[#allocation9 + $0x358] sm:$0xff]
    %v3275 = vld [vmem:[#allocation9 + $0x360] sm:$0xf]
    %v3276 = vld [vmem:[#allocation9 + $0x364] sm:$0xff]
    %v3277 = vld [vmem:[#allocation9 + $0x36c] sm:$0xff]
    %v3278 = vld [vmem:[#allocation9 + $0x374] sm:$0xff]
    %v3279 = vld [vmem:[#allocation9 + $0x37c] sm:$0xf]
    %v3280 = vld [vmem:[#allocation9 + $0x380] sm:$0xff]
    %v3281 = vld [vmem:[#allocation9 + $0x388] sm:$0xff]
    %v3282 = vld [vmem:[#allocation9 + $0x390] sm:$0xff]
    %v3283 = vld [vmem:[#allocation9 + $0x398] sm:$0xf]
    %v3284 = vld [vmem:[#allocation9 + $0x39c] sm:$0xff]
    %v3285 = vld [vmem:[#allocation9 + $0x3a4] sm:$0xff]
    %v3286 = vld [vmem:[#allocation9 + $0x3ac] sm:$0xff]
    %v3287 = vld [vmem:[#allocation9 + $0x3b4] sm:$0xf]
    %v3288 = vld [vmem:[#allocation9 + $0x3b8] sm:$0xff]
    %v3289 = vld [vmem:[#allocation9 + $0x3c0] sm:$0xff]
    %v3290 = vld [vmem:[#allocation9 + $0x3c8] sm:$0xff]
    %v3291 = vld [vmem:[#allocation9 + $0x3d0] sm:$0xf]
    %v3292 = vld [vmem:[#allocation9 + $0x3d4] sm:$0xff]
    %v3293 = vld [vmem:[#allocation9 + $0x3dc] sm:$0xff]
    %v3294 = vld [vmem:[#allocation9 + $0x3e4] sm:$0xff]
    %v3295 = vld [vmem:[#allocation9 + $0x3ec] sm:$0xf]
    %v3296 = vld [vmem:[#allocation9 + $0x3f0] sm:$0xff]
    %v3297 = vld [vmem:[#allocation9 + $0x3f8] sm:$0xff]
    %v3298 = vld [vmem:[#allocation9 + $0x400] sm:$0xff]
    %v3299 = vld [vmem:[#allocation9 + $0x408] sm:$0xf]
    %v3300 = vld [vmem:[#allocation9 + $0x40c] sm:$0xff]
    %v3301 = vld [vmem:[#allocation9 + $0x414] sm:$0xff]
    %v3302 = vld [vmem:[#allocation9 + $0x41c] sm:$0xff]
    %v3303 = vld [vmem:[#allocation9 + $0x424] sm:$0xf]
    %v3304 = vld [vmem:[#allocation9 + $0x428] sm:$0xff]
    %v3305 = vld [vmem:[#allocation9 + $0x430] sm:$0xff]
    %v3306 = vld [vmem:[#allocation9 + $0x438] sm:$0xff]
    %v3307 = vld [vmem:[#allocation9 + $0x440] sm:$0xf]
    %v3308 = vld [vmem:[#allocation9 + $0x444] sm:$0xff]
    %v3309 = vld [vmem:[#allocation9 + $0x44c] sm:$0xff]
    %v3310 = vld [vmem:[#allocation9 + $0x454] sm:$0xff]
    %v3311 = vld [vmem:[#allocation9 + $0x45c] sm:$0xf]
    %v3312 = vld [vmem:[#allocation9 + $0x460] sm:$0xff]
    %v3313 = vld [vmem:[#allocation9 + $0x468] sm:$0xff]
    %v3314 = vld [vmem:[#allocation9 + $0x470] sm:$0xff]
    %v3315 = vld [vmem:[#allocation9 + $0x478] sm:$0xf]
    %v3316 = vld [vmem:[#allocation9 + $0x47c] sm:$0xff]
    %v3317 = vld [vmem:[#allocation9 + $0x484] sm:$0xff]
    %v3318 = vld [vmem:[#allocation9 + $0x48c] sm:$0xff]
    %v3319 = vld [vmem:[#allocation9 + $0x494] sm:$0xf]
    %v3320 = vld [vmem:[#allocation9 + $0x498] sm:$0xff]
    %v3321 = vld [vmem:[#allocation9 + $0x4a0] sm:$0xff]
    %v3322 = vld [vmem:[#allocation9 + $0x4a8] sm:$0xff]
    %v3323 = vld [vmem:[#allocation9 + $0x4b0] sm:$0xf]
    %v3324 = vld [vmem:[#allocation9 + $0x4b4] sm:$0xff]
    %v3325 = vld [vmem:[#allocation9 + $0x4bc] sm:$0xff]
    %v3326 = vld [vmem:[#allocation9 + $0x4c4] sm:$0xff]
    %v3327 = vld [vmem:[#allocation9 + $0x4cc] sm:$0xf]
    %v3328 = vld [vmem:[#allocation9 + $0x4d0] sm:$0xff]
    %v3329 = vld [vmem:[#allocation9 + $0x4d8] sm:$0xff]
    %v3330 = vld [vmem:[#allocation9 + $0x4e0] sm:$0xff]
    %v3331 = vld [vmem:[#allocation9 + $0x4e8] sm:$0xf]
    %v3332 = vld [vmem:[#allocation9 + $0x4ec] sm:$0xff]
    %v3333 = vld [vmem:[#allocation9 + $0x4f4] sm:$0xff]
    %v3334 = vld [vmem:[#allocation9 + $0x4fc] sm:$0xff]
    %v3335 = vld [vmem:[#allocation9 + $0x504] sm:$0xf]
    %v3336 = vld [vmem:[#allocation9 + $0x508] sm:$0xff]
    %v3337 = vld [vmem:[#allocation9 + $0x510] sm:$0xff]
    %v3338 = vld [vmem:[#allocation9 + $0x518] sm:$0xff]
    %v3339 = vld [vmem:[#allocation9 + $0x520] sm:$0xf]
    %v3340 = vld [vmem:[#allocation9 + $0x524] sm:$0xff]
    %v3341 = vld [vmem:[#allocation9 + $0x52c] sm:$0xff]
    %v3342 = vld [vmem:[#allocation9 + $0x534] sm:$0xff]
    %v3343 = vld [vmem:[#allocation9 + $0x53c] sm:$0xf]
    %v3344 = vld [vmem:[#allocation9 + $0x540] sm:$0xff]
    %v3345 = vld [vmem:[#allocation9 + $0x548] sm:$0xff]
    %v3346 = vld [vmem:[#allocation9 + $0x550] sm:$0xff]
    %v3347 = vld [vmem:[#allocation9 + $0x558] sm:$0xf]
    %v3348 = vld [vmem:[#allocation9 + $0x55c] sm:$0xff]
    %v3349 = vld [vmem:[#allocation9 + $0x564] sm:$0xff]
    %v3350 = vld [vmem:[#allocation9 + $0x56c] sm:$0xff]
    %v3351 = vld [vmem:[#allocation9 + $0x574] sm:$0xf]
    %v3352 = vld [vmem:[#allocation9 + $0x578] sm:$0xff]
    %v3353 = vld [vmem:[#allocation9 + $0x580] sm:$0xff]
    %v3354 = vld [vmem:[#allocation9 + $0x588] sm:$0xff]
    %v3355 = vld [vmem:[#allocation9 + $0x590] sm:$0xf]
    %v3356 = vld [vmem:[#allocation9 + $0x594] sm:$0xff]
    %v3357 = vld [vmem:[#allocation9 + $0x59c] sm:$0xff]
    %v3358 = vld [vmem:[#allocation9 + $0x5a4] sm:$0xff]
    %v3359 = vld [vmem:[#allocation9 + $0x5ac] sm:$0xf]
    %v3360 = vld [vmem:[#allocation9 + $0x5b0] sm:$0xff]
    %v3361 = vld [vmem:[#allocation9 + $0x5b8] sm:$0xff]
    %v3362 = vld [vmem:[#allocation9 + $0x5c0] sm:$0xff]
    %v3363 = vld [vmem:[#allocation9 + $0x5c8] sm:$0xf]
    %v3364 = vld [vmem:[#allocation9 + $0x5cc] sm:$0xff]
    %v3365 = vld [vmem:[#allocation9 + $0x5d4] sm:$0xff]
    %v3366 = vld [vmem:[#allocation9 + $0x5dc] sm:$0xff]
    %v3367 = vld [vmem:[#allocation9 + $0x5e4] sm:$0xf]
    %v3368 = vld [vmem:[#allocation9 + $0x5e8] sm:$0xff]
    %v3369 = vld [vmem:[#allocation9 + $0x5f0] sm:$0xff]
    %v3370 = vld [vmem:[#allocation9 + $0x5f8] sm:$0xff]
    %v3371 = vld [vmem:[#allocation9 + $0x600] sm:$0xf]
    %v3372 = vld [vmem:[#allocation9 + $0x604] sm:$0xff]
    %v3373 = vld [vmem:[#allocation9 + $0x60c] sm:$0xff]
    %v3374 = vld [vmem:[#allocation9 + $0x614] sm:$0xff]
    %v3375 = vld [vmem:[#allocation9 + $0x61c] sm:$0xf]
    %v3376 = vld [vmem:[#allocation9 + $0x620] sm:$0xff]
    %v3377 = vld [vmem:[#allocation9 + $0x628] sm:$0xff]
    %v3378 = vld [vmem:[#allocation9 + $0x630] sm:$0xff]
    %v3379 = vld [vmem:[#allocation9 + $0x638] sm:$0xf]
    %v3380 = vld [vmem:[#allocation9 + $0x63c] sm:$0xff]
    %v3381 = vld [vmem:[#allocation9 + $0x644] sm:$0xff]
    %v3382 = vld [vmem:[#allocation9 + $0x64c] sm:$0xff]
    %v3383 = vld [vmem:[#allocation9 + $0x654] sm:$0xf]
    %v3384 = vld [vmem:[#allocation9 + $0x658] sm:$0xff]
    %v3385 = vld [vmem:[#allocation9 + $0x660] sm:$0xff]
    %v3386 = vld [vmem:[#allocation9 + $0x668] sm:$0xff]
    %v3387 = vld [vmem:[#allocation9 + $0x670] sm:$0xf]
    %v3388 = vld [vmem:[#allocation9 + $0x674] sm:$0xff]
    %v3389 = vld [vmem:[#allocation9 + $0x67c] sm:$0xff]
    %v3390 = vld [vmem:[#allocation9 + $0x684] sm:$0xff]
    %v3391 = vld [vmem:[#allocation9 + $0x68c] sm:$0xf]
    %v3392 = vld [vmem:[#allocation9 + $0x690] sm:$0xff]
    %v3393 = vld [vmem:[#allocation9 + $0x698] sm:$0xff]
    %v3394 = vld [vmem:[#allocation9 + $0x6a0] sm:$0xff]
    %v3395 = vld [vmem:[#allocation9 + $0x6a8] sm:$0xf]
    %v3396 = vld [vmem:[#allocation9 + $0x6ac] sm:$0xff]
    %v3397 = vld [vmem:[#allocation9 + $0x6b4] sm:$0xff]
    %v3398 = vld [vmem:[#allocation9 + $0x6bc] sm:$0xff]
    %v3399 = vld [vmem:[#allocation9 + $0x6c4] sm:$0xf]
    %v3400 = vld [vmem:[#allocation9 + $0x6c8] sm:$0xff]
    %v3401 = vld [vmem:[#allocation9 + $0x6d0] sm:$0xff]
    %v3402 = vld [vmem:[#allocation9 + $0x6d8] sm:$0xff]
    %v3403 = vld [vmem:[#allocation9 + $0x6e0] sm:$0xf]
    %v3404 = vld [vmem:[#allocation9 + $0x6e4] sm:$0xff]
    %v3405 = vld [vmem:[#allocation9 + $0x6ec] sm:$0xff]
    %v3406 = vld [vmem:[#allocation9 + $0x6f4] sm:$0xff]
    %v3407 = vld [vmem:[#allocation9 + $0x6fc] sm:$0xf]
    %v3408 = vld [vmem:[%s12] sm:$0xff]
    %v3410 = vlaneseq
    %v3411 = vshrl.u32 %v3410, 7
    %v3412 = vsub.s32 0, %v3411
    %v3413 = vrot.slane %v3408, %v3412
    %v3414 = vlaneseq
    %v3415 = vshrl.u32 %v3414, 7
    %v3416 = vsub.s32 1, %v3415
    %v3417 = vrot.slane %v3408, %v3416
    %v3418 = vlaneseq
    %v3419 = vshrl.u32 %v3418, 7
    %v3420 = vsub.s32 2, %v3419
    %v3421 = vrot.slane %v3408, %v3420
    %v3422 = vlaneseq
    %v3423 = vshrl.u32 %v3422, 7
    %v3424 = vsub.s32 3, %v3423
    %v3425 = vrot.slane %v3408, %v3424
    %v3426 = vlaneseq
    %v3427 = vshrl.u32 %v3426, 7
    %v3428 = vsub.s32 4, %v3427
    %v3429 = vrot.slane %v3408, %v3428
    %v3430 = vlaneseq
    %v3431 = vshrl.u32 %v3430, 7
    %v3432 = vsub.s32 5, %v3431
    %v3433 = vrot.slane %v3408, %v3432
    %v3434 = vlaneseq
    %v3435 = vshrl.u32 %v3434, 7
    %v3436 = vsub.s32 6, %v3435
    %v3437 = vrot.slane %v3408, %v3436
    %v3701 = vunpack.c.l.b16 %v3152
    %v3702 = vunpack.c.h.b16 %v3152
    %v3703 = vunpack.c.l.b16 %v3153
    %v3704 = vunpack.c.h.b16 %v3153
    %v3705 = vunpack.c.l.b16 %v3154
    %v3706 = vunpack.c.h.b16 %v3154
    %v3707 = vunpack.c.l.b16 %v3155
    %v3708 = vunpack.c.l.b16 %v3156
    %v3709 = vunpack.c.h.b16 %v3156
    %v3710 = vunpack.c.l.b16 %v3157
    %v3711 = vunpack.c.h.b16 %v3157
    %v3712 = vunpack.c.l.b16 %v3158
    %v3713 = vunpack.c.h.b16 %v3158
    %v3714 = vunpack.c.l.b16 %v3159
    %v3715 = vunpack.c.l.b16 %v3160
    %v3716 = vunpack.c.h.b16 %v3160
    %v3717 = vunpack.c.l.b16 %v3161
    %v3718 = vunpack.c.h.b16 %v3161
    %v3719 = vunpack.c.l.b16 %v3162
    %v3720 = vunpack.c.h.b16 %v3162
    %v3721 = vunpack.c.l.b16 %v3163
    %v3722 = vunpack.c.l.b16 %v3164
    %v3723 = vunpack.c.h.b16 %v3164
    %v3724 = vunpack.c.l.b16 %v3165
    %v3725 = vunpack.c.h.b16 %v3165
    %v3726 = vunpack.c.l.b16 %v3166
    %v3727 = vunpack.c.h.b16 %v3166
    %v3728 = vunpack.c.l.b16 %v3167
    %v3729 = vunpack.c.l.b16 %v3168
    %v3730 = vunpack.c.h.b16 %v3168
    %v3731 = vunpack.c.l.b16 %v3169
    %v3732 = vunpack.c.h.b16 %v3169
    %v3733 = vunpack.c.l.b16 %v3170
    %v3734 = vunpack.c.h.b16 %v3170
    %v3735 = vunpack.c.l.b16 %v3171
    %v3736 = vunpack.c.l.b16 %v3172
    %v3737 = vunpack.c.h.b16 %v3172
    %v3738 = vunpack.c.l.b16 %v3173
    %v3739 = vunpack.c.h.b16 %v3173
    %v3740 = vunpack.c.l.b16 %v3174
    %v3741 = vunpack.c.h.b16 %v3174
    %v3742 = vunpack.c.l.b16 %v3175
    %v3743 = vunpack.c.l.b16 %v3176
    %v3744 = vunpack.c.h.b16 %v3176
    %v3745 = vunpack.c.l.b16 %v3177
    %v3746 = vunpack.c.h.b16 %v3177
    %v3747 = vunpack.c.l.b16 %v3178
    %v3748 = vunpack.c.h.b16 %v3178
    %v3749 = vunpack.c.l.b16 %v3179
    %v3750 = vunpack.c.l.b16 %v3180
    %v3751 = vunpack.c.h.b16 %v3180
    %v3752 = vunpack.c.l.b16 %v3181
    %v3753 = vunpack.c.h.b16 %v3181
    %v3754 = vunpack.c.l.b16 %v3182
    %v3755 = vunpack.c.h.b16 %v3182
    %v3756 = vunpack.c.l.b16 %v3183
    %v3757 = vunpack.c.l.b16 %v3184
    %v3758 = vunpack.c.h.b16 %v3184
    %v3759 = vunpack.c.l.b16 %v3185
    %v3760 = vunpack.c.h.b16 %v3185
    %v3761 = vunpack.c.l.b16 %v3186
    %v3762 = vunpack.c.h.b16 %v3186
    %v3763 = vunpack.c.l.b16 %v3187
    %v3764 = vunpack.c.l.b16 %v3188
    %v3765 = vunpack.c.h.b16 %v3188
    %v3766 = vunpack.c.l.b16 %v3189
    %v3767 = vunpack.c.h.b16 %v3189
    %v3768 = vunpack.c.l.b16 %v3190
    %v3769 = vunpack.c.h.b16 %v3190
    %v3770 = vunpack.c.l.b16 %v3191
    %v3771 = vunpack.c.l.b16 %v3192
    %v3772 = vunpack.c.h.b16 %v3192
    %v3773 = vunpack.c.l.b16 %v3193
    %v3774 = vunpack.c.h.b16 %v3193
    %v3775 = vunpack.c.l.b16 %v3194
    %v3776 = vunpack.c.h.b16 %v3194
    %v3777 = vunpack.c.l.b16 %v3195
    %v3778 = vunpack.c.l.b16 %v3196
    %v3779 = vunpack.c.h.b16 %v3196
    %v3780 = vunpack.c.l.b16 %v3197
    %v3781 = vunpack.c.h.b16 %v3197
    %v3782 = vunpack.c.l.b16 %v3198
    %v3783 = vunpack.c.h.b16 %v3198
    %v3784 = vunpack.c.l.b16 %v3199
    %v3785 = vunpack.c.l.b16 %v3200
    %v3786 = vunpack.c.h.b16 %v3200
    %v3787 = vunpack.c.l.b16 %v3201
    %v3788 = vunpack.c.h.b16 %v3201
    %v3789 = vunpack.c.l.b16 %v3202
    %v3790 = vunpack.c.h.b16 %v3202
    %v3791 = vunpack.c.l.b16 %v3203
    %v3792 = vunpack.c.l.b16 %v3204
    %v3793 = vunpack.c.h.b16 %v3204
    %v3794 = vunpack.c.l.b16 %v3205
    %v3795 = vunpack.c.h.b16 %v3205
    %v3796 = vunpack.c.l.b16 %v3206
    %v3797 = vunpack.c.h.b16 %v3206
    %v3798 = vunpack.c.l.b16 %v3207
    %v3799 = vunpack.c.l.b16 %v3208
    %v3800 = vunpack.c.h.b16 %v3208
    %v3801 = vunpack.c.l.b16 %v3209
    %v3802 = vunpack.c.h.b16 %v3209
    %v3803 = vunpack.c.l.b16 %v3210
    %v3804 = vunpack.c.h.b16 %v3210
    %v3805 = vunpack.c.l.b16 %v3211
    %v3806 = vunpack.c.l.b16 %v3212
    %v3807 = vunpack.c.h.b16 %v3212
    %v3808 = vunpack.c.l.b16 %v3213
    %v3809 = vunpack.c.h.b16 %v3213
    %v3810 = vunpack.c.l.b16 %v3214
    %v3811 = vunpack.c.h.b16 %v3214
    %v3812 = vunpack.c.l.b16 %v3215
    %v3813 = vunpack.c.l.b16 %v3216
    %v3814 = vunpack.c.h.b16 %v3216
    %v3815 = vunpack.c.l.b16 %v3217
    %v3816 = vunpack.c.h.b16 %v3217
    %v3817 = vunpack.c.l.b16 %v3218
    %v3818 = vunpack.c.h.b16 %v3218
    %v3819 = vunpack.c.l.b16 %v3219
    %v3820 = vunpack.c.l.b16 %v3220
    %v3821 = vunpack.c.h.b16 %v3220
    %v3822 = vunpack.c.l.b16 %v3221
    %v3823 = vunpack.c.h.b16 %v3221
    %v3824 = vunpack.c.l.b16 %v3222
    %v3825 = vunpack.c.h.b16 %v3222
    %v3826 = vunpack.c.l.b16 %v3223
    %v3827 = vunpack.c.l.b16 %v3224
    %v3828 = vunpack.c.h.b16 %v3224
    %v3829 = vunpack.c.l.b16 %v3225
    %v3830 = vunpack.c.h.b16 %v3225
    %v3831 = vunpack.c.l.b16 %v3226
    %v3832 = vunpack.c.h.b16 %v3226
    %v3833 = vunpack.c.l.b16 %v3227
    %v3834 = vunpack.c.l.b16 %v3228
    %v3835 = vunpack.c.h.b16 %v3228
    %v3836 = vunpack.c.l.b16 %v3229
    %v3837 = vunpack.c.h.b16 %v3229
    %v3838 = vunpack.c.l.b16 %v3230
    %v3839 = vunpack.c.h.b16 %v3230
    %v3840 = vunpack.c.l.b16 %v3231
    %v3841 = vunpack.c.l.b16 %v3232
    %v3842 = vunpack.c.h.b16 %v3232
    %v3843 = vunpack.c.l.b16 %v3233
    %v3844 = vunpack.c.h.b16 %v3233
    %v3845 = vunpack.c.l.b16 %v3234
    %v3846 = vunpack.c.h.b16 %v3234
    %v3847 = vunpack.c.l.b16 %v3235
    %v3848 = vunpack.c.l.b16 %v3236
    %v3849 = vunpack.c.h.b16 %v3236
    %v3850 = vunpack.c.l.b16 %v3237
    %v3851 = vunpack.c.h.b16 %v3237
    %v3852 = vunpack.c.l.b16 %v3238
    %v3853 = vunpack.c.h.b16 %v3238
    %v3854 = vunpack.c.l.b16 %v3239
    %v3855 = vunpack.c.l.b16 %v3240
    %v3856 = vunpack.c.h.b16 %v3240
    %v3857 = vunpack.c.l.b16 %v3241
    %v3858 = vunpack.c.h.b16 %v3241
    %v3859 = vunpack.c.l.b16 %v3242
    %v3860 = vunpack.c.h.b16 %v3242
    %v3861 = vunpack.c.l.b16 %v3243
    %v3862 = vunpack.c.l.b16 %v3244
    %v3863 = vunpack.c.h.b16 %v3244
    %v3864 = vunpack.c.l.b16 %v3245
    %v3865 = vunpack.c.h.b16 %v3245
    %v3866 = vunpack.c.l.b16 %v3246
    %v3867 = vunpack.c.h.b16 %v3246
    %v3868 = vunpack.c.l.b16 %v3247
    %v3869 = vunpack.c.l.b16 %v3248
    %v3870 = vunpack.c.h.b16 %v3248
    %v3871 = vunpack.c.l.b16 %v3249
    %v3872 = vunpack.c.h.b16 %v3249
    %v3873 = vunpack.c.l.b16 %v3250
    %v3874 = vunpack.c.h.b16 %v3250
    %v3875 = vunpack.c.l.b16 %v3251
    %v3876 = vunpack.c.l.b16 %v3252
    %v3877 = vunpack.c.h.b16 %v3252
    %v3878 = vunpack.c.l.b16 %v3253
    %v3879 = vunpack.c.h.b16 %v3253
    %v3880 = vunpack.c.l.b16 %v3254
    %v3881 = vunpack.c.h.b16 %v3254
    %v3882 = vunpack.c.l.b16 %v3255
    %v3883 = vunpack.c.l.b16 %v3256
    %v3884 = vunpack.c.h.b16 %v3256
    %v3885 = vunpack.c.l.b16 %v3257
    %v3886 = vunpack.c.h.b16 %v3257
    %v3887 = vunpack.c.l.b16 %v3258
    %v3888 = vunpack.c.h.b16 %v3258
    %v3889 = vunpack.c.l.b16 %v3259
    %v3890 = vunpack.c.l.b16 %v3260
    %v3891 = vunpack.c.h.b16 %v3260
    %v3892 = vunpack.c.l.b16 %v3261
    %v3893 = vunpack.c.h.b16 %v3261
    %v3894 = vunpack.c.l.b16 %v3262
    %v3895 = vunpack.c.h.b16 %v3262
    %v3896 = vunpack.c.l.b16 %v3263
    %v3897 = vunpack.c.l.b16 %v3264
    %v3898 = vunpack.c.h.b16 %v3264
    %v3899 = vunpack.c.l.b16 %v3265
    %v3900 = vunpack.c.h.b16 %v3265
    %v3901 = vunpack.c.l.b16 %v3266
    %v3902 = vunpack.c.h.b16 %v3266
    %v3903 = vunpack.c.l.b16 %v3267
    %v3904 = vunpack.c.l.b16 %v3268
    %v3905 = vunpack.c.h.b16 %v3268
    %v3906 = vunpack.c.l.b16 %v3269
    %v3907 = vunpack.c.h.b16 %v3269
    %v3908 = vunpack.c.l.b16 %v3270
    %v3909 = vunpack.c.h.b16 %v3270
    %v3910 = vunpack.c.l.b16 %v3271
    %v3911 = vunpack.c.l.b16 %v3272
    %v3912 = vunpack.c.h.b16 %v3272
    %v3913 = vunpack.c.l.b16 %v3273
    %v3914 = vunpack.c.h.b16 %v3273
    %v3915 = vunpack.c.l.b16 %v3274
    %v3916 = vunpack.c.h.b16 %v3274
    %v3917 = vunpack.c.l.b16 %v3275
    %v3918 = vunpack.c.l.b16 %v3276
    %v3919 = vunpack.c.h.b16 %v3276
    %v3920 = vunpack.c.l.b16 %v3277
    %v3921 = vunpack.c.h.b16 %v3277
    %v3922 = vunpack.c.l.b16 %v3278
    %v3923 = vunpack.c.h.b16 %v3278
    %v3924 = vunpack.c.l.b16 %v3279
    %v3925 = vunpack.c.l.b16 %v3280
    %v3926 = vunpack.c.h.b16 %v3280
    %v3927 = vunpack.c.l.b16 %v3281
    %v3928 = vunpack.c.h.b16 %v3281
    %v3929 = vunpack.c.l.b16 %v3282
    %v3930 = vunpack.c.h.b16 %v3282
    %v3931 = vunpack.c.l.b16 %v3283
    %v3932 = vunpack.c.l.b16 %v3284
    %v3933 = vunpack.c.h.b16 %v3284
    %v3934 = vunpack.c.l.b16 %v3285
    %v3935 = vunpack.c.h.b16 %v3285
    %v3936 = vunpack.c.l.b16 %v3286
    %v3937 = vunpack.c.h.b16 %v3286
    %v3938 = vunpack.c.l.b16 %v3287
    %v3939 = vunpack.c.l.b16 %v3288
    %v3940 = vunpack.c.h.b16 %v3288
    %v3941 = vunpack.c.l.b16 %v3289
    %v3942 = vunpack.c.h.b16 %v3289
    %v3943 = vunpack.c.l.b16 %v3290
    %v3944 = vunpack.c.h.b16 %v3290
    %v3945 = vunpack.c.l.b16 %v3291
    %v3946 = vunpack.c.l.b16 %v3292
    %v3947 = vunpack.c.h.b16 %v3292
    %v3948 = vunpack.c.l.b16 %v3293
    %v3949 = vunpack.c.h.b16 %v3293
    %v3950 = vunpack.c.l.b16 %v3294
    %v3951 = vunpack.c.h.b16 %v3294
    %v3952 = vunpack.c.l.b16 %v3295
    %v3953 = vunpack.c.l.b16 %v3296
    %v3954 = vunpack.c.h.b16 %v3296
    %v3955 = vunpack.c.l.b16 %v3297
    %v3956 = vunpack.c.h.b16 %v3297
    %v3957 = vunpack.c.l.b16 %v3298
    %v3958 = vunpack.c.h.b16 %v3298
    %v3959 = vunpack.c.l.b16 %v3299
    %v3960 = vunpack.c.l.b16 %v3300
    %v3961 = vunpack.c.h.b16 %v3300
    %v3962 = vunpack.c.l.b16 %v3301
    %v3963 = vunpack.c.h.b16 %v3301
    %v3964 = vunpack.c.l.b16 %v3302
    %v3965 = vunpack.c.h.b16 %v3302
    %v3966 = vunpack.c.l.b16 %v3303
    %v3967 = vunpack.c.l.b16 %v3304
    %v3968 = vunpack.c.h.b16 %v3304
    %v3969 = vunpack.c.l.b16 %v3305
    %v3970 = vunpack.c.h.b16 %v3305
    %v3971 = vunpack.c.l.b16 %v3306
    %v3972 = vunpack.c.h.b16 %v3306
    %v3973 = vunpack.c.l.b16 %v3307
    %v3974 = vunpack.c.l.b16 %v3308
    %v3975 = vunpack.c.h.b16 %v3308
    %v3976 = vunpack.c.l.b16 %v3309
    %v3977 = vunpack.c.h.b16 %v3309
    %v3978 = vunpack.c.l.b16 %v3310
    %v3979 = vunpack.c.h.b16 %v3310
    %v3980 = vunpack.c.l.b16 %v3311
    %v3981 = vunpack.c.l.b16 %v3312
    %v3982 = vunpack.c.h.b16 %v3312
    %v3983 = vunpack.c.l.b16 %v3313
    %v3984 = vunpack.c.h.b16 %v3313
    %v3985 = vunpack.c.l.b16 %v3314
    %v3986 = vunpack.c.h.b16 %v3314
    %v3987 = vunpack.c.l.b16 %v3315
    %v3988 = vunpack.c.l.b16 %v3316
    %v3989 = vunpack.c.h.b16 %v3316
    %v3990 = vunpack.c.l.b16 %v3317
    %v3991 = vunpack.c.h.b16 %v3317
    %v3992 = vunpack.c.l.b16 %v3318
    %v3993 = vunpack.c.h.b16 %v3318
    %v3994 = vunpack.c.l.b16 %v3319
    %v3995 = vunpack.c.l.b16 %v3320
    %v3996 = vunpack.c.h.b16 %v3320
    %v3997 = vunpack.c.l.b16 %v3321
    %v3998 = vunpack.c.h.b16 %v3321
    %v3999 = vunpack.c.l.b16 %v3322
    %v4000 = vunpack.c.h.b16 %v3322
    %v4001 = vunpack.c.l.b16 %v3323
    %v4002 = vunpack.c.l.b16 %v3324
    %v4003 = vunpack.c.h.b16 %v3324
    %v4004 = vunpack.c.l.b16 %v3325
    %v4005 = vunpack.c.h.b16 %v3325
    %v4006 = vunpack.c.l.b16 %v3326
    %v4007 = vunpack.c.h.b16 %v3326
    %v4008 = vunpack.c.l.b16 %v3327
    %v4009 = vunpack.c.l.b16 %v3328
    %v4010 = vunpack.c.h.b16 %v3328
    %v4011 = vunpack.c.l.b16 %v3329
    %v4012 = vunpack.c.h.b16 %v3329
    %v4013 = vunpack.c.l.b16 %v3330
    %v4014 = vunpack.c.h.b16 %v3330
    %v4015 = vunpack.c.l.b16 %v3331
    %v4016 = vunpack.c.l.b16 %v3332
    %v4017 = vunpack.c.h.b16 %v3332
    %v4018 = vunpack.c.l.b16 %v3333
    %v4019 = vunpack.c.h.b16 %v3333
    %v4020 = vunpack.c.l.b16 %v3334
    %v4021 = vunpack.c.h.b16 %v3334
    %v4022 = vunpack.c.l.b16 %v3335
    %v4023 = vunpack.c.l.b16 %v3336
    %v4024 = vunpack.c.h.b16 %v3336
    %v4025 = vunpack.c.l.b16 %v3337
    %v4026 = vunpack.c.h.b16 %v3337
    %v4027 = vunpack.c.l.b16 %v3338
    %v4028 = vunpack.c.h.b16 %v3338
    %v4029 = vunpack.c.l.b16 %v3339
    %v4030 = vunpack.c.l.b16 %v3340
    %v4031 = vunpack.c.h.b16 %v3340
    %v4032 = vunpack.c.l.b16 %v3341
    %v4033 = vunpack.c.h.b16 %v3341
    %v4034 = vunpack.c.l.b16 %v3342
    %v4035 = vunpack.c.h.b16 %v3342
    %v4036 = vunpack.c.l.b16 %v3343
    %v4037 = vunpack.c.l.b16 %v3344
    %v4038 = vunpack.c.h.b16 %v3344
    %v4039 = vunpack.c.l.b16 %v3345
    %v4040 = vunpack.c.h.b16 %v3345
    %v4041 = vunpack.c.l.b16 %v3346
    %v4042 = vunpack.c.h.b16 %v3346
    %v4043 = vunpack.c.l.b16 %v3347
    %v4044 = vunpack.c.l.b16 %v3348
    %v4045 = vunpack.c.h.b16 %v3348
    %v4046 = vunpack.c.l.b16 %v3349
    %v4047 = vunpack.c.h.b16 %v3349
    %v4048 = vunpack.c.l.b16 %v3350
    %v4049 = vunpack.c.h.b16 %v3350
    %v4050 = vunpack.c.l.b16 %v3351
    %v4051 = vunpack.c.l.b16 %v3352
    %v4052 = vunpack.c.h.b16 %v3352
    %v4053 = vunpack.c.l.b16 %v3353
    %v4054 = vunpack.c.h.b16 %v3353
    %v4055 = vunpack.c.l.b16 %v3354
    %v4056 = vunpack.c.h.b16 %v3354
    %v4057 = vunpack.c.l.b16 %v3355
    %v4058 = vunpack.c.l.b16 %v3356
    %v4059 = vunpack.c.h.b16 %v3356
    %v4060 = vunpack.c.l.b16 %v3357
    %v4061 = vunpack.c.h.b16 %v3357
    %v4062 = vunpack.c.l.b16 %v3358
    %v4063 = vunpack.c.h.b16 %v3358
    %v4064 = vunpack.c.l.b16 %v3359
    %v4065 = vunpack.c.l.b16 %v3360
    %v4066 = vunpack.c.h.b16 %v3360
    %v4067 = vunpack.c.l.b16 %v3361
    %v4068 = vunpack.c.h.b16 %v3361
    %v4069 = vunpack.c.l.b16 %v3362
    %v4070 = vunpack.c.h.b16 %v3362
    %v4071 = vunpack.c.l.b16 %v3363
    %v4072 = vunpack.c.l.b16 %v3364
    %v4073 = vunpack.c.h.b16 %v3364
    %v4074 = vunpack.c.l.b16 %v3365
    %v4075 = vunpack.c.h.b16 %v3365
    %v4076 = vunpack.c.l.b16 %v3366
    %v4077 = vunpack.c.h.b16 %v3366
    %v4078 = vunpack.c.l.b16 %v3367
    %v4079 = vunpack.c.l.b16 %v3368
    %v4080 = vunpack.c.h.b16 %v3368
    %v4081 = vunpack.c.l.b16 %v3369
    %v4082 = vunpack.c.h.b16 %v3369
    %v4083 = vunpack.c.l.b16 %v3370
    %v4084 = vunpack.c.h.b16 %v3370
    %v4085 = vunpack.c.l.b16 %v3371
    %v4086 = vunpack.c.l.b16 %v3372
    %v4087 = vunpack.c.h.b16 %v3372
    %v4088 = vunpack.c.l.b16 %v3373
    %v4089 = vunpack.c.h.b16 %v3373
    %v4090 = vunpack.c.l.b16 %v3374
    %v4091 = vunpack.c.h.b16 %v3374
    %v4092 = vunpack.c.l.b16 %v3375
    %v4093 = vunpack.c.l.b16 %v3376
    %v4094 = vunpack.c.h.b16 %v3376
    %v4095 = vunpack.c.l.b16 %v3377
    %v4096 = vunpack.c.h.b16 %v3377
    %v4097 = vunpack.c.l.b16 %v3378
    %v4098 = vunpack.c.h.b16 %v3378
    %v4099 = vunpack.c.l.b16 %v3379
    %v4100 = vunpack.c.l.b16 %v3380
    %v4101 = vunpack.c.h.b16 %v3380
    %v4102 = vunpack.c.l.b16 %v3381
    %v4103 = vunpack.c.h.b16 %v3381
    %v4104 = vunpack.c.l.b16 %v3382
    %v4105 = vunpack.c.h.b16 %v3382
    %v4106 = vunpack.c.l.b16 %v3383
    %v4107 = vunpack.c.l.b16 %v3384
    %v4108 = vunpack.c.h.b16 %v3384
    %v4109 = vunpack.c.l.b16 %v3385
    %v4110 = vunpack.c.h.b16 %v3385
    %v4111 = vunpack.c.l.b16 %v3386
    %v4112 = vunpack.c.h.b16 %v3386
    %v4113 = vunpack.c.l.b16 %v3387
    %v4114 = vunpack.c.l.b16 %v3388
    %v4115 = vunpack.c.h.b16 %v3388
    %v4116 = vunpack.c.l.b16 %v3389
    %v4117 = vunpack.c.h.b16 %v3389
    %v4118 = vunpack.c.l.b16 %v3390
    %v4119 = vunpack.c.h.b16 %v3390
    %v4120 = vunpack.c.l.b16 %v3391
    %v4121 = vunpack.c.l.b16 %v3392
    %v4122 = vunpack.c.h.b16 %v3392
    %v4123 = vunpack.c.l.b16 %v3393
    %v4124 = vunpack.c.h.b16 %v3393
    %v4125 = vunpack.c.l.b16 %v3394
    %v4126 = vunpack.c.h.b16 %v3394
    %v4127 = vunpack.c.l.b16 %v3395
    %v4128 = vunpack.c.l.b16 %v3396
    %v4129 = vunpack.c.h.b16 %v3396
    %v4130 = vunpack.c.l.b16 %v3397
    %v4131 = vunpack.c.h.b16 %v3397
    %v4132 = vunpack.c.l.b16 %v3398
    %v4133 = vunpack.c.h.b16 %v3398
    %v4134 = vunpack.c.l.b16 %v3399
    %v4135 = vunpack.c.l.b16 %v3400
    %v4136 = vunpack.c.h.b16 %v3400
    %v4137 = vunpack.c.l.b16 %v3401
    %v4138 = vunpack.c.h.b16 %v3401
    %v4139 = vunpack.c.l.b16 %v3402
    %v4140 = vunpack.c.h.b16 %v3402
    %v4141 = vunpack.c.l.b16 %v3403
    %v4142 = vunpack.c.l.b16 %v3404
    %v4143 = vunpack.c.h.b16 %v3404
    %v4144 = vunpack.c.l.b16 %v3405
    %v4145 = vunpack.c.h.b16 %v3405
    %v4146 = vunpack.c.l.b16 %v3406
    %v4147 = vunpack.c.h.b16 %v3406
    %v4148 = vunpack.c.l.b16 %v3407
    %v4149 = vpack.c.b16 %v3708, %v3701
    %v4150 = vpack.c.b16 %v3709, %v3702
    %v4151 = vpack.c.b16 %v3710, %v3703
    %v4152 = vpack.c.b16 %v3711, %v3704
    %v4153 = vpack.c.b16 %v3712, %v3705
    %v4154 = vpack.c.b16 %v3713, %v3706
    %v4155 = vpack.c.b16 %v3714, %v3707
    %v4156 = vpack.c.b16 %v3722, %v3715
    %v4157 = vpack.c.b16 %v3723, %v3716
    %v4158 = vpack.c.b16 %v3724, %v3717
    %v4159 = vpack.c.b16 %v3725, %v3718
    %v4160 = vpack.c.b16 %v3726, %v3719
    %v4161 = vpack.c.b16 %v3727, %v3720
    %v4162 = vpack.c.b16 %v3728, %v3721
    %v4163 = vpack.c.b16 %v3736, %v3729
    %v4164 = vpack.c.b16 %v3737, %v3730
    %v4165 = vpack.c.b16 %v3738, %v3731
    %v4166 = vpack.c.b16 %v3739, %v3732
    %v4167 = vpack.c.b16 %v3740, %v3733
    %v4168 = vpack.c.b16 %v3741, %v3734
    %v4169 = vpack.c.b16 %v3742, %v3735
    %v4170 = vpack.c.b16 %v3750, %v3743
    %v4171 = vpack.c.b16 %v3751, %v3744
    %v4172 = vpack.c.b16 %v3752, %v3745
    %v4173 = vpack.c.b16 %v3753, %v3746
    %v4174 = vpack.c.b16 %v3754, %v3747
    %v4175 = vpack.c.b16 %v3755, %v3748
    %v4176 = vpack.c.b16 %v3756, %v3749
    %v4177 = vpack.c.b16 %v3764, %v3757
    %v4178 = vpack.c.b16 %v3765, %v3758
    %v4179 = vpack.c.b16 %v3766, %v3759
    %v4180 = vpack.c.b16 %v3767, %v3760
    %v4181 = vpack.c.b16 %v3768, %v3761
    %v4182 = vpack.c.b16 %v3769, %v3762
    %v4183 = vpack.c.b16 %v3770, %v3763
    %v4184 = vpack.c.b16 %v3778, %v3771
    %v4185 = vpack.c.b16 %v3779, %v3772
    %v4186 = vpack.c.b16 %v3780, %v3773
    %v4187 = vpack.c.b16 %v3781, %v3774
    %v4188 = vpack.c.b16 %v3782, %v3775
    %v4189 = vpack.c.b16 %v3783, %v3776
    %v4190 = vpack.c.b16 %v3784, %v3777
    %v4191 = vpack.c.b16 %v3792, %v3785
    %v4192 = vpack.c.b16 %v3793, %v3786
    %v4193 = vpack.c.b16 %v3794, %v3787
    %v4194 = vpack.c.b16 %v3795, %v3788
    %v4195 = vpack.c.b16 %v3796, %v3789
    %v4196 = vpack.c.b16 %v3797, %v3790
    %v4197 = vpack.c.b16 %v3798, %v3791
    %v4198 = vpack.c.b16 %v3806, %v3799
    %v4199 = vpack.c.b16 %v3807, %v3800
    %v4200 = vpack.c.b16 %v3808, %v3801
    %v4201 = vpack.c.b16 %v3809, %v3802
    %v4202 = vpack.c.b16 %v3810, %v3803
    %v4203 = vpack.c.b16 %v3811, %v3804
    %v4204 = vpack.c.b16 %v3812, %v3805
    %v4205 = vpack.c.b16 %v3820, %v3813
    %v4206 = vpack.c.b16 %v3821, %v3814
    %v4207 = vpack.c.b16 %v3822, %v3815
    %v4208 = vpack.c.b16 %v3823, %v3816
    %v4209 = vpack.c.b16 %v3824, %v3817
    %v4210 = vpack.c.b16 %v3825, %v3818
    %v4211 = vpack.c.b16 %v3826, %v3819
    %v4212 = vpack.c.b16 %v3834, %v3827
    %v4213 = vpack.c.b16 %v3835, %v3828
    %v4214 = vpack.c.b16 %v3836, %v3829
    %v4215 = vpack.c.b16 %v3837, %v3830
    %v4216 = vpack.c.b16 %v3838, %v3831
    %v4217 = vpack.c.b16 %v3839, %v3832
    %v4218 = vpack.c.b16 %v3840, %v3833
    %v4219 = vpack.c.b16 %v3848, %v3841
    %v4220 = vpack.c.b16 %v3849, %v3842
    %v4221 = vpack.c.b16 %v3850, %v3843
    %v4222 = vpack.c.b16 %v3851, %v3844
    %v4223 = vpack.c.b16 %v3852, %v3845
    %v4224 = vpack.c.b16 %v3853, %v3846
    %v4225 = vpack.c.b16 %v3854, %v3847
    %v4226 = vpack.c.b16 %v3862, %v3855
    %v4227 = vpack.c.b16 %v3863, %v3856
    %v4228 = vpack.c.b16 %v3864, %v3857
    %v4229 = vpack.c.b16 %v3865, %v3858
    %v4230 = vpack.c.b16 %v3866, %v3859
    %v4231 = vpack.c.b16 %v3867, %v3860
    %v4232 = vpack.c.b16 %v3868, %v3861
    %v4233 = vpack.c.b16 %v3876, %v3869
    %v4234 = vpack.c.b16 %v3877, %v3870
    %v4235 = vpack.c.b16 %v3878, %v3871
    %v4236 = vpack.c.b16 %v3879, %v3872
    %v4237 = vpack.c.b16 %v3880, %v3873
    %v4238 = vpack.c.b16 %v3881, %v3874
    %v4239 = vpack.c.b16 %v3882, %v3875
    %v4240 = vpack.c.b16 %v3890, %v3883
    %v4241 = vpack.c.b16 %v3891, %v3884
    %v4242 = vpack.c.b16 %v3892, %v3885
    %v4243 = vpack.c.b16 %v3893, %v3886
    %v4244 = vpack.c.b16 %v3894, %v3887
    %v4245 = vpack.c.b16 %v3895, %v3888
    %v4246 = vpack.c.b16 %v3896, %v3889
    %v4247 = vpack.c.b16 %v3904, %v3897
    %v4248 = vpack.c.b16 %v3905, %v3898
    %v4249 = vpack.c.b16 %v3906, %v3899
    %v4250 = vpack.c.b16 %v3907, %v3900
    %v4251 = vpack.c.b16 %v3908, %v3901
    %v4252 = vpack.c.b16 %v3909, %v3902
    %v4253 = vpack.c.b16 %v3910, %v3903
    %v4254 = vpack.c.b16 %v3918, %v3911
    %v4255 = vpack.c.b16 %v3919, %v3912
    %v4256 = vpack.c.b16 %v3920, %v3913
    %v4257 = vpack.c.b16 %v3921, %v3914
    %v4258 = vpack.c.b16 %v3922, %v3915
    %v4259 = vpack.c.b16 %v3923, %v3916
    %v4260 = vpack.c.b16 %v3924, %v3917
    %v4261 = vpack.c.b16 %v3932, %v3925
    %v4262 = vpack.c.b16 %v3933, %v3926
    %v4263 = vpack.c.b16 %v3934, %v3927
    %v4264 = vpack.c.b16 %v3935, %v3928
    %v4265 = vpack.c.b16 %v3936, %v3929
    %v4266 = vpack.c.b16 %v3937, %v3930
    %v4267 = vpack.c.b16 %v3938, %v3931
    %v4268 = vpack.c.b16 %v3946, %v3939
    %v4269 = vpack.c.b16 %v3947, %v3940
    %v4270 = vpack.c.b16 %v3948, %v3941
    %v4271 = vpack.c.b16 %v3949, %v3942
    %v4272 = vpack.c.b16 %v3950, %v3943
    %v4273 = vpack.c.b16 %v3951, %v3944
    %v4274 = vpack.c.b16 %v3952, %v3945
    %v4275 = vpack.c.b16 %v3960, %v3953
    %v4276 = vpack.c.b16 %v3961, %v3954
    %v4277 = vpack.c.b16 %v3962, %v3955
    %v4278 = vpack.c.b16 %v3963, %v3956
    %v4279 = vpack.c.b16 %v3964, %v3957
    %v4280 = vpack.c.b16 %v3965, %v3958
    %v4281 = vpack.c.b16 %v3966, %v3959
    %v4282 = vpack.c.b16 %v3974, %v3967
    %v4283 = vpack.c.b16 %v3975, %v3968
    %v4284 = vpack.c.b16 %v3976, %v3969
    %v4285 = vpack.c.b16 %v3977, %v3970
    %v4286 = vpack.c.b16 %v3978, %v3971
    %v4287 = vpack.c.b16 %v3979, %v3972
    %v4288 = vpack.c.b16 %v3980, %v3973
    %v4289 = vpack.c.b16 %v3988, %v3981
    %v4290 = vpack.c.b16 %v3989, %v3982
    %v4291 = vpack.c.b16 %v3990, %v3983
    %v4292 = vpack.c.b16 %v3991, %v3984
    %v4293 = vpack.c.b16 %v3992, %v3985
    %v4294 = vpack.c.b16 %v3993, %v3986
    %v4295 = vpack.c.b16 %v3994, %v3987
    %v4296 = vpack.c.b16 %v4002, %v3995
    %v4297 = vpack.c.b16 %v4003, %v3996
    %v4298 = vpack.c.b16 %v4004, %v3997
    %v4299 = vpack.c.b16 %v4005, %v3998
    %v4300 = vpack.c.b16 %v4006, %v3999
    %v4301 = vpack.c.b16 %v4007, %v4000
    %v4302 = vpack.c.b16 %v4008, %v4001
    %v4303 = vpack.c.b16 %v4016, %v4009
    %v4304 = vpack.c.b16 %v4017, %v4010
    %v4305 = vpack.c.b16 %v4018, %v4011
    %v4306 = vpack.c.b16 %v4019, %v4012
    %v4307 = vpack.c.b16 %v4020, %v4013
    %v4308 = vpack.c.b16 %v4021, %v4014
    %v4309 = vpack.c.b16 %v4022, %v4015
    %v4310 = vpack.c.b16 %v4030, %v4023
    %v4311 = vpack.c.b16 %v4031, %v4024
    %v4312 = vpack.c.b16 %v4032, %v4025
    %v4313 = vpack.c.b16 %v4033, %v4026
    %v4314 = vpack.c.b16 %v4034, %v4027
    %v4315 = vpack.c.b16 %v4035, %v4028
    %v4316 = vpack.c.b16 %v4036, %v4029
    %v4317 = vpack.c.b16 %v4044, %v4037
    %v4318 = vpack.c.b16 %v4045, %v4038
    %v4319 = vpack.c.b16 %v4046, %v4039
    %v4320 = vpack.c.b16 %v4047, %v4040
    %v4321 = vpack.c.b16 %v4048, %v4041
    %v4322 = vpack.c.b16 %v4049, %v4042
    %v4323 = vpack.c.b16 %v4050, %v4043
    %v4324 = vpack.c.b16 %v4058, %v4051
    %v4325 = vpack.c.b16 %v4059, %v4052
    %v4326 = vpack.c.b16 %v4060, %v4053
    %v4327 = vpack.c.b16 %v4061, %v4054
    %v4328 = vpack.c.b16 %v4062, %v4055
    %v4329 = vpack.c.b16 %v4063, %v4056
    %v4330 = vpack.c.b16 %v4064, %v4057
    %v4331 = vpack.c.b16 %v4072, %v4065
    %v4332 = vpack.c.b16 %v4073, %v4066
    %v4333 = vpack.c.b16 %v4074, %v4067
    %v4334 = vpack.c.b16 %v4075, %v4068
    %v4335 = vpack.c.b16 %v4076, %v4069
    %v4336 = vpack.c.b16 %v4077, %v4070
    %v4337 = vpack.c.b16 %v4078, %v4071
    %v4338 = vpack.c.b16 %v4086, %v4079
    %v4339 = vpack.c.b16 %v4087, %v4080
    %v4340 = vpack.c.b16 %v4088, %v4081
    %v4341 = vpack.c.b16 %v4089, %v4082
    %v4342 = vpack.c.b16 %v4090, %v4083
    %v4343 = vpack.c.b16 %v4091, %v4084
    %v4344 = vpack.c.b16 %v4092, %v4085
    %v4345 = vpack.c.b16 %v4100, %v4093
    %v4346 = vpack.c.b16 %v4101, %v4094
    %v4347 = vpack.c.b16 %v4102, %v4095
    %v4348 = vpack.c.b16 %v4103, %v4096
    %v4349 = vpack.c.b16 %v4104, %v4097
    %v4350 = vpack.c.b16 %v4105, %v4098
    %v4351 = vpack.c.b16 %v4106, %v4099
    %v4352 = vpack.c.b16 %v4114, %v4107
    %v4353 = vpack.c.b16 %v4115, %v4108
    %v4354 = vpack.c.b16 %v4116, %v4109
    %v4355 = vpack.c.b16 %v4117, %v4110
    %v4356 = vpack.c.b16 %v4118, %v4111
    %v4357 = vpack.c.b16 %v4119, %v4112
    %v4358 = vpack.c.b16 %v4120, %v4113
    %v4359 = vpack.c.b16 %v4128, %v4121
    %v4360 = vpack.c.b16 %v4129, %v4122
    %v4361 = vpack.c.b16 %v4130, %v4123
    %v4362 = vpack.c.b16 %v4131, %v4124
    %v4363 = vpack.c.b16 %v4132, %v4125
    %v4364 = vpack.c.b16 %v4133, %v4126
    %v4365 = vpack.c.b16 %v4134, %v4127
    %v4366 = vpack.c.b16 %v4142, %v4135
    %v4367 = vpack.c.b16 %v4143, %v4136
    %v4368 = vpack.c.b16 %v4144, %v4137
    %v4369 = vpack.c.b16 %v4145, %v4138
    %v4370 = vpack.c.b16 %v4146, %v4139
    %v4371 = vpack.c.b16 %v4147, %v4140
    %v4372 = vpack.c.b16 %v4148, %v4141
    %4597 = vmatprep.subr.bf16.mxu0 %v4199
    %4598 = vmatpush1.bf16.msra.mxu0 %v4198
    %4599 = vmatprep.subr.bf16.mxu0 %v4192
    %4600 = vmatpush1.bf16.msra.mxu0 %v4191
    %4601 = vmatprep.subr.bf16.mxu0 %v4185
    %4602 = vmatpush1.bf16.msra.mxu0 %v4184
    %4603 = vmatprep.subr.bf16.mxu0 %v4178
    %4604 = vmatpush1.bf16.msra.mxu0 %v4177
    %4605 = vmatprep.subr.bf16.mxu0 %v4171
    %4606 = vmatpush1.bf16.msra.mxu0 %v4170
    %4607 = vmatprep.subr.bf16.mxu0 %v4164
    %4608 = vmatpush1.bf16.msra.mxu0 %v4163
    %4609 = vmatprep.subr.bf16.mxu0 %v4157
    %4610 = vmatpush1.bf16.msra.mxu0 %v4156
    %4611 = vmatprep.subr.bf16.mxu0 %v4150
    %4612 = vmatpush1.bf16.msra.mxu0 %v4149
    %4613 = vmatprep.subr.bf16.mxu0 %v4255
    %4614 = vmatpush2.bf16.msra.mxu0 %v4254
    %4615 = vmatprep.subr.bf16.mxu0 %v4248
    %4616 = vmatpush2.bf16.msra.mxu0 %v4247
    %4617 = vmatprep.subr.bf16.mxu0 %v4241
    %4618 = vmatpush2.bf16.msra.mxu0 %v4240
    %4619 = vmatprep.subr.bf16.mxu0 %v4234
    %4620 = vmatpush2.bf16.msra.mxu0 %v4233
    %4621 = vmatprep.subr.bf16.mxu0 %v4227
    %4622 = vmatpush2.bf16.msra.mxu0 %v4226
    %4623 = vmatprep.subr.bf16.mxu0 %v4220
    %4624 = vmatpush2.bf16.msra.mxu0 %v4219
    %4625 = vmatprep.subr.bf16.mxu0 %v4213
    %4626 = vmatpush2.bf16.msra.mxu0 %v4212
    %4627 = vmatprep.subr.bf16.mxu0 %v4206
    %4628 = vmatpush2.bf16.msra.mxu0 %v4205
    %4629 = vmatprep.mubr.bf16.mxu0 %v3149
    %4630 = vmatmul.mubr.bf16.gmra.mxu0 %v3148
    %v4631 = vpop.f32.mrf.mxu0
    %v4632 = vadd.f32 %v3413, %v4631
    %v4633 = vpop.f32.mrf.mxu0
    %v4634 = vadd.f32 %v3417, %v4633
    %v4635 = vpop.f32.mrf.mxu0
    %v4636 = vpop.f32.mrf.mxu0
    %4637 = vdwg.mxu0
    %4638 = vmatprep.subr.bf16.mxu0 %v4311
    %4639 = vmatpush1.bf16.msra.mxu0 %v4310
    %4640 = vmatprep.subr.bf16.mxu0 %v4304
    %4641 = vmatpush1.bf16.msra.mxu0 %v4303
    %4642 = vmatprep.subr.bf16.mxu0 %v4297
    %4643 = vmatpush1.bf16.msra.mxu0 %v4296
    %4644 = vmatprep.subr.bf16.mxu0 %v4290
    %4645 = vmatpush1.bf16.msra.mxu0 %v4289
    %4646 = vmatprep.subr.bf16.mxu0 %v4283
    %4647 = vmatpush1.bf16.msra.mxu0 %v4282
    %4648 = vmatprep.subr.bf16.mxu0 %v4276
    %4649 = vmatpush1.bf16.msra.mxu0 %v4275
    %4650 = vmatprep.subr.bf16.mxu0 %v4269
    %4651 = vmatpush1.bf16.msra.mxu0 %v4268
    %4652 = vmatprep.subr.bf16.mxu0 %v4262
    %4653 = vmatpush1.bf16.msra.mxu0 %v4261
    %4654 = vmatprep.subr.bf16.mxu0 %v4367
    %4655 = vmatpush2.bf16.msra.mxu0 %v4366
    %4656 = vmatprep.subr.bf16.mxu0 %v4360
    %4657 = vmatpush2.bf16.msra.mxu0 %v4359
    %4658 = vmatprep.subr.bf16.mxu0 %v4353
    %4659 = vmatpush2.bf16.msra.mxu0 %v4352
    %4660 = vmatprep.subr.bf16.mxu0 %v4346
    %4661 = vmatpush2.bf16.msra.mxu0 %v4345
    %4662 = vmatprep.subr.bf16.mxu0 %v4339
    %4663 = vmatpush2.bf16.msra.mxu0 %v4338
    %4664 = vmatprep.subr.bf16.mxu0 %v4332
    %4665 = vmatpush2.bf16.msra.mxu0 %v4331
    %4666 = vmatprep.subr.bf16.mxu0 %v4325
    %4667 = vmatpush2.bf16.msra.mxu0 %v4324
    %4668 = vmatprep.subr.bf16.mxu0 %v4318
    %4669 = vmatpush2.bf16.msra.mxu0 %v4317
    %4670 = vmatprep.mubr.bf16.mxu0 %v3151
    %4671 = vmatmul.mubr.bf16.gmra.mxu0 %v3150
    %v4672 = vpop.f32.mrf.mxu0
    %v4673 = vadd.f32 %v4632, %v4672
    %v4674 = vpop.f32.mrf.mxu0
    %v4675 = vadd.f32 %v4634, %v4674
    %v4676 = vpop.f32.mrf.mxu0
    %v4677 = vpop.f32.mrf.mxu0
    %4678 = vdwg.mxu0
    %4679 = vmatprep.subr.bf16.mxu0 %v4201
    %4680 = vmatpush1.bf16.msra.mxu0 %v4200
    %4681 = vmatprep.subr.bf16.mxu0 %v4194
    %4682 = vmatpush1.bf16.msra.mxu0 %v4193
    %4683 = vmatprep.subr.bf16.mxu0 %v4187
    %4684 = vmatpush1.bf16.msra.mxu0 %v4186
    %4685 = vmatprep.subr.bf16.mxu0 %v4180
    %4686 = vmatpush1.bf16.msra.mxu0 %v4179
    %4687 = vmatprep.subr.bf16.mxu0 %v4173
    %4688 = vmatpush1.bf16.msra.mxu0 %v4172
    %4689 = vmatprep.subr.bf16.mxu0 %v4166
    %4690 = vmatpush1.bf16.msra.mxu0 %v4165
    %4691 = vmatprep.subr.bf16.mxu0 %v4159
    %4692 = vmatpush1.bf16.msra.mxu0 %v4158
    %4693 = vmatprep.subr.bf16.mxu0 %v4152
    %4694 = vmatpush1.bf16.msra.mxu0 %v4151
    %4695 = vmatprep.subr.bf16.mxu0 %v4257
    %4696 = vmatpush2.bf16.msra.mxu0 %v4256
    %4697 = vmatprep.subr.bf16.mxu0 %v4250
    %4698 = vmatpush2.bf16.msra.mxu0 %v4249
    %4699 = vmatprep.subr.bf16.mxu0 %v4243
    %4700 = vmatpush2.bf16.msra.mxu0 %v4242
    %4701 = vmatprep.subr.bf16.mxu0 %v4236
    %4702 = vmatpush2.bf16.msra.mxu0 %v4235
    %4703 = vmatprep.subr.bf16.mxu0 %v4229
    %4704 = vmatpush2.bf16.msra.mxu0 %v4228
    %4705 = vmatprep.subr.bf16.mxu0 %v4222
    %4706 = vmatpush2.bf16.msra.mxu0 %v4221
    %4707 = vmatprep.subr.bf16.mxu0 %v4215
    %4708 = vmatpush2.bf16.msra.mxu0 %v4214
    %4709 = vmatprep.subr.bf16.mxu0 %v4208
    %4710 = vmatpush2.bf16.msra.mxu0 %v4207
    %4711 = vmatprep.mubr.bf16.mxu0 %v3149
    %4712 = vmatmul.mubr.bf16.gmra.mxu0 %v3148
    %v4713 = vpop.f32.mrf.mxu0
    %v4714 = vadd.f32 %v3421, %v4713
    %v4715 = vpop.f32.mrf.mxu0
    %v4716 = vadd.f32 %v3425, %v4715
    %v4717 = vpop.f32.mrf.mxu0
    %v4718 = vpop.f32.mrf.mxu0
    %4719 = vdwg.mxu0
    %4720 = vmatprep.subr.bf16.mxu0 %v4313
    %4721 = vmatpush1.bf16.msra.mxu0 %v4312
    %4722 = vmatprep.subr.bf16.mxu0 %v4306
    %4723 = vmatpush1.bf16.msra.mxu0 %v4305
    %4724 = vmatprep.subr.bf16.mxu0 %v4299
    %4725 = vmatpush1.bf16.msra.mxu0 %v4298
    %4726 = vmatprep.subr.bf16.mxu0 %v4292
    %4727 = vmatpush1.bf16.msra.mxu0 %v4291
    %4728 = vmatprep.subr.bf16.mxu0 %v4285
    %4729 = vmatpush1.bf16.msra.mxu0 %v4284
    %4730 = vmatprep.subr.bf16.mxu0 %v4278
    %4731 = vmatpush1.bf16.msra.mxu0 %v4277
    %4732 = vmatprep.subr.bf16.mxu0 %v4271
    %4733 = vmatpush1.bf16.msra.mxu0 %v4270
    %4734 = vmatprep.subr.bf16.mxu0 %v4264
    %4735 = vmatpush1.bf16.msra.mxu0 %v4263
    %4736 = vmatprep.subr.bf16.mxu0 %v4369
    %4737 = vmatpush2.bf16.msra.mxu0 %v4368
    %4738 = vmatprep.subr.bf16.mxu0 %v4362
    %4739 = vmatpush2.bf16.msra.mxu0 %v4361
    %4740 = vmatprep.subr.bf16.mxu0 %v4355
    %4741 = vmatpush2.bf16.msra.mxu0 %v4354
    %4742 = vmatprep.subr.bf16.mxu0 %v4348
    %4743 = vmatpush2.bf16.msra.mxu0 %v4347
    %4744 = vmatprep.subr.bf16.mxu0 %v4341
    %4745 = vmatpush2.bf16.msra.mxu0 %v4340
    %4746 = vmatprep.subr.bf16.mxu0 %v4334
    %4747 = vmatpush2.bf16.msra.mxu0 %v4333
    %4748 = vmatprep.subr.bf16.mxu0 %v4327
    %4749 = vmatpush2.bf16.msra.mxu0 %v4326
    %4750 = vmatprep.subr.bf16.mxu0 %v4320
    %4751 = vmatpush2.bf16.msra.mxu0 %v4319
    %4752 = vmatprep.mubr.bf16.mxu0 %v3151
    %4753 = vmatmul.mubr.bf16.gmra.mxu0 %v3150
    %v4754 = vpop.f32.mrf.mxu0
    %v4755 = vadd.f32 %v4714, %v4754
    %v4756 = vpop.f32.mrf.mxu0
    %v4757 = vadd.f32 %v4716, %v4756
    %v4758 = vpop.f32.mrf.mxu0
    %v4759 = vpop.f32.mrf.mxu0
    %4760 = vdwg.mxu0
    %4761 = vmatprep.subr.bf16.mxu0 %v4203
    %4762 = vmatpush1.bf16.msra.mxu0 %v4202
    %4763 = vmatprep.subr.bf16.mxu0 %v4196
    %4764 = vmatpush1.bf16.msra.mxu0 %v4195
    %4765 = vmatprep.subr.bf16.mxu0 %v4189
    %4766 = vmatpush1.bf16.msra.mxu0 %v4188
    %4767 = vmatprep.subr.bf16.mxu0 %v4182
    %4768 = vmatpush1.bf16.msra.mxu0 %v4181
    %4769 = vmatprep.subr.bf16.mxu0 %v4175
    %4770 = vmatpush1.bf16.msra.mxu0 %v4174
    %4771 = vmatprep.subr.bf16.mxu0 %v4168
    %4772 = vmatpush1.bf16.msra.mxu0 %v4167
    %4773 = vmatprep.subr.bf16.mxu0 %v4161
    %4774 = vmatpush1.bf16.msra.mxu0 %v4160
    %4775 = vmatprep.subr.bf16.mxu0 %v4154
    %4776 = vmatpush1.bf16.msra.mxu0 %v4153
    %4777 = vmatprep.subr.bf16.mxu0 %v4259
    %4778 = vmatpush2.bf16.msra.mxu0 %v4258
    %4779 = vmatprep.subr.bf16.mxu0 %v4252
    %4780 = vmatpush2.bf16.msra.mxu0 %v4251
    %4781 = vmatprep.subr.bf16.mxu0 %v4245
    %4782 = vmatpush2.bf16.msra.mxu0 %v4244
    %4783 = vmatprep.subr.bf16.mxu0 %v4238
    %4784 = vmatpush2.bf16.msra.mxu0 %v4237
    %4785 = vmatprep.subr.bf16.mxu0 %v4231
    %4786 = vmatpush2.bf16.msra.mxu0 %v4230
    %4787 = vmatprep.subr.bf16.mxu0 %v4224
    %4788 = vmatpush2.bf16.msra.mxu0 %v4223
    %4789 = vmatprep.subr.bf16.mxu0 %v4217
    %4790 = vmatpush2.bf16.msra.mxu0 %v4216
    %4791 = vmatprep.subr.bf16.mxu0 %v4210
    %4792 = vmatpush2.bf16.msra.mxu0 %v4209
    %4793 = vmatprep.mubr.bf16.mxu0 %v3149
    %4794 = vmatmul.mubr.bf16.gmra.mxu0 %v3148
    %v4795 = vpop.f32.mrf.mxu0
    %v4796 = vadd.f32 %v3429, %v4795
    %v4797 = vpop.f32.mrf.mxu0
    %v4798 = vadd.f32 %v3433, %v4797
    %v4799 = vpop.f32.mrf.mxu0
    %v4800 = vpop.f32.mrf.mxu0
    %4801 = vdwg.mxu0
    %4802 = vmatprep.subr.bf16.mxu0 %v4315
    %4803 = vmatpush1.bf16.msra.mxu0 %v4314
    %4804 = vmatprep.subr.bf16.mxu0 %v4308
    %4805 = vmatpush1.bf16.msra.mxu0 %v4307
    %4806 = vmatprep.subr.bf16.mxu0 %v4301
    %4807 = vmatpush1.bf16.msra.mxu0 %v4300
    %4808 = vmatprep.subr.bf16.mxu0 %v4294
    %4809 = vmatpush1.bf16.msra.mxu0 %v4293
    %4810 = vmatprep.subr.bf16.mxu0 %v4287
    %4811 = vmatpush1.bf16.msra.mxu0 %v4286
    %4812 = vmatprep.subr.bf16.mxu0 %v4280
    %4813 = vmatpush1.bf16.msra.mxu0 %v4279
    %4814 = vmatprep.subr.bf16.mxu0 %v4273
    %4815 = vmatpush1.bf16.msra.mxu0 %v4272
    %4816 = vmatprep.subr.bf16.mxu0 %v4266
    %4817 = vmatpush1.bf16.msra.mxu0 %v4265
    %4818 = vmatprep.subr.bf16.mxu0 %v4371
    %4819 = vmatpush2.bf16.msra.mxu0 %v4370
    %4820 = vmatprep.subr.bf16.mxu0 %v4364
    %4821 = vmatpush2.bf16.msra.mxu0 %v4363
    %4822 = vmatprep.subr.bf16.mxu0 %v4357
    %4823 = vmatpush2.bf16.msra.mxu0 %v4356
    %4824 = vmatprep.subr.bf16.mxu0 %v4350
    %4825 = vmatpush2.bf16.msra.mxu0 %v4349
    %4826 = vmatprep.subr.bf16.mxu0 %v4343
    %4827 = vmatpush2.bf16.msra.mxu0 %v4342
    %4828 = vmatprep.subr.bf16.mxu0 %v4336
    %4829 = vmatpush2.bf16.msra.mxu0 %v4335
    %4830 = vmatprep.subr.bf16.mxu0 %v4329
    %4831 = vmatpush2.bf16.msra.mxu0 %v4328
    %4832 = vmatprep.subr.bf16.mxu0 %v4322
    %4833 = vmatpush2.bf16.msra.mxu0 %v4321
    %4834 = vmatprep.mubr.bf16.mxu0 %v3151
    %4835 = vmatmul.mubr.bf16.gmra.mxu0 %v3150
    %v4836 = vpop.f32.mrf.mxu0
    %v4837 = vadd.f32 %v4796, %v4836
    %v4838 = vpop.f32.mrf.mxu0
    %v4839 = vadd.f32 %v4798, %v4838
    %v4840 = vpop.f32.mrf.mxu0
    %v4841 = vpop.f32.mrf.mxu0
    %4842 = vdwg.mxu0
    %4843 = vmatprep.subr.bf16.mxu0 0
    %4844 = vmatpush1.bf16.msra.mxu0 %v4204
    %4845 = vmatprep.subr.bf16.mxu0 0
    %4846 = vmatpush1.bf16.msra.mxu0 %v4197
    %4847 = vmatprep.subr.bf16.mxu0 0
    %4848 = vmatpush1.bf16.msra.mxu0 %v4190
    %4849 = vmatprep.subr.bf16.mxu0 0
    %4850 = vmatpush1.bf16.msra.mxu0 %v4183
    %4851 = vmatprep.subr.bf16.mxu0 0
    %4852 = vmatpush1.bf16.msra.mxu0 %v4176
    %4853 = vmatprep.subr.bf16.mxu0 0
    %4854 = vmatpush1.bf16.msra.mxu0 %v4169
    %4855 = vmatprep.subr.bf16.mxu0 0
    %4856 = vmatpush1.bf16.msra.mxu0 %v4162
    %4857 = vmatprep.subr.bf16.mxu0 0
    %4858 = vmatpush1.bf16.msra.mxu0 %v4155
    %4859 = vmatprep.subr.bf16.mxu0 0
    %4860 = vmatpush2.bf16.msra.mxu0 %v4260
    %4861 = vmatprep.subr.bf16.mxu0 0
    %4862 = vmatpush2.bf16.msra.mxu0 %v4253
    %4863 = vmatprep.subr.bf16.mxu0 0
    %4864 = vmatpush2.bf16.msra.mxu0 %v4246
    %4865 = vmatprep.subr.bf16.mxu0 0
    %4866 = vmatpush2.bf16.msra.mxu0 %v4239
    %4867 = vmatprep.subr.bf16.mxu0 0
    %4868 = vmatpush2.bf16.msra.mxu0 %v4232
    %4869 = vmatprep.subr.bf16.mxu0 0
    %4870 = vmatpush2.bf16.msra.mxu0 %v4225
    %4871 = vmatprep.subr.bf16.mxu0 0
    %4872 = vmatpush2.bf16.msra.mxu0 %v4218
    %4873 = vmatprep.subr.bf16.mxu0 0
    %4874 = vmatpush2.bf16.msra.mxu0 %v4211
    %4875 = vmatprep.mubr.bf16.mxu0 %v3149
    %4876 = vmatmul.mubr.bf16.gmra.mxu0 %v3148
    %v4877 = vpop.f32.mrf.mxu0
    %v4878 = vadd.f32 %v3437, %v4877
    %v4879 = vpop.f32.mrf.mxu0
    %v4880 = vpop.f32.mrf.mxu0
    %v4881 = vpop.f32.mrf.mxu0
    %4882 = vdwg.mxu0
    %4883 = vmatprep.subr.bf16.mxu0 0
    %4884 = vmatpush1.bf16.msra.mxu0 %v4316
    %4885 = vmatprep.subr.bf16.mxu0 0
    %4886 = vmatpush1.bf16.msra.mxu0 %v4309
    %4887 = vmatprep.subr.bf16.mxu0 0
    %4888 = vmatpush1.bf16.msra.mxu0 %v4302
    %4889 = vmatprep.subr.bf16.mxu0 0
    %4890 = vmatpush1.bf16.msra.mxu0 %v4295
    %4891 = vmatprep.subr.bf16.mxu0 0
    %4892 = vmatpush1.bf16.msra.mxu0 %v4288
    %4893 = vmatprep.subr.bf16.mxu0 0
    %4894 = vmatpush1.bf16.msra.mxu0 %v4281
    %4895 = vmatprep.subr.bf16.mxu0 0
    %4896 = vmatpush1.bf16.msra.mxu0 %v4274
    %4897 = vmatprep.subr.bf16.mxu0 0
    %4898 = vmatpush1.bf16.msra.mxu0 %v4267
    %4899 = vmatprep.subr.bf16.mxu0 0
    %4900 = vmatpush2.bf16.msra.mxu0 %v4372
    %4901 = vmatprep.subr.bf16.mxu0 0
    %4902 = vmatpush2.bf16.msra.mxu0 %v4365
    %4903 = vmatprep.subr.bf16.mxu0 0
    %4904 = vmatpush2.bf16.msra.mxu0 %v4358
    %4905 = vmatprep.subr.bf16.mxu0 0
    %4906 = vmatpush2.bf16.msra.mxu0 %v4351
    %4907 = vmatprep.subr.bf16.mxu0 0
    %4908 = vmatpush2.bf16.msra.mxu0 %v4344
    %4909 = vmatprep.subr.bf16.mxu0 0
    %4910 = vmatpush2.bf16.msra.mxu0 %v4337
    %4911 = vmatprep.subr.bf16.mxu0 0
    %4912 = vmatpush2.bf16.msra.mxu0 %v4330
    %4913 = vmatprep.subr.bf16.mxu0 0
    %4914 = vmatpush2.bf16.msra.mxu0 %v4323
    %4915 = vmatprep.mubr.bf16.mxu0 %v3151
    %4916 = vmatmul.mubr.bf16.gmra.mxu0 %v3150
    %v4917 = vpop.f32.mrf.mxu0
    %v4918 = vadd.f32 %v4878, %v4917
    %v4919 = vpop.f32.mrf.mxu0
    %v4920 = vpop.f32.mrf.mxu0
    %v4921 = vpop.f32.mrf.mxu0
    %4922 = vdwg.mxu0
    %4923 = vst [vmem:[%s13] sm:$0xff] %v4673
    %4924 = vst [vmem:[%s13 + $0x8] sm:$0xff] %v4675
    %4925 = vst [vmem:[%s13 + $0x10] sm:$0xff] %v4755
    %4926 = vst [vmem:[%s13 + $0x18] sm:$0xff] %v4757
    %4927 = vst [vmem:[%s13 + $0x20] sm:$0xff] %v4837
    %4928 = vst [vmem:[%s13 + $0x28] sm:$0xff] %v4839
    %4929 = vst [vmem:[%s13 + $0x30] sm:$0xff] %v4918
    // Predicated region
    $region74: #{autoencoder_forward.1} parent=1 // pred_check
      _
    $region75: #{autoencoder_forward.1} parent=1 // pred_check_branch
      %4931 = sbr.rel (0) target = $region77
    $region76: #{autoencoder_forward.1} parent=1 // pred_region
      _
    $region77: #{autoencoder_forward.1} parent=1 // pred_fallthru
      _
    // Predicated region
    $region78: #{autoencoder_forward.1} parent=1 // pred_check
      _
    $region79: #{autoencoder_forward.1} parent=1 // pred_check_branch
      %4933 = sbr.rel (0) target = $region81
    $region80: #{autoencoder_forward.1} parent=1 // pred_region
      _
    $region81: #{autoencoder_forward.1} parent=1 // pred_fallthru
      _
    %4934 = vsyncpa [#allocation3], 1
    %4935 = vsyncpa [#allocation5], 1
    %4936 = vsyncpa [#allocation8], 1

</llo_original>
